<compile_context>
chip_gen: v6e
topology: v6e:2x2x1
jax: 0.10.0
libtpu: 0.0.40
codegen_flags: <defaults>
</compile_context>

<pallas_src>
import functools
import math

import jax
import jax.numpy as jnp
from jax import lax
from jax.experimental import pallas as pl
from jax.experimental.pallas import tpu as pltpu

FC_LANES = 128  # lane-dense padded output width for fc1 (real out_features = 2)


def _gru2_fc_kernel(x_ref, wi0_ref, wh0_ref, b0_ref,
                    wi1_ref, wh1_ref, b1_ref,
                    wfc_ref, bfc_ref, out_ref,
                    h_buf, gir_buf, giz_buf, gin_buf, *, T, B, H):
    """Whole forward pass in one kernel (everything lives in VMEM).

    Row layout is time-major flattened: row = t * B + b.

    x_ref:    (T*B, 3*input_dim)
    wi{0,1}:  (3, in, H)   stacked per gate [r, z, n]  (in = 3*input_dim or H)
    wh{0,1}:  (3, H, H)    stacked per gate [r, z, n]
    b{0,1}:   (4, H)       rows = [bi_r+bh_r, bi_z+bh_z, bi_n, bh_n]
    wfc:      (H, FC_LANES) fc1 weight zero-padded from 2 -> FC_LANES columns
    bfc:      (1, FC_LANES)
    out_ref:  (T*B, FC_LANES) lane-dense output (wrapper slices [:, :2])
    h_buf, gi*_buf: (T*B, H) VMEM scratch.
    """

    def input_proj(src, wi_ref, b_ref):
        # Batched (T*B, in) @ (in, H) projections, one per gate, done once
        # outside the serial recurrence.
        b = b_ref[...]
        gir_buf[...] = jnp.dot(src, wi_ref[0],
                               preferred_element_type=jnp.float32) + b[0:1, :]
        giz_buf[...] = jnp.dot(src, wi_ref[1],
                               preferred_element_type=jnp.float32) + b[1:2, :]
        gin_buf[...] = jnp.dot(src, wi_ref[2],
                               preferred_element_type=jnp.float32) + b[2:3, :]

    def recurrence(wh_ref, b_ref):
        # Hoist per-gate recurrent weights / n-gate hidden bias out of the loop.
        whr = wh_ref[0]
        whz = wh_ref[1]
        whn = wh_ref[2]
        bhn = b_ref[...][3:4, :]

        def body(t, h):
            row = pl.multiple_of(t * B, B)
            ghr = jnp.dot(h, whr, preferred_element_type=jnp.float32)
            ghz = jnp.dot(h, whz, preferred_element_type=jnp.float32)
            ghn = jnp.dot(h, whn, preferred_element_type=jnp.float32) + bhn
            r = jax.nn.sigmoid(gir_buf[pl.ds(row, B), :] + ghr)
            z = jax.nn.sigmoid(giz_buf[pl.ds(row, B), :] + ghz)
            n = jnp.tanh(gin_buf[pl.ds(row, B), :] + r * ghn)
            h_new = (1.0 - z) * n + z * h
            h_buf[pl.ds(row, B), :] = h_new
            return h_new

        lax.fori_loop(0, T, body, jnp.zeros((B, H), jnp.float32), unroll=True)

    # ---- GRU layer 0 ----
    input_proj(x_ref[...], wi0_ref, b0_ref)
    recurrence(wh0_ref, b0_ref)

    # TODO(synk): inter-layer dropout (p=0.1) omitted — eval/inference semantics.

    # ---- GRU layer 1 (input projection reads layer-0 hiddens from h_buf, then
    #      the recurrence overwrites h_buf with layer-1 hiddens) ----
    input_proj(h_buf[...], wi1_ref, b1_ref)
    recurrence(wh1_ref, b1_ref)

    # ---- fused fc1: one batched matmul + one lane-dense store ----
    out_ref[...] = jnp.dot(h_buf[...], wfc_ref[...],
                           preferred_element_type=jnp.float32) + bfc_ref[...]


def init_params(key, input_dim, hidden_dim):
    """Deterministic PyTorch-style uniform(-1/sqrt(H), 1/sqrt(H)) init.

    Fused [r|z|n] layout (matching torch.nn.GRU, weights pre-transposed to
    (in_features, out_features))."""
    D = input_dim * 3
    H = hidden_dim
    bound = 1.0 / math.sqrt(H)
    ks = jax.random.split(key, 11)

    def u(k, shape):
        return jax.random.uniform(k, shape, jnp.float32, -bound, bound)

    return {
        "wi0": u(ks[0], (D, 3 * H)), "wh0": u(ks[1], (H, 3 * H)),
        "bi0": u(ks[2], (1, 3 * H)), "bh0": u(ks[3], (1, 3 * H)),
        "wi1": u(ks[4], (H, 3 * H)), "wh1": u(ks[5], (H, 3 * H)),
        "bi1": u(ks[6], (1, 3 * H)), "bh1": u(ks[7], (1, 3 * H)),
        "wfc": u(ks[8], (H, 2)),     "bfc": u(ks[9], (1, 2)),
        "hidden_dim": H,
    }


def _pack_params(p):
    """Repack fused PyTorch-style params into the kernel layout:
    per-gate stacked weights, pre-summed r/z biases, lane-padded fc weights."""
    H = p["hidden_dim"]

    def split3(w):  # (in, 3H) -> (3, in, H) stacked [r, z, n]
        return jnp.stack([w[:, 0:H], w[:, H:2 * H], w[:, 2 * H:3 * H]], axis=0)

    def pack_bias(bi, bh):  # -> (4, H): [bi_r+bh_r, bi_z+bh_z, bi_n, bh_n]
        bi = bi[0]
        bh = bh[0]
        return jnp.stack([bi[0:H] + bh[0:H],
                          bi[H:2 * H] + bh[H:2 * H],
                          bi[2 * H:3 * H],
                          bh[2 * H:3 * H]], axis=0)

    wi0 = split3(p["wi0"]); wh0 = split3(p["wh0"])
    wi1 = split3(p["wi1"]); wh1 = split3(p["wh1"])
    b0 = pack_bias(p["bi0"], p["bh0"])
    b1 = pack_bias(p["bi1"], p["bh1"])
    wfc = jnp.zeros((H, FC_LANES), jnp.float32).at[:, :2].set(p["wfc"])
    bfc = jnp.zeros((1, FC_LANES), jnp.float32).at[:, :2].set(p["bfc"])
    return wi0, wh0, b0, wi1, wh1, b1, wfc, bfc


def gru_simple_forward(X, X_last_obsv, Mask, Delta, params):
    """Pallas implementation of GRUSIMPLEmodel.forward (return_hidden=False)."""
    del X  # X is unused by the reference forward pass.
    x = jnp.concatenate([X_last_obsv, Mask, Delta], axis=-1).astype(jnp.float32)
    B, T, D = x.shape                      # D = 3 * input_dim
    H = params["hidden_dim"]

    # Time-major flattened rows: row = t * B + b.
    x_flat = jnp.transpose(x, (1, 0, 2)).reshape(T * B, D)

    wi0, wh0, b0, wi1, wh1, b1, wfc, bfc = _pack_params(params)

    kernel = functools.partial(_gru2_fc_kernel, T=T, B=B, H=H)
    vmem = pl.BlockSpec(memory_space=pltpu.MemorySpace.VMEM)

    out_flat = pl.pallas_call(
        kernel,
        out_shape=jax.ShapeDtypeStruct((T * B, FC_LANES), jnp.float32),
        in_specs=[vmem] * 9,
        out_specs=vmem,
        scratch_shapes=[pltpu.VMEM((T * B, H), jnp.float32)] * 4,
    )(x_flat, wi0, wh0, b0, wi1, wh1, b1, wfc, bfc)

    out = out_flat.reshape(T, B, FC_LANES)[:, :, :2]   # un-pad the lane dim
    return jnp.transpose(out, (1, 0, 2))               # (B, T, 2)


def _ref_forward(X_last_obsv, Mask, Delta, p):
    """Pure-JAX reference (fused PyTorch layout) for correctness checking."""
    x = jnp.concatenate([X_last_obsv, Mask, Delta], axis=-1)
    B = x.shape[0]
    H = p["hidden_dim"]

    def run_layer(xs, wi, wh, bi, bh):
        def step(h, x_t):
            gi = x_t @ wi + bi
            gh = h @ wh + bh
            r = jax.nn.sigmoid(gi[:, :H] + gh[:, :H])
            z = jax.nn.sigmoid(gi[:, H:2 * H] + gh[:, H:2 * H])
            n = jnp.tanh(gi[:, 2 * H:] + r * gh[:, 2 * H:])
            h_new = (1.0 - z) * n + z * h
            return h_new, h_new
        h0 = jnp.zeros((B, H), jnp.float32)
        _, ys = lax.scan(step, h0, jnp.transpose(xs, (1, 0, 2)))
        return jnp.transpose(ys, (1, 0, 2))

    h1 = run_layer(x, p["wi0"], p["wh0"], p["bi0"][0], p["bh0"][0])
    h2 = run_layer(h1, p["wi1"], p["wh1"], p["bi1"][0], p["bh1"][0])
    return h2 @ p["wfc"] + p["bfc"][0]


if __name__ == "__main__":
    B, T, input_dim, hidden_dim = 2, 8, 4, 32

    key = jax.random.PRNGKey(0)
    k_param, k_x, k_xl, k_m, k_d = jax.random.split(key, 5)
    params = init_params(k_param, input_dim, hidden_dim)

    X = jax.random.normal(k_x, (B, T, input_dim), jnp.float32)
    X_last_obsv = jax.random.normal(k_xl, (B, T, input_dim), jnp.float32)
    Mask = (jax.random.uniform(k_m, (B, T, input_dim)) > 0.5).astype(jnp.float32)
    Delta = jax.random.uniform(k_d, (B, T, input_dim), jnp.float32)

    out = gru_simple_forward(X, X_last_obsv, Mask, Delta, params)
    out = jax.block_until_ready(out)
    assert out.shape == (B, T, 2), out.shape

    ref = jax.block_until_ready(_ref_forward(X_last_obsv, Mask, Delta, params))
    assert jnp.allclose(out, ref, atol=1e-4, rtol=1e-4), float(jnp.max(jnp.abs(out - ref)))

    print("KERNEL_OK")
</pallas_src>

<mosaic_0001>
module attributes {stable_mosaic.version = 11 : i64} {
  func.func @_gru2_fc_kernel(%arg0: memref<16x12xf32, #tpu.memory_space<vmem>>, %arg1: memref<3x12x32xf32, #tpu.memory_space<vmem>>, %arg2: memref<3x32x32xf32, #tpu.memory_space<vmem>>, %arg3: memref<4x32xf32, #tpu.memory_space<vmem>>, %arg4: memref<3x32x32xf32, #tpu.memory_space<vmem>>, %arg5: memref<3x32x32xf32, #tpu.memory_space<vmem>>, %arg6: memref<4x32xf32, #tpu.memory_space<vmem>>, %arg7: memref<32x128xf32, #tpu.memory_space<vmem>>, %arg8: memref<1x128xf32, #tpu.memory_space<vmem>>, %arg9: memref<16x128xf32, #tpu.memory_space<vmem>>, %arg10: memref<16x32xf32, #tpu.memory_space<vmem>>, %arg11: memref<16x32xf32, #tpu.memory_space<vmem>>, %arg12: memref<16x32xf32, #tpu.memory_space<vmem>>, %arg13: memref<16x32xf32, #tpu.memory_space<vmem>>) attributes {dimension_semantics = [], scalar_prefetch = 0 : i64, scratch_operands = 4 : i64, tpu.core_type = #tpu.core_type<tc>} {
    %c0 = arith.constant 0 : index
    %c0_0 = arith.constant 0 : index
    %0 = vector.load %arg0[%c0, %c0_0] : memref<16x12xf32, #tpu.memory_space<vmem>>, vector<16x12xf32>
    %c0_1 = arith.constant 0 : index
    %c0_2 = arith.constant 0 : index
    %1 = vector.load %arg3[%c0_1, %c0_2] : memref<4x32xf32, #tpu.memory_space<vmem>>, vector<4x32xf32>
    %c0_3 = arith.constant 0 : index
    %c0_4 = arith.constant 0 : index
    %c0_5 = arith.constant 0 : index
    %2 = vector.load %arg1[%c0_3, %c0_4, %c0_5] : memref<3x12x32xf32, #tpu.memory_space<vmem>>, vector<1x12x32xf32>
    %3 = vector.shape_cast %2 : vector<1x12x32xf32> to vector<12x32xf32>
    %cst = arith.constant dense<0.000000e+00> : vector<16x32xf32>
    %4 = tpu.matmul %0, %3, %cst {dimension_numbers = #tpu.dot_dimension_numbers<[1], [0], [0], [1], [0, 0, 1, 1], [], []>} : vector<16x12xf32>, vector<12x32xf32>, vector<16x32xf32> -> vector<16x32xf32>
    %5 = vector.extract_strided_slice %1 {offsets = [0, 0], sizes = [1, 32], strides = [1, 1]} : vector<4x32xf32> to vector<1x32xf32>
    %6 = vector.broadcast %5 : vector<1x32xf32> to vector<16x32xf32>
    %7 = arith.addf %4, %6 : vector<16x32xf32>
    %c0_6 = arith.constant 0 : index
    %c0_7 = arith.constant 0 : index
    %8 = vector.load %arg11[%c0_6, %c0_7] : memref<16x32xf32, #tpu.memory_space<vmem>>, vector<16x32xf32>
    tpu.vector_store %arg11[%c0_6, %c0_7], %7 {strides = array<i32>} : memref<16x32xf32, #tpu.memory_space<vmem>>, vector<16x32xf32>,
    %c1 = arith.constant 1 : index
    %c0_8 = arith.constant 0 : index
    %c0_9 = arith.constant 0 : index
    %9 = vector.load %arg1[%c1, %c0_8, %c0_9] : memref<3x12x32xf32, #tpu.memory_space<vmem>>, vector<1x12x32xf32>
    %10 = vector.shape_cast %9 : vector<1x12x32xf32> to vector<12x32xf32>
    %cst_10 = arith.constant dense<0.000000e+00> : vector<16x32xf32>
    %11 = tpu.matmul %0, %10, %cst_10 {dimension_numbers = #tpu.dot_dimension_numbers<[1], [0], [0], [1], [0, 0, 1, 1], [], []>} : vector<16x12xf32>, vector<12x32xf32>, vector<16x32xf32> -> vector<16x32xf32>
    %12 = vector.extract_strided_slice %1 {offsets = [1, 0], sizes = [1, 32], strides = [1, 1]} : vector<4x32xf32> to vector<1x32xf32>
    %13 = vector.broadcast %12 : vector<1x32xf32> to vector<16x32xf32>
    %14 = arith.addf %11, %13 : vector<16x32xf32>
    %c0_11 = arith.constant 0 : index
    %c0_12 = arith.constant 0 : index
    %15 = vector.load %arg12[%c0_11, %c0_12] : memref<16x32xf32, #tpu.memory_space<vmem>>, vector<16x32xf32>
    tpu.vector_store %arg12[%c0_11, %c0_12], %14 {strides = array<i32>} : memref<16x32xf32, #tpu.memory_space<vmem>>, vector<16x32xf32>,
    %c2 = arith.constant 2 : index
    %c0_13 = arith.constant 0 : index
    %c0_14 = arith.constant 0 : index
    %16 = vector.load %arg1[%c2, %c0_13, %c0_14] : memref<3x12x32xf32, #tpu.memory_space<vmem>>, vector<1x12x32xf32>
    %17 = vector.shape_cast %16 : vector<1x12x32xf32> to vector<12x32xf32>
    %cst_15 = arith.constant dense<0.000000e+00> : vector<16x32xf32>
    %18 = tpu.matmul %0, %17, %cst_15 {dimension_numbers = #tpu.dot_dimension_numbers<[1], [0], [0], [1], [0, 0, 1, 1], [], []>} : vector<16x12xf32>, vector<12x32xf32>, vector<16x32xf32> -> vector<16x32xf32>
    %19 = vector.extract_strided_slice %1 {offsets = [2, 0], sizes = [1, 32], strides = [1, 1]} : vector<4x32xf32> to vector<1x32xf32>
    %20 = vector.broadcast %19 : vector<1x32xf32> to vector<16x32xf32>
    %21 = arith.addf %18, %20 : vector<16x32xf32>
    %c0_16 = arith.constant 0 : index
    %c0_17 = arith.constant 0 : index
    %22 = vector.load %arg13[%c0_16, %c0_17] : memref<16x32xf32, #tpu.memory_space<vmem>>, vector<16x32xf32>
    tpu.vector_store %arg13[%c0_16, %c0_17], %21 {strides = array<i32>} : memref<16x32xf32, #tpu.memory_space<vmem>>, vector<16x32xf32>,
    %c0_18 = arith.constant 0 : index
    %c0_19 = arith.constant 0 : index
    %c0_20 = arith.constant 0 : index
    %23 = vector.load %arg2[%c0_18, %c0_19, %c0_20] : memref<3x32x32xf32, #tpu.memory_space<vmem>>, vector<1x32x32xf32>
    %24 = vector.shape_cast %23 : vector<1x32x32xf32> to vector<32x32xf32>
    %c1_21 = arith.constant 1 : index
    %c0_22 = arith.constant 0 : index
    %c0_23 = arith.constant 0 : index
    %25 = vector.load %arg2[%c1_21, %c0_22, %c0_23] : memref<3x32x32xf32, #tpu.memory_space<vmem>>, vector<1x32x32xf32>
    %26 = vector.shape_cast %25 : vector<1x32x32xf32> to vector<32x32xf32>
    %c2_24 = arith.constant 2 : index
    %c0_25 = arith.constant 0 : index
    %c0_26 = arith.constant 0 : index
    %27 = vector.load %arg2[%c2_24, %c0_25, %c0_26] : memref<3x32x32xf32, #tpu.memory_space<vmem>>, vector<1x32x32xf32>
    %28 = vector.shape_cast %27 : vector<1x32x32xf32> to vector<32x32xf32>
    %c0_27 = arith.constant 0 : index
    %c0_28 = arith.constant 0 : index
    %29 = vector.load %arg3[%c0_27, %c0_28] : memref<4x32xf32, #tpu.memory_space<vmem>>, vector<4x32xf32>
    %30 = vector.extract_strided_slice %29 {offsets = [3, 0], sizes = [1, 32], strides = [1, 1]} : vector<4x32xf32> to vector<1x32xf32>
    %cst_29 = arith.constant 0.000000e+00 : f32
    %31 = vector.broadcast %cst_29 : f32 to vector<2x32xf32>
    %c0_i32 = arith.constant 0 : i32
    %c2_i32 = arith.constant 2 : i32
    %32 = arith.muli %c0_i32, %c2_i32 : i32
    %33 = tpu.assume_multiple %32, 2 : i32
    %cst_30 = arith.constant dense<0.000000e+00> : vector<2x32xf32>
    %34 = tpu.matmul %31, %24, %cst_30 {dimension_numbers = #tpu.dot_dimension_numbers<[1], [0], [0], [1], [0, 0, 1, 1], [], []>} : vector<2x32xf32>, vector<32x32xf32>, vector<2x32xf32> -> vector<2x32xf32>
    %cst_31 = arith.constant dense<0.000000e+00> : vector<2x32xf32>
    %35 = tpu.matmul %31, %26, %cst_31 {dimension_numbers = #tpu.dot_dimension_numbers<[1], [0], [0], [1], [0, 0, 1, 1], [], []>} : vector<2x32xf32>, vector<32x32xf32>, vector<2x32xf32> -> vector<2x32xf32>
    %cst_32 = arith.constant dense<0.000000e+00> : vector<2x32xf32>
    %36 = tpu.matmul %31, %28, %cst_32 {dimension_numbers = #tpu.dot_dimension_numbers<[1], [0], [0], [1], [0, 0, 1, 1], [], []>} : vector<2x32xf32>, vector<32x32xf32>, vector<2x32xf32> -> vector<2x32xf32>
    %37 = vector.broadcast %30 : vector<1x32xf32> to vector<2x32xf32>
    %38 = arith.addf %36, %37 : vector<2x32xf32>
    %39 = arith.index_cast %33 : i32 to index
    %c0_33 = arith.constant 0 : index
    %40 = vector.load %arg11[%39, %c0_33] : memref<16x32xf32, #tpu.memory_space<vmem>>, vector<2x32xf32>
    %41 = arith.addf %40, %34 : vector<2x32xf32>
    %42 = arith.negf %41 : vector<2x32xf32>
    %43 = math.exp %42 : vector<2x32xf32>
    %cst_34 = arith.constant 1.000000e+00 : f32
    %44 = vector.broadcast %cst_34 : f32 to vector<2x32xf32>
    %45 = arith.addf %44, %43 : vector<2x32xf32>
    %46 = arith.divf %44, %45 : vector<2x32xf32>
    %47 = arith.index_cast %33 : i32 to index
    %c0_35 = arith.constant 0 : index
    %48 = vector.load %arg12[%47, %c0_35] : memref<16x32xf32, #tpu.memory_space<vmem>>, vector<2x32xf32>
    %49 = arith.addf %48, %35 : vector<2x32xf32>
    %50 = arith.negf %49 : vector<2x32xf32>
    %51 = math.exp %50 : vector<2x32xf32>
    %cst_36 = arith.constant 1.000000e+00 : f32
    %52 = vector.broadcast %cst_36 : f32 to vector<2x32xf32>
    %53 = arith.addf %52, %51 : vector<2x32xf32>
    %54 = arith.divf %52, %53 : vector<2x32xf32>
    %55 = arith.index_cast %33 : i32 to index
    %c0_37 = arith.constant 0 : index
    %56 = vector.load %arg13[%55, %c0_37] : memref<16x32xf32, #tpu.memory_space<vmem>>, vector<2x32xf32>
    %57 = arith.mulf %46, %38 : vector<2x32xf32>
    %58 = arith.addf %56, %57 : vector<2x32xf32>
    %59 = math.tanh %58 : vector<2x32xf32>
    %cst_38 = arith.constant 1.000000e+00 : f32
    %60 = vector.broadcast %cst_38 : f32 to vector<2x32xf32>
    %61 = arith.subf %60, %54 : vector<2x32xf32>
    %62 = arith.mulf %61, %59 : vector<2x32xf32>
    %63 = arith.mulf %54, %31 : vector<2x32xf32>
    %64 = arith.addf %62, %63 : vector<2x32xf32>
    %65 = arith.index_cast %33 : i32 to index
    %c0_39 = arith.constant 0 : index
    %66 = vector.load %arg10[%65, %c0_39] : memref<16x32xf32, #tpu.memory_space<vmem>>, vector<2x32xf32>
    tpu.vector_store %arg10[%65, %c0_39], %64 {strides = array<i32>} : memref<16x32xf32, #tpu.memory_space<vmem>>, vector<2x32xf32>,
    %c1_i32 = arith.constant 1 : i32
    %c2_i32_40 = arith.constant 2 : i32
    %67 = arith.muli %c1_i32, %c2_i32_40 : i32
    %68 = tpu.assume_multiple %67, 2 : i32
    %cst_41 = arith.constant dense<0.000000e+00> : vector<2x32xf32>
    %69 = tpu.matmul %64, %24, %cst_41 {dimension_numbers = #tpu.dot_dimension_numbers<[1], [0], [0], [1], [0, 0, 1, 1], [], []>} : vector<2x32xf32>, vector<32x32xf32>, vector<2x32xf32> -> vector<2x32xf32>
    %cst_42 = arith.constant dense<0.000000e+00> : vector<2x32xf32>
    %70 = tpu.matmul %64, %26, %cst_42 {dimension_numbers = #tpu.dot_dimension_numbers<[1], [0], [0], [1], [0, 0, 1, 1], [], []>} : vector<2x32xf32>, vector<32x32xf32>, vector<2x32xf32> -> vector<2x32xf32>
    %cst_43 = arith.constant dense<0.000000e+00> : vector<2x32xf32>
    %71 = tpu.matmul %64, %28, %cst_43 {dimension_numbers = #tpu.dot_dimension_numbers<[1], [0], [0], [1], [0, 0, 1, 1], [], []>} : vector<2x32xf32>, vector<32x32xf32>, vector<2x32xf32> -> vector<2x32xf32>
    %72 = vector.broadcast %30 : vector<1x32xf32> to vector<2x32xf32>
    %73 = arith.addf %71, %72 : vector<2x32xf32>
    %74 = arith.index_cast %68 : i32 to index
    %c0_44 = arith.constant 0 : index
    %75 = vector.load %arg11[%74, %c0_44] : memref<16x32xf32, #tpu.memory_space<vmem>>, vector<2x32xf32>
    %76 = arith.addf %75, %69 : vector<2x32xf32>
    %77 = arith.negf %76 : vector<2x32xf32>
    %78 = math.exp %77 : vector<2x32xf32>
    %cst_45 = arith.constant 1.000000e+00 : f32
    %79 = vector.broadcast %cst_45 : f32 to vector<2x32xf32>
    %80 = arith.addf %79, %78 : vector<2x32xf32>
    %81 = arith.divf %79, %80 : vector<2x32xf32>
    %82 = arith.index_cast %68 : i32 to index
    %c0_46 = arith.constant 0 : index
    %83 = vector.load %arg12[%82, %c0_46] : memref<16x32xf32, #tpu.memory_space<vmem>>, vector<2x32xf32>
    %84 = arith.addf %83, %70 : vector<2x32xf32>
    %85 = arith.negf %84 : vector<2x32xf32>
    %86 = math.exp %85 : vector<2x32xf32>
    %cst_47 = arith.constant 1.000000e+00 : f32
    %87 = vector.broadcast %cst_47 : f32 to vector<2x32xf32>
    %88 = arith.addf %87, %86 : vector<2x32xf32>
    %89 = arith.divf %87, %88 : vector<2x32xf32>
    %90 = arith.index_cast %68 : i32 to index
    %c0_48 = arith.constant 0 : index
    %91 = vector.load %arg13[%90, %c0_48] : memref<16x32xf32, #tpu.memory_space<vmem>>, vector<2x32xf32>
    %92 = arith.mulf %81, %73 : vector<2x32xf32>
    %93 = arith.addf %91, %92 : vector<2x32xf32>
    %94 = math.tanh %93 : vector<2x32xf32>
    %cst_49 = arith.constant 1.000000e+00 : f32
    %95 = vector.broadcast %cst_49 : f32 to vector<2x32xf32>
    %96 = arith.subf %95, %89 : vector<2x32xf32>
    %97 = arith.mulf %96, %94 : vector<2x32xf32>
    %98 = arith.mulf %89, %64 : vector<2x32xf32>
    %99 = arith.addf %97, %98 : vector<2x32xf32>
    %100 = arith.index_cast %68 : i32 to index
    %c0_50 = arith.constant 0 : index
    %101 = vector.load %arg10[%100, %c0_50] : memref<16x32xf32, #tpu.memory_space<vmem>>, vector<2x32xf32>
    tpu.vector_store %arg10[%100, %c0_50], %99 {strides = array<i32>} : memref<16x32xf32, #tpu.memory_space<vmem>>, vector<2x32xf32>,
    %c2_i32_51 = arith.constant 2 : i32
    %c2_i32_52 = arith.constant 2 : i32
    %102 = arith.muli %c2_i32_51, %c2_i32_52 : i32
    %103 = tpu.assume_multiple %102, 2 : i32
    %cst_53 = arith.constant dense<0.000000e+00> : vector<2x32xf32>
    %104 = tpu.matmul %99, %24, %cst_53 {dimension_numbers = #tpu.dot_dimension_numbers<[1], [0], [0], [1], [0, 0, 1, 1], [], []>} : vector<2x32xf32>, vector<32x32xf32>, vector<2x32xf32> -> vector<2x32xf32>
    %cst_54 = arith.constant dense<0.000000e+00> : vector<2x32xf32>
    %105 = tpu.matmul %99, %26, %cst_54 {dimension_numbers = #tpu.dot_dimension_numbers<[1], [0], [0], [1], [0, 0, 1, 1], [], []>} : vector<2x32xf32>, vector<32x32xf32>, vector<2x32xf32> -> vector<2x32xf32>
    %cst_55 = arith.constant dense<0.000000e+00> : vector<2x32xf32>
    %106 = tpu.matmul %99, %28, %cst_55 {dimension_numbers = #tpu.dot_dimension_numbers<[1], [0], [0], [1], [0, 0, 1, 1], [], []>} : vector<2x32xf32>, vector<32x32xf32>, vector<2x32xf32> -> vector<2x32xf32>
    %107 = vector.broadcast %30 : vector<1x32xf32> to vector<2x32xf32>
    %108 = arith.addf %106, %107 : vector<2x32xf32>
    %109 = arith.index_cast %103 : i32 to index
    %c0_56 = arith.constant 0 : index
    %110 = vector.load %arg11[%109, %c0_56] : memref<16x32xf32, #tpu.memory_space<vmem>>, vector<2x32xf32>
    %111 = arith.addf %110, %104 : vector<2x32xf32>
    %112 = arith.negf %111 : vector<2x32xf32>
    %113 = math.exp %112 : vector<2x32xf32>
    %cst_57 = arith.constant 1.000000e+00 : f32
    %114 = vector.broadcast %cst_57 : f32 to vector<2x32xf32>
    %115 = arith.addf %114, %113 : vector<2x32xf32>
    %116 = arith.divf %114, %115 : vector<2x32xf32>
    %117 = arith.index_cast %103 : i32 to index
    %c0_58 = arith.constant 0 : index
    %118 = vector.load %arg12[%117, %c0_58] : memref<16x32xf32, #tpu.memory_space<vmem>>, vector<2x32xf32>
    %119 = arith.addf %118, %105 : vector<2x32xf32>
    %120 = arith.negf %119 : vector<2x32xf32>
    %121 = math.exp %120 : vector<2x32xf32>
    %cst_59 = arith.constant 1.000000e+00 : f32
    %122 = vector.broadcast %cst_59 : f32 to vector<2x32xf32>
    %123 = arith.addf %122, %121 : vector<2x32xf32>
    %124 = arith.divf %122, %123 : vector<2x32xf32>
    %125 = arith.index_cast %103 : i32 to index
    %c0_60 = arith.constant 0 : index
    %126 = vector.load %arg13[%125, %c0_60] : memref<16x32xf32, #tpu.memory_space<vmem>>, vector<2x32xf32>
    %127 = arith.mulf %116, %108 : vector<2x32xf32>
    %128 = arith.addf %126, %127 : vector<2x32xf32>
    %129 = math.tanh %128 : vector<2x32xf32>
    %cst_61 = arith.constant 1.000000e+00 : f32
    %130 = vector.broadcast %cst_61 : f32 to vector<2x32xf32>
    %131 = arith.subf %130, %124 : vector<2x32xf32>
    %132 = arith.mulf %131, %129 : vector<2x32xf32>
    %133 = arith.mulf %124, %99 : vector<2x32xf32>
    %134 = arith.addf %132, %133 : vector<2x32xf32>
    %135 = arith.index_cast %103 : i32 to index
    %c0_62 = arith.constant 0 : index
    %136 = vector.load %arg10[%135, %c0_62] : memref<16x32xf32, #tpu.memory_space<vmem>>, vector<2x32xf32>
    tpu.vector_store %arg10[%135, %c0_62], %134 {strides = array<i32>} : memref<16x32xf32, #tpu.memory_space<vmem>>, vector<2x32xf32>,
    %c3_i32 = arith.constant 3 : i32
    %c2_i32_63 = arith.constant 2 : i32
    %137 = arith.muli %c3_i32, %c2_i32_63 : i32
    %138 = tpu.assume_multiple %137, 2 : i32
    %cst_64 = arith.constant dense<0.000000e+00> : vector<2x32xf32>
    %139 = tpu.matmul %134, %24, %cst_64 {dimension_numbers = #tpu.dot_dimension_numbers<[1], [0], [0], [1], [0, 0, 1, 1], [], []>} : vector<2x32xf32>, vector<32x32xf32>, vector<2x32xf32> -> vector<2x32xf32>
    %cst_65 = arith.constant dense<0.000000e+00> : vector<2x32xf32>
    %140 = tpu.matmul %134, %26, %cst_65 {dimension_numbers = #tpu.dot_dimension_numbers<[1], [0], [0], [1], [0, 0, 1, 1], [], []>} : vector<2x32xf32>, vector<32x32xf32>, vector<2x32xf32> -> vector<2x32xf32>
    %cst_66 = arith.constant dense<0.000000e+00> : vector<2x32xf32>
    %141 = tpu.matmul %134, %28, %cst_66 {dimension_numbers = #tpu.dot_dimension_numbers<[1], [0], [0], [1], [0, 0, 1, 1], [], []>} : vector<2x32xf32>, vector<32x32xf32>, vector<2x32xf32> -> vector<2x32xf32>
    %142 = vector.broadcast %30 : vector<1x32xf32> to vector<2x32xf32>
    %143 = arith.addf %141, %142 : vector<2x32xf32>
    %144 = arith.index_cast %138 : i32 to index
    %c0_67 = arith.constant 0 : index
    %145 = vector.load %arg11[%144, %c0_67] : memref<16x32xf32, #tpu.memory_space<vmem>>, vector<2x32xf32>
    %146 = arith.addf %145, %139 : vector<2x32xf32>
    %147 = arith.negf %146 : vector<2x32xf32>
    %148 = math.exp %147 : vector<2x32xf32>
    %cst_68 = arith.constant 1.000000e+00 : f32
    %149 = vector.broadcast %cst_68 : f32 to vector<2x32xf32>
    %150 = arith.addf %149, %148 : vector<2x32xf32>
    %151 = arith.divf %149, %150 : vector<2x32xf32>
    %152 = arith.index_cast %138 : i32 to index
    %c0_69 = arith.constant 0 : index
    %153 = vector.load %arg12[%152, %c0_69] : memref<16x32xf32, #tpu.memory_space<vmem>>, vector<2x32xf32>
    %154 = arith.addf %153, %140 : vector<2x32xf32>
    %155 = arith.negf %154 : vector<2x32xf32>
    %156 = math.exp %155 : vector<2x32xf32>
    %cst_70 = arith.constant 1.000000e+00 : f32
    %157 = vector.broadcast %cst_70 : f32 to vector<2x32xf32>
    %158 = arith.addf %157, %156 : vector<2x32xf32>
    %159 = arith.divf %157, %158 : vector<2x32xf32>
    %160 = arith.index_cast %138 : i32 to index
    %c0_71 = arith.constant 0 : index
    %161 = vector.load %arg13[%160, %c0_71] : memref<16x32xf32, #tpu.memory_space<vmem>>, vector<2x32xf32>
    %162 = arith.mulf %151, %143 : vector<2x32xf32>
    %163 = arith.addf %161, %162 : vector<2x32xf32>
    %164 = math.tanh %163 : vector<2x32xf32>
    %cst_72 = arith.constant 1.000000e+00 : f32
    %165 = vector.broadcast %cst_72 : f32 to vector<2x32xf32>
    %166 = arith.subf %165, %159 : vector<2x32xf32>
    %167 = arith.mulf %166, %164 : vector<2x32xf32>
    %168 = arith.mulf %159, %134 : vector<2x32xf32>
    %169 = arith.addf %167, %168 : vector<2x32xf32>
    %170 = arith.index_cast %138 : i32 to index
    %c0_73 = arith.constant 0 : index
    %171 = vector.load %arg10[%170, %c0_73] : memref<16x32xf32, #tpu.memory_space<vmem>>, vector<2x32xf32>
    tpu.vector_store %arg10[%170, %c0_73], %169 {strides = array<i32>} : memref<16x32xf32, #tpu.memory_space<vmem>>, vector<2x32xf32>,
    %c4_i32 = arith.constant 4 : i32
    %c2_i32_74 = arith.constant 2 : i32
    %172 = arith.muli %c4_i32, %c2_i32_74 : i32
    %173 = tpu.assume_multiple %172, 2 : i32
    %cst_75 = arith.constant dense<0.000000e+00> : vector<2x32xf32>
    %174 = tpu.matmul %169, %24, %cst_75 {dimension_numbers = #tpu.dot_dimension_numbers<[1], [0], [0], [1], [0, 0, 1, 1], [], []>} : vector<2x32xf32>, vector<32x32xf32>, vector<2x32xf32> -> vector<2x32xf32>
    %cst_76 = arith.constant dense<0.000000e+00> : vector<2x32xf32>
    %175 = tpu.matmul %169, %26, %cst_76 {dimension_numbers = #tpu.dot_dimension_numbers<[1], [0], [0], [1], [0, 0, 1, 1], [], []>} : vector<2x32xf32>, vector<32x32xf32>, vector<2x32xf32> -> vector<2x32xf32>
    %cst_77 = arith.constant dense<0.000000e+00> : vector<2x32xf32>
    %176 = tpu.matmul %169, %28, %cst_77 {dimension_numbers = #tpu.dot_dimension_numbers<[1], [0], [0], [1], [0, 0, 1, 1], [], []>} : vector<2x32xf32>, vector<32x32xf32>, vector<2x32xf32> -> vector<2x32xf32>
    %177 = vector.broadcast %30 : vector<1x32xf32> to vector<2x32xf32>
    %178 = arith.addf %176, %177 : vector<2x32xf32>
    %179 = arith.index_cast %173 : i32 to index
    %c0_78 = arith.constant 0 : index
    %180 = vector.load %arg11[%179, %c0_78] : memref<16x32xf32, #tpu.memory_space<vmem>>, vector<2x32xf32>
    %181 = arith.addf %180, %174 : vector<2x32xf32>
    %182 = arith.negf %181 : vector<2x32xf32>
    %183 = math.exp %182 : vector<2x32xf32>
    %cst_79 = arith.constant 1.000000e+00 : f32
    %184 = vector.broadcast %cst_79 : f32 to vector<2x32xf32>
    %185 = arith.addf %184, %183 : vector<2x32xf32>
    %186 = arith.divf %184, %185 : vector<2x32xf32>
    %187 = arith.index_cast %173 : i32 to index
    %c0_80 = arith.constant 0 : index
    %188 = vector.load %arg12[%187, %c0_80] : memref<16x32xf32, #tpu.memory_space<vmem>>, vector<2x32xf32>
    %189 = arith.addf %188, %175 : vector<2x32xf32>
    %190 = arith.negf %189 : vector<2x32xf32>
    %191 = math.exp %190 : vector<2x32xf32>
    %cst_81 = arith.constant 1.000000e+00 : f32
    %192 = vector.broadcast %cst_81 : f32 to vector<2x32xf32>
    %193 = arith.addf %192, %191 : vector<2x32xf32>
    %194 = arith.divf %192, %193 : vector<2x32xf32>
    %195 = arith.index_cast %173 : i32 to index
    %c0_82 = arith.constant 0 : index
    %196 = vector.load %arg13[%195, %c0_82] : memref<16x32xf32, #tpu.memory_space<vmem>>, vector<2x32xf32>
    %197 = arith.mulf %186, %178 : vector<2x32xf32>
    %198 = arith.addf %196, %197 : vector<2x32xf32>
    %199 = math.tanh %198 : vector<2x32xf32>
    %cst_83 = arith.constant 1.000000e+00 : f32
    %200 = vector.broadcast %cst_83 : f32 to vector<2x32xf32>
    %201 = arith.subf %200, %194 : vector<2x32xf32>
    %202 = arith.mulf %201, %199 : vector<2x32xf32>
    %203 = arith.mulf %194, %169 : vector<2x32xf32>
    %204 = arith.addf %202, %203 : vector<2x32xf32>
    %205 = arith.index_cast %173 : i32 to index
    %c0_84 = arith.constant 0 : index
    %206 = vector.load %arg10[%205, %c0_84] : memref<16x32xf32, #tpu.memory_space<vmem>>, vector<2x32xf32>
    tpu.vector_store %arg10[%205, %c0_84], %204 {strides = array<i32>} : memref<16x32xf32, #tpu.memory_space<vmem>>, vector<2x32xf32>,
    %c5_i32 = arith.constant 5 : i32
    %c2_i32_85 = arith.constant 2 : i32
    %207 = arith.muli %c5_i32, %c2_i32_85 : i32
    %208 = tpu.assume_multiple %207, 2 : i32
    %cst_86 = arith.constant dense<0.000000e+00> : vector<2x32xf32>
    %209 = tpu.matmul %204, %24, %cst_86 {dimension_numbers = #tpu.dot_dimension_numbers<[1], [0], [0], [1], [0, 0, 1, 1], [], []>} : vector<2x32xf32>, vector<32x32xf32>, vector<2x32xf32> -> vector<2x32xf32>
    %cst_87 = arith.constant dense<0.000000e+00> : vector<2x32xf32>
    %210 = tpu.matmul %204, %26, %cst_87 {dimension_numbers = #tpu.dot_dimension_numbers<[1], [0], [0], [1], [0, 0, 1, 1], [], []>} : vector<2x32xf32>, vector<32x32xf32>, vector<2x32xf32> -> vector<2x32xf32>
    %cst_88 = arith.constant dense<0.000000e+00> : vector<2x32xf32>
    %211 = tpu.matmul %204, %28, %cst_88 {dimension_numbers = #tpu.dot_dimension_numbers<[1], [0], [0], [1], [0, 0, 1, 1], [], []>} : vector<2x32xf32>, vector<32x32xf32>, vector<2x32xf32> -> vector<2x32xf32>
    %212 = vector.broadcast %30 : vector<1x32xf32> to vector<2x32xf32>
    %213 = arith.addf %211, %212 : vector<2x32xf32>
    %214 = arith.index_cast %208 : i32 to index
    %c0_89 = arith.constant 0 : index
    %215 = vector.load %arg11[%214, %c0_89] : memref<16x32xf32, #tpu.memory_space<vmem>>, vector<2x32xf32>
    %216 = arith.addf %215, %209 : vector<2x32xf32>
    %217 = arith.negf %216 : vector<2x32xf32>
    %218 = math.exp %217 : vector<2x32xf32>
    %cst_90 = arith.constant 1.000000e+00 : f32
    %219 = vector.broadcast %cst_90 : f32 to vector<2x32xf32>
    %220 = arith.addf %219, %218 : vector<2x32xf32>
    %221 = arith.divf %219, %220 : vector<2x32xf32>
    %222 = arith.index_cast %208 : i32 to index
    %c0_91 = arith.constant 0 : index
    %223 = vector.load %arg12[%222, %c0_91] : memref<16x32xf32, #tpu.memory_space<vmem>>, vector<2x32xf32>
    %224 = arith.addf %223, %210 : vector<2x32xf32>
    %225 = arith.negf %224 : vector<2x32xf32>
    %226 = math.exp %225 : vector<2x32xf32>
    %cst_92 = arith.constant 1.000000e+00 : f32
    %227 = vector.broadcast %cst_92 : f32 to vector<2x32xf32>
    %228 = arith.addf %227, %226 : vector<2x32xf32>
    %229 = arith.divf %227, %228 : vector<2x32xf32>
    %230 = arith.index_cast %208 : i32 to index
    %c0_93 = arith.constant 0 : index
    %231 = vector.load %arg13[%230, %c0_93] : memref<16x32xf32, #tpu.memory_space<vmem>>, vector<2x32xf32>
    %232 = arith.mulf %221, %213 : vector<2x32xf32>
    %233 = arith.addf %231, %232 : vector<2x32xf32>
    %234 = math.tanh %233 : vector<2x32xf32>
    %cst_94 = arith.constant 1.000000e+00 : f32
    %235 = vector.broadcast %cst_94 : f32 to vector<2x32xf32>
    %236 = arith.subf %235, %229 : vector<2x32xf32>
    %237 = arith.mulf %236, %234 : vector<2x32xf32>
    %238 = arith.mulf %229, %204 : vector<2x32xf32>
    %239 = arith.addf %237, %238 : vector<2x32xf32>
    %240 = arith.index_cast %208 : i32 to index
    %c0_95 = arith.constant 0 : index
    %241 = vector.load %arg10[%240, %c0_95] : memref<16x32xf32, #tpu.memory_space<vmem>>, vector<2x32xf32>
    tpu.vector_store %arg10[%240, %c0_95], %239 {strides = array<i32>} : memref<16x32xf32, #tpu.memory_space<vmem>>, vector<2x32xf32>,
    %c6_i32 = arith.constant 6 : i32
    %c2_i32_96 = arith.constant 2 : i32
    %242 = arith.muli %c6_i32, %c2_i32_96 : i32
    %243 = tpu.assume_multiple %242, 2 : i32
    %cst_97 = arith.constant dense<0.000000e+00> : vector<2x32xf32>
    %244 = tpu.matmul %239, %24, %cst_97 {dimension_numbers = #tpu.dot_dimension_numbers<[1], [0], [0], [1], [0, 0, 1, 1], [], []>} : vector<2x32xf32>, vector<32x32xf32>, vector<2x32xf32> -> vector<2x32xf32>
    %cst_98 = arith.constant dense<0.000000e+00> : vector<2x32xf32>
    %245 = tpu.matmul %239, %26, %cst_98 {dimension_numbers = #tpu.dot_dimension_numbers<[1], [0], [0], [1], [0, 0, 1, 1], [], []>} : vector<2x32xf32>, vector<32x32xf32>, vector<2x32xf32> -> vector<2x32xf32>
    %cst_99 = arith.constant dense<0.000000e+00> : vector<2x32xf32>
    %246 = tpu.matmul %239, %28, %cst_99 {dimension_numbers = #tpu.dot_dimension_numbers<[1], [0], [0], [1], [0, 0, 1, 1], [], []>} : vector<2x32xf32>, vector<32x32xf32>, vector<2x32xf32> -> vector<2x32xf32>
    %247 = vector.broadcast %30 : vector<1x32xf32> to vector<2x32xf32>
    %248 = arith.addf %246, %247 : vector<2x32xf32>
    %249 = arith.index_cast %243 : i32 to index
    %c0_100 = arith.constant 0 : index
    %250 = vector.load %arg11[%249, %c0_100] : memref<16x32xf32, #tpu.memory_space<vmem>>, vector<2x32xf32>
    %251 = arith.addf %250, %244 : vector<2x32xf32>
    %252 = arith.negf %251 : vector<2x32xf32>
    %253 = math.exp %252 : vector<2x32xf32>
    %cst_101 = arith.constant 1.000000e+00 : f32
    %254 = vector.broadcast %cst_101 : f32 to vector<2x32xf32>
    %255 = arith.addf %254, %253 : vector<2x32xf32>
    %256 = arith.divf %254, %255 : vector<2x32xf32>
    %257 = arith.index_cast %243 : i32 to index
    %c0_102 = arith.constant 0 : index
    %258 = vector.load %arg12[%257, %c0_102] : memref<16x32xf32, #tpu.memory_space<vmem>>, vector<2x32xf32>
    %259 = arith.addf %258, %245 : vector<2x32xf32>
    %260 = arith.negf %259 : vector<2x32xf32>
    %261 = math.exp %260 : vector<2x32xf32>
    %cst_103 = arith.constant 1.000000e+00 : f32
    %262 = vector.broadcast %cst_103 : f32 to vector<2x32xf32>
    %263 = arith.addf %262, %261 : vector<2x32xf32>
    %264 = arith.divf %262, %263 : vector<2x32xf32>
    %265 = arith.index_cast %243 : i32 to index
    %c0_104 = arith.constant 0 : index
    %266 = vector.load %arg13[%265, %c0_104] : memref<16x32xf32, #tpu.memory_space<vmem>>, vector<2x32xf32>
    %267 = arith.mulf %256, %248 : vector<2x32xf32>
    %268 = arith.addf %266, %267 : vector<2x32xf32>
    %269 = math.tanh %268 : vector<2x32xf32>
    %cst_105 = arith.constant 1.000000e+00 : f32
    %270 = vector.broadcast %cst_105 : f32 to vector<2x32xf32>
    %271 = arith.subf %270, %264 : vector<2x32xf32>
    %272 = arith.mulf %271, %269 : vector<2x32xf32>
    %273 = arith.mulf %264, %239 : vector<2x32xf32>
    %274 = arith.addf %272, %273 : vector<2x32xf32>
    %275 = arith.index_cast %243 : i32 to index
    %c0_106 = arith.constant 0 : index
    %276 = vector.load %arg10[%275, %c0_106] : memref<16x32xf32, #tpu.memory_space<vmem>>, vector<2x32xf32>
    tpu.vector_store %arg10[%275, %c0_106], %274 {strides = array<i32>} : memref<16x32xf32, #tpu.memory_space<vmem>>, vector<2x32xf32>,
    %c7_i32 = arith.constant 7 : i32
    %c2_i32_107 = arith.constant 2 : i32
    %277 = arith.muli %c7_i32, %c2_i32_107 : i32
    %278 = tpu.assume_multiple %277, 2 : i32
    %cst_108 = arith.constant dense<0.000000e+00> : vector<2x32xf32>
    %279 = tpu.matmul %274, %24, %cst_108 {dimension_numbers = #tpu.dot_dimension_numbers<[1], [0], [0], [1], [0, 0, 1, 1], [], []>} : vector<2x32xf32>, vector<32x32xf32>, vector<2x32xf32> -> vector<2x32xf32>
    %cst_109 = arith.constant dense<0.000000e+00> : vector<2x32xf32>
    %280 = tpu.matmul %274, %26, %cst_109 {dimension_numbers = #tpu.dot_dimension_numbers<[1], [0], [0], [1], [0, 0, 1, 1], [], []>} : vector<2x32xf32>, vector<32x32xf32>, vector<2x32xf32> -> vector<2x32xf32>
    %cst_110 = arith.constant dense<0.000000e+00> : vector<2x32xf32>
    %281 = tpu.matmul %274, %28, %cst_110 {dimension_numbers = #tpu.dot_dimension_numbers<[1], [0], [0], [1], [0, 0, 1, 1], [], []>} : vector<2x32xf32>, vector<32x32xf32>, vector<2x32xf32> -> vector<2x32xf32>
    %282 = vector.broadcast %30 : vector<1x32xf32> to vector<2x32xf32>
    %283 = arith.addf %281, %282 : vector<2x32xf32>
    %284 = arith.index_cast %278 : i32 to index
    %c0_111 = arith.constant 0 : index
    %285 = vector.load %arg11[%284, %c0_111] : memref<16x32xf32, #tpu.memory_space<vmem>>, vector<2x32xf32>
    %286 = arith.addf %285, %279 : vector<2x32xf32>
    %287 = arith.negf %286 : vector<2x32xf32>
    %288 = math.exp %287 : vector<2x32xf32>
    %cst_112 = arith.constant 1.000000e+00 : f32
    %289 = vector.broadcast %cst_112 : f32 to vector<2x32xf32>
    %290 = arith.addf %289, %288 : vector<2x32xf32>
    %291 = arith.divf %289, %290 : vector<2x32xf32>
    %292 = arith.index_cast %278 : i32 to index
    %c0_113 = arith.constant 0 : index
    %293 = vector.load %arg12[%292, %c0_113] : memref<16x32xf32, #tpu.memory_space<vmem>>, vector<2x32xf32>
    %294 = arith.addf %293, %280 : vector<2x32xf32>
    %295 = arith.negf %294 : vector<2x32xf32>
    %296 = math.exp %295 : vector<2x32xf32>
    %cst_114 = arith.constant 1.000000e+00 : f32
    %297 = vector.broadcast %cst_114 : f32 to vector<2x32xf32>
    %298 = arith.addf %297, %296 : vector<2x32xf32>
    %299 = arith.divf %297, %298 : vector<2x32xf32>
    %300 = arith.index_cast %278 : i32 to index
    %c0_115 = arith.constant 0 : index
    %301 = vector.load %arg13[%300, %c0_115] : memref<16x32xf32, #tpu.memory_space<vmem>>, vector<2x32xf32>
    %302 = arith.mulf %291, %283 : vector<2x32xf32>
    %303 = arith.addf %301, %302 : vector<2x32xf32>
    %304 = math.tanh %303 : vector<2x32xf32>
    %cst_116 = arith.constant 1.000000e+00 : f32
    %305 = vector.broadcast %cst_116 : f32 to vector<2x32xf32>
    %306 = arith.subf %305, %299 : vector<2x32xf32>
    %307 = arith.mulf %306, %304 : vector<2x32xf32>
    %308 = arith.mulf %299, %274 : vector<2x32xf32>
    %309 = arith.addf %307, %308 : vector<2x32xf32>
    %310 = arith.index_cast %278 : i32 to index
    %c0_117 = arith.constant 0 : index
    %311 = vector.load %arg10[%310, %c0_117] : memref<16x32xf32, #tpu.memory_space<vmem>>, vector<2x32xf32>
    tpu.vector_store %arg10[%310, %c0_117], %309 {strides = array<i32>} : memref<16x32xf32, #tpu.memory_space<vmem>>, vector<2x32xf32>,
    %c8_i32 = arith.constant 8 : i32
    %c0_118 = arith.constant 0 : index
    %c0_119 = arith.constant 0 : index
    %312 = vector.load %arg10[%c0_118, %c0_119] : memref<16x32xf32, #tpu.memory_space<vmem>>, vector<16x32xf32>
    %c0_120 = arith.constant 0 : index
    %c0_121 = arith.constant 0 : index
    %313 = vector.load %arg6[%c0_120, %c0_121] : memref<4x32xf32, #tpu.memory_space<vmem>>, vector<4x32xf32>
    %c0_122 = arith.constant 0 : index
    %c0_123 = arith.constant 0 : index
    %c0_124 = arith.constant 0 : index
    %314 = vector.load %arg4[%c0_122, %c0_123, %c0_124] : memref<3x32x32xf32, #tpu.memory_space<vmem>>, vector<1x32x32xf32>
    %315 = vector.shape_cast %314 : vector<1x32x32xf32> to vector<32x32xf32>
    %cst_125 = arith.constant dense<0.000000e+00> : vector<16x32xf32>
    %316 = tpu.matmul %312, %315, %cst_125 {dimension_numbers = #tpu.dot_dimension_numbers<[1], [0], [0], [1], [0, 0, 1, 1], [], []>} : vector<16x32xf32>, vector<32x32xf32>, vector<16x32xf32> -> vector<16x32xf32>
    %317 = vector.extract_strided_slice %313 {offsets = [0, 0], sizes = [1, 32], strides = [1, 1]} : vector<4x32xf32> to vector<1x32xf32>
    %318 = vector.broadcast %317 : vector<1x32xf32> to vector<16x32xf32>
    %319 = arith.addf %316, %318 : vector<16x32xf32>
    %c0_126 = arith.constant 0 : index
    %c0_127 = arith.constant 0 : index
    %320 = vector.load %arg11[%c0_126, %c0_127] : memref<16x32xf32, #tpu.memory_space<vmem>>, vector<16x32xf32>
    tpu.vector_store %arg11[%c0_126, %c0_127], %319 {strides = array<i32>} : memref<16x32xf32, #tpu.memory_space<vmem>>, vector<16x32xf32>,
    %c1_128 = arith.constant 1 : index
    %c0_129 = arith.constant 0 : index
    %c0_130 = arith.constant 0 : index
    %321 = vector.load %arg4[%c1_128, %c0_129, %c0_130] : memref<3x32x32xf32, #tpu.memory_space<vmem>>, vector<1x32x32xf32>
    %322 = vector.shape_cast %321 : vector<1x32x32xf32> to vector<32x32xf32>
    %cst_131 = arith.constant dense<0.000000e+00> : vector<16x32xf32>
    %323 = tpu.matmul %312, %322, %cst_131 {dimension_numbers = #tpu.dot_dimension_numbers<[1], [0], [0], [1], [0, 0, 1, 1], [], []>} : vector<16x32xf32>, vector<32x32xf32>, vector<16x32xf32> -> vector<16x32xf32>
    %324 = vector.extract_strided_slice %313 {offsets = [1, 0], sizes = [1, 32], strides = [1, 1]} : vector<4x32xf32> to vector<1x32xf32>
    %325 = vector.broadcast %324 : vector<1x32xf32> to vector<16x32xf32>
    %326 = arith.addf %323, %325 : vector<16x32xf32>
    %c0_132 = arith.constant 0 : index
    %c0_133 = arith.constant 0 : index
    %327 = vector.load %arg12[%c0_132, %c0_133] : memref<16x32xf32, #tpu.memory_space<vmem>>, vector<16x32xf32>
    tpu.vector_store %arg12[%c0_132, %c0_133], %326 {strides = array<i32>} : memref<16x32xf32, #tpu.memory_space<vmem>>, vector<16x32xf32>,
    %c2_134 = arith.constant 2 : index
    %c0_135 = arith.constant 0 : index
    %c0_136 = arith.constant 0 : index
    %328 = vector.load %arg4[%c2_134, %c0_135, %c0_136] : memref<3x32x32xf32, #tpu.memory_space<vmem>>, vector<1x32x32xf32>
    %329 = vector.shape_cast %328 : vector<1x32x32xf32> to vector<32x32xf32>
    %cst_137 = arith.constant dense<0.000000e+00> : vector<16x32xf32>
    %330 = tpu.matmul %312, %329, %cst_137 {dimension_numbers = #tpu.dot_dimension_numbers<[1], [0], [0], [1], [0, 0, 1, 1], [], []>} : vector<16x32xf32>, vector<32x32xf32>, vector<16x32xf32> -> vector<16x32xf32>
    %331 = vector.extract_strided_slice %313 {offsets = [2, 0], sizes = [1, 32], strides = [1, 1]} : vector<4x32xf32> to vector<1x32xf32>
    %332 = vector.broadcast %331 : vector<1x32xf32> to vector<16x32xf32>
    %333 = arith.addf %330, %332 : vector<16x32xf32>
    %c0_138 = arith.constant 0 : index
    %c0_139 = arith.constant 0 : index
    %334 = vector.load %arg13[%c0_138, %c0_139] : memref<16x32xf32, #tpu.memory_space<vmem>>, vector<16x32xf32>
    tpu.vector_store %arg13[%c0_138, %c0_139], %333 {strides = array<i32>} : memref<16x32xf32, #tpu.memory_space<vmem>>, vector<16x32xf32>,
    %c0_140 = arith.constant 0 : index
    %c0_141 = arith.constant 0 : index
    %c0_142 = arith.constant 0 : index
    %335 = vector.load %arg5[%c0_140, %c0_141, %c0_142] : memref<3x32x32xf32, #tpu.memory_space<vmem>>, vector<1x32x32xf32>
    %336 = vector.shape_cast %335 : vector<1x32x32xf32> to vector<32x32xf32>
    %c1_143 = arith.constant 1 : index
    %c0_144 = arith.constant 0 : index
    %c0_145 = arith.constant 0 : index
    %337 = vector.load %arg5[%c1_143, %c0_144, %c0_145] : memref<3x32x32xf32, #tpu.memory_space<vmem>>, vector<1x32x32xf32>
    %338 = vector.shape_cast %337 : vector<1x32x32xf32> to vector<32x32xf32>
    %c2_146 = arith.constant 2 : index
    %c0_147 = arith.constant 0 : index
    %c0_148 = arith.constant 0 : index
    %339 = vector.load %arg5[%c2_146, %c0_147, %c0_148] : memref<3x32x32xf32, #tpu.memory_space<vmem>>, vector<1x32x32xf32>
    %340 = vector.shape_cast %339 : vector<1x32x32xf32> to vector<32x32xf32>
    %c0_149 = arith.constant 0 : index
    %c0_150 = arith.constant 0 : index
    %341 = vector.load %arg6[%c0_149, %c0_150] : memref<4x32xf32, #tpu.memory_space<vmem>>, vector<4x32xf32>
    %342 = vector.extract_strided_slice %341 {offsets = [3, 0], sizes = [1, 32], strides = [1, 1]} : vector<4x32xf32> to vector<1x32xf32>
    %cst_151 = arith.constant 0.000000e+00 : f32
    %343 = vector.broadcast %cst_151 : f32 to vector<2x32xf32>
    %c0_i32_152 = arith.constant 0 : i32
    %c2_i32_153 = arith.constant 2 : i32
    %344 = arith.muli %c0_i32_152, %c2_i32_153 : i32
    %345 = tpu.assume_multiple %344, 2 : i32
    %cst_154 = arith.constant dense<0.000000e+00> : vector<2x32xf32>
    %346 = tpu.matmul %343, %336, %cst_154 {dimension_numbers = #tpu.dot_dimension_numbers<[1], [0], [0], [1], [0, 0, 1, 1], [], []>} : vector<2x32xf32>, vector<32x32xf32>, vector<2x32xf32> -> vector<2x32xf32>
    %cst_155 = arith.constant dense<0.000000e+00> : vector<2x32xf32>
    %347 = tpu.matmul %343, %338, %cst_155 {dimension_numbers = #tpu.dot_dimension_numbers<[1], [0], [0], [1], [0, 0, 1, 1], [], []>} : vector<2x32xf32>, vector<32x32xf32>, vector<2x32xf32> -> vector<2x32xf32>
    %cst_156 = arith.constant dense<0.000000e+00> : vector<2x32xf32>
    %348 = tpu.matmul %343, %340, %cst_156 {dimension_numbers = #tpu.dot_dimension_numbers<[1], [0], [0], [1], [0, 0, 1, 1], [], []>} : vector<2x32xf32>, vector<32x32xf32>, vector<2x32xf32> -> vector<2x32xf32>
    %349 = vector.broadcast %342 : vector<1x32xf32> to vector<2x32xf32>
    %350 = arith.addf %348, %349 : vector<2x32xf32>
    %351 = arith.index_cast %345 : i32 to index
    %c0_157 = arith.constant 0 : index
    %352 = vector.load %arg11[%351, %c0_157] : memref<16x32xf32, #tpu.memory_space<vmem>>, vector<2x32xf32>
    %353 = arith.addf %352, %346 : vector<2x32xf32>
    %354 = arith.negf %353 : vector<2x32xf32>
    %355 = math.exp %354 : vector<2x32xf32>
    %cst_158 = arith.constant 1.000000e+00 : f32
    %356 = vector.broadcast %cst_158 : f32 to vector<2x32xf32>
    %357 = arith.addf %356, %355 : vector<2x32xf32>
    %358 = arith.divf %356, %357 : vector<2x32xf32>
    %359 = arith.index_cast %345 : i32 to index
    %c0_159 = arith.constant 0 : index
    %360 = vector.load %arg12[%359, %c0_159] : memref<16x32xf32, #tpu.memory_space<vmem>>, vector<2x32xf32>
    %361 = arith.addf %360, %347 : vector<2x32xf32>
    %362 = arith.negf %361 : vector<2x32xf32>
    %363 = math.exp %362 : vector<2x32xf32>
    %cst_160 = arith.constant 1.000000e+00 : f32
    %364 = vector.broadcast %cst_160 : f32 to vector<2x32xf32>
    %365 = arith.addf %364, %363 : vector<2x32xf32>
    %366 = arith.divf %364, %365 : vector<2x32xf32>
    %367 = arith.index_cast %345 : i32 to index
    %c0_161 = arith.constant 0 : index
    %368 = vector.load %arg13[%367, %c0_161] : memref<16x32xf32, #tpu.memory_space<vmem>>, vector<2x32xf32>
    %369 = arith.mulf %358, %350 : vector<2x32xf32>
    %370 = arith.addf %368, %369 : vector<2x32xf32>
    %371 = math.tanh %370 : vector<2x32xf32>
    %cst_162 = arith.constant 1.000000e+00 : f32
    %372 = vector.broadcast %cst_162 : f32 to vector<2x32xf32>
    %373 = arith.subf %372, %366 : vector<2x32xf32>
    %374 = arith.mulf %373, %371 : vector<2x32xf32>
    %375 = arith.mulf %366, %343 : vector<2x32xf32>
    %376 = arith.addf %374, %375 : vector<2x32xf32>
    %377 = arith.index_cast %345 : i32 to index
    %c0_163 = arith.constant 0 : index
    %378 = vector.load %arg10[%377, %c0_163] : memref<16x32xf32, #tpu.memory_space<vmem>>, vector<2x32xf32>
    tpu.vector_store %arg10[%377, %c0_163], %376 {strides = array<i32>} : memref<16x32xf32, #tpu.memory_space<vmem>>, vector<2x32xf32>,
    %c1_i32_164 = arith.constant 1 : i32
    %c2_i32_165 = arith.constant 2 : i32
    %379 = arith.muli %c1_i32_164, %c2_i32_165 : i32
    %380 = tpu.assume_multiple %379, 2 : i32
    %cst_166 = arith.constant dense<0.000000e+00> : vector<2x32xf32>
    %381 = tpu.matmul %376, %336, %cst_166 {dimension_numbers = #tpu.dot_dimension_numbers<[1], [0], [0], [1], [0, 0, 1, 1], [], []>} : vector<2x32xf32>, vector<32x32xf32>, vector<2x32xf32> -> vector<2x32xf32>
    %cst_167 = arith.constant dense<0.000000e+00> : vector<2x32xf32>
    %382 = tpu.matmul %376, %338, %cst_167 {dimension_numbers = #tpu.dot_dimension_numbers<[1], [0], [0], [1], [0, 0, 1, 1], [], []>} : vector<2x32xf32>, vector<32x32xf32>, vector<2x32xf32> -> vector<2x32xf32>
    %cst_168 = arith.constant dense<0.000000e+00> : vector<2x32xf32>
    %383 = tpu.matmul %376, %340, %cst_168 {dimension_numbers = #tpu.dot_dimension_numbers<[1], [0], [0], [1], [0, 0, 1, 1], [], []>} : vector<2x32xf32>, vector<32x32xf32>, vector<2x32xf32> -> vector<2x32xf32>
    %384 = vector.broadcast %342 : vector<1x32xf32> to vector<2x32xf32>
    %385 = arith.addf %383, %384 : vector<2x32xf32>
    %386 = arith.index_cast %380 : i32 to index
    %c0_169 = arith.constant 0 : index
    %387 = vector.load %arg11[%386, %c0_169] : memref<16x32xf32, #tpu.memory_space<vmem>>, vector<2x32xf32>
    %388 = arith.addf %387, %381 : vector<2x32xf32>
    %389 = arith.negf %388 : vector<2x32xf32>
    %390 = math.exp %389 : vector<2x32xf32>
    %cst_170 = arith.constant 1.000000e+00 : f32
    %391 = vector.broadcast %cst_170 : f32 to vector<2x32xf32>
    %392 = arith.addf %391, %390 : vector<2x32xf32>
    %393 = arith.divf %391, %392 : vector<2x32xf32>
    %394 = arith.index_cast %380 : i32 to index
    %c0_171 = arith.constant 0 : index
    %395 = vector.load %arg12[%394, %c0_171] : memref<16x32xf32, #tpu.memory_space<vmem>>, vector<2x32xf32>
    %396 = arith.addf %395, %382 : vector<2x32xf32>
    %397 = arith.negf %396 : vector<2x32xf32>
    %398 = math.exp %397 : vector<2x32xf32>
    %cst_172 = arith.constant 1.000000e+00 : f32
    %399 = vector.broadcast %cst_172 : f32 to vector<2x32xf32>
    %400 = arith.addf %399, %398 : vector<2x32xf32>
    %401 = arith.divf %399, %400 : vector<2x32xf32>
    %402 = arith.index_cast %380 : i32 to index
    %c0_173 = arith.constant 0 : index
    %403 = vector.load %arg13[%402, %c0_173] : memref<16x32xf32, #tpu.memory_space<vmem>>, vector<2x32xf32>
    %404 = arith.mulf %393, %385 : vector<2x32xf32>
    %405 = arith.addf %403, %404 : vector<2x32xf32>
    %406 = math.tanh %405 : vector<2x32xf32>
    %cst_174 = arith.constant 1.000000e+00 : f32
    %407 = vector.broadcast %cst_174 : f32 to vector<2x32xf32>
    %408 = arith.subf %407, %401 : vector<2x32xf32>
    %409 = arith.mulf %408, %406 : vector<2x32xf32>
    %410 = arith.mulf %401, %376 : vector<2x32xf32>
    %411 = arith.addf %409, %410 : vector<2x32xf32>
    %412 = arith.index_cast %380 : i32 to index
    %c0_175 = arith.constant 0 : index
    %413 = vector.load %arg10[%412, %c0_175] : memref<16x32xf32, #tpu.memory_space<vmem>>, vector<2x32xf32>
    tpu.vector_store %arg10[%412, %c0_175], %411 {strides = array<i32>} : memref<16x32xf32, #tpu.memory_space<vmem>>, vector<2x32xf32>,
    %c2_i32_176 = arith.constant 2 : i32
    %c2_i32_177 = arith.constant 2 : i32
    %414 = arith.muli %c2_i32_176, %c2_i32_177 : i32
    %415 = tpu.assume_multiple %414, 2 : i32
    %cst_178 = arith.constant dense<0.000000e+00> : vector<2x32xf32>
    %416 = tpu.matmul %411, %336, %cst_178 {dimension_numbers = #tpu.dot_dimension_numbers<[1], [0], [0], [1], [0, 0, 1, 1], [], []>} : vector<2x32xf32>, vector<32x32xf32>, vector<2x32xf32> -> vector<2x32xf32>
    %cst_179 = arith.constant dense<0.000000e+00> : vector<2x32xf32>
    %417 = tpu.matmul %411, %338, %cst_179 {dimension_numbers = #tpu.dot_dimension_numbers<[1], [0], [0], [1], [0, 0, 1, 1], [], []>} : vector<2x32xf32>, vector<32x32xf32>, vector<2x32xf32> -> vector<2x32xf32>
    %cst_180 = arith.constant dense<0.000000e+00> : vector<2x32xf32>
    %418 = tpu.matmul %411, %340, %cst_180 {dimension_numbers = #tpu.dot_dimension_numbers<[1], [0], [0], [1], [0, 0, 1, 1], [], []>} : vector<2x32xf32>, vector<32x32xf32>, vector<2x32xf32> -> vector<2x32xf32>
    %419 = vector.broadcast %342 : vector<1x32xf32> to vector<2x32xf32>
    %420 = arith.addf %418, %419 : vector<2x32xf32>
    %421 = arith.index_cast %415 : i32 to index
    %c0_181 = arith.constant 0 : index
    %422 = vector.load %arg11[%421, %c0_181] : memref<16x32xf32, #tpu.memory_space<vmem>>, vector<2x32xf32>
    %423 = arith.addf %422, %416 : vector<2x32xf32>
    %424 = arith.negf %423 : vector<2x32xf32>
    %425 = math.exp %424 : vector<2x32xf32>
    %cst_182 = arith.constant 1.000000e+00 : f32
    %426 = vector.broadcast %cst_182 : f32 to vector<2x32xf32>
    %427 = arith.addf %426, %425 : vector<2x32xf32>
    %428 = arith.divf %426, %427 : vector<2x32xf32>
    %429 = arith.index_cast %415 : i32 to index
    %c0_183 = arith.constant 0 : index
    %430 = vector.load %arg12[%429, %c0_183] : memref<16x32xf32, #tpu.memory_space<vmem>>, vector<2x32xf32>
    %431 = arith.addf %430, %417 : vector<2x32xf32>
    %432 = arith.negf %431 : vector<2x32xf32>
    %433 = math.exp %432 : vector<2x32xf32>
    %cst_184 = arith.constant 1.000000e+00 : f32
    %434 = vector.broadcast %cst_184 : f32 to vector<2x32xf32>
    %435 = arith.addf %434, %433 : vector<2x32xf32>
    %436 = arith.divf %434, %435 : vector<2x32xf32>
    %437 = arith.index_cast %415 : i32 to index
    %c0_185 = arith.constant 0 : index
    %438 = vector.load %arg13[%437, %c0_185] : memref<16x32xf32, #tpu.memory_space<vmem>>, vector<2x32xf32>
    %439 = arith.mulf %428, %420 : vector<2x32xf32>
    %440 = arith.addf %438, %439 : vector<2x32xf32>
    %441 = math.tanh %440 : vector<2x32xf32>
    %cst_186 = arith.constant 1.000000e+00 : f32
    %442 = vector.broadcast %cst_186 : f32 to vector<2x32xf32>
    %443 = arith.subf %442, %436 : vector<2x32xf32>
    %444 = arith.mulf %443, %441 : vector<2x32xf32>
    %445 = arith.mulf %436, %411 : vector<2x32xf32>
    %446 = arith.addf %444, %445 : vector<2x32xf32>
    %447 = arith.index_cast %415 : i32 to index
    %c0_187 = arith.constant 0 : index
    %448 = vector.load %arg10[%447, %c0_187] : memref<16x32xf32, #tpu.memory_space<vmem>>, vector<2x32xf32>
    tpu.vector_store %arg10[%447, %c0_187], %446 {strides = array<i32>} : memref<16x32xf32, #tpu.memory_space<vmem>>, vector<2x32xf32>,
    %c3_i32_188 = arith.constant 3 : i32
    %c2_i32_189 = arith.constant 2 : i32
    %449 = arith.muli %c3_i32_188, %c2_i32_189 : i32
    %450 = tpu.assume_multiple %449, 2 : i32
    %cst_190 = arith.constant dense<0.000000e+00> : vector<2x32xf32>
    %451 = tpu.matmul %446, %336, %cst_190 {dimension_numbers = #tpu.dot_dimension_numbers<[1], [0], [0], [1], [0, 0, 1, 1], [], []>} : vector<2x32xf32>, vector<32x32xf32>, vector<2x32xf32> -> vector<2x32xf32>
    %cst_191 = arith.constant dense<0.000000e+00> : vector<2x32xf32>
    %452 = tpu.matmul %446, %338, %cst_191 {dimension_numbers = #tpu.dot_dimension_numbers<[1], [0], [0], [1], [0, 0, 1, 1], [], []>} : vector<2x32xf32>, vector<32x32xf32>, vector<2x32xf32> -> vector<2x32xf32>
    %cst_192 = arith.constant dense<0.000000e+00> : vector<2x32xf32>
    %453 = tpu.matmul %446, %340, %cst_192 {dimension_numbers = #tpu.dot_dimension_numbers<[1], [0], [0], [1], [0, 0, 1, 1], [], []>} : vector<2x32xf32>, vector<32x32xf32>, vector<2x32xf32> -> vector<2x32xf32>
    %454 = vector.broadcast %342 : vector<1x32xf32> to vector<2x32xf32>
    %455 = arith.addf %453, %454 : vector<2x32xf32>
    %456 = arith.index_cast %450 : i32 to index
    %c0_193 = arith.constant 0 : index
    %457 = vector.load %arg11[%456, %c0_193] : memref<16x32xf32, #tpu.memory_space<vmem>>, vector<2x32xf32>
    %458 = arith.addf %457, %451 : vector<2x32xf32>
    %459 = arith.negf %458 : vector<2x32xf32>
    %460 = math.exp %459 : vector<2x32xf32>
    %cst_194 = arith.constant 1.000000e+00 : f32
    %461 = vector.broadcast %cst_194 : f32 to vector<2x32xf32>
    %462 = arith.addf %461, %460 : vector<2x32xf32>
    %463 = arith.divf %461, %462 : vector<2x32xf32>
    %464 = arith.index_cast %450 : i32 to index
    %c0_195 = arith.constant 0 : index
    %465 = vector.load %arg12[%464, %c0_195] : memref<16x32xf32, #tpu.memory_space<vmem>>, vector<2x32xf32>
    %466 = arith.addf %465, %452 : vector<2x32xf32>
    %467 = arith.negf %466 : vector<2x32xf32>
    %468 = math.exp %467 : vector<2x32xf32>
    %cst_196 = arith.constant 1.000000e+00 : f32
    %469 = vector.broadcast %cst_196 : f32 to vector<2x32xf32>
    %470 = arith.addf %469, %468 : vector<2x32xf32>
    %471 = arith.divf %469, %470 : vector<2x32xf32>
    %472 = arith.index_cast %450 : i32 to index
    %c0_197 = arith.constant 0 : index
    %473 = vector.load %arg13[%472, %c0_197] : memref<16x32xf32, #tpu.memory_space<vmem>>, vector<2x32xf32>
    %474 = arith.mulf %463, %455 : vector<2x32xf32>
    %475 = arith.addf %473, %474 : vector<2x32xf32>
    %476 = math.tanh %475 : vector<2x32xf32>
    %cst_198 = arith.constant 1.000000e+00 : f32
    %477 = vector.broadcast %cst_198 : f32 to vector<2x32xf32>
    %478 = arith.subf %477, %471 : vector<2x32xf32>
    %479 = arith.mulf %478, %476 : vector<2x32xf32>
    %480 = arith.mulf %471, %446 : vector<2x32xf32>
    %481 = arith.addf %479, %480 : vector<2x32xf32>
    %482 = arith.index_cast %450 : i32 to index
    %c0_199 = arith.constant 0 : index
    %483 = vector.load %arg10[%482, %c0_199] : memref<16x32xf32, #tpu.memory_space<vmem>>, vector<2x32xf32>
    tpu.vector_store %arg10[%482, %c0_199], %481 {strides = array<i32>} : memref<16x32xf32, #tpu.memory_space<vmem>>, vector<2x32xf32>,
    %c4_i32_200 = arith.constant 4 : i32
    %c2_i32_201 = arith.constant 2 : i32
    %484 = arith.muli %c4_i32_200, %c2_i32_201 : i32
    %485 = tpu.assume_multiple %484, 2 : i32
    %cst_202 = arith.constant dense<0.000000e+00> : vector<2x32xf32>
    %486 = tpu.matmul %481, %336, %cst_202 {dimension_numbers = #tpu.dot_dimension_numbers<[1], [0], [0], [1], [0, 0, 1, 1], [], []>} : vector<2x32xf32>, vector<32x32xf32>, vector<2x32xf32> -> vector<2x32xf32>
    %cst_203 = arith.constant dense<0.000000e+00> : vector<2x32xf32>
    %487 = tpu.matmul %481, %338, %cst_203 {dimension_numbers = #tpu.dot_dimension_numbers<[1], [0], [0], [1], [0, 0, 1, 1], [], []>} : vector<2x32xf32>, vector<32x32xf32>, vector<2x32xf32> -> vector<2x32xf32>
    %cst_204 = arith.constant dense<0.000000e+00> : vector<2x32xf32>
    %488 = tpu.matmul %481, %340, %cst_204 {dimension_numbers = #tpu.dot_dimension_numbers<[1], [0], [0], [1], [0, 0, 1, 1], [], []>} : vector<2x32xf32>, vector<32x32xf32>, vector<2x32xf32> -> vector<2x32xf32>
    %489 = vector.broadcast %342 : vector<1x32xf32> to vector<2x32xf32>
    %490 = arith.addf %488, %489 : vector<2x32xf32>
    %491 = arith.index_cast %485 : i32 to index
    %c0_205 = arith.constant 0 : index
    %492 = vector.load %arg11[%491, %c0_205] : memref<16x32xf32, #tpu.memory_space<vmem>>, vector<2x32xf32>
    %493 = arith.addf %492, %486 : vector<2x32xf32>
    %494 = arith.negf %493 : vector<2x32xf32>
    %495 = math.exp %494 : vector<2x32xf32>
    %cst_206 = arith.constant 1.000000e+00 : f32
    %496 = vector.broadcast %cst_206 : f32 to vector<2x32xf32>
    %497 = arith.addf %496, %495 : vector<2x32xf32>
    %498 = arith.divf %496, %497 : vector<2x32xf32>
    %499 = arith.index_cast %485 : i32 to index
    %c0_207 = arith.constant 0 : index
    %500 = vector.load %arg12[%499, %c0_207] : memref<16x32xf32, #tpu.memory_space<vmem>>, vector<2x32xf32>
    %501 = arith.addf %500, %487 : vector<2x32xf32>
    %502 = arith.negf %501 : vector<2x32xf32>
    %503 = math.exp %502 : vector<2x32xf32>
    %cst_208 = arith.constant 1.000000e+00 : f32
    %504 = vector.broadcast %cst_208 : f32 to vector<2x32xf32>
    %505 = arith.addf %504, %503 : vector<2x32xf32>
    %506 = arith.divf %504, %505 : vector<2x32xf32>
    %507 = arith.index_cast %485 : i32 to index
    %c0_209 = arith.constant 0 : index
    %508 = vector.load %arg13[%507, %c0_209] : memref<16x32xf32, #tpu.memory_space<vmem>>, vector<2x32xf32>
    %509 = arith.mulf %498, %490 : vector<2x32xf32>
    %510 = arith.addf %508, %509 : vector<2x32xf32>
    %511 = math.tanh %510 : vector<2x32xf32>
    %cst_210 = arith.constant 1.000000e+00 : f32
    %512 = vector.broadcast %cst_210 : f32 to vector<2x32xf32>
    %513 = arith.subf %512, %506 : vector<2x32xf32>
    %514 = arith.mulf %513, %511 : vector<2x32xf32>
    %515 = arith.mulf %506, %481 : vector<2x32xf32>
    %516 = arith.addf %514, %515 : vector<2x32xf32>
    %517 = arith.index_cast %485 : i32 to index
    %c0_211 = arith.constant 0 : index
    %518 = vector.load %arg10[%517, %c0_211] : memref<16x32xf32, #tpu.memory_space<vmem>>, vector<2x32xf32>
    tpu.vector_store %arg10[%517, %c0_211], %516 {strides = array<i32>} : memref<16x32xf32, #tpu.memory_space<vmem>>, vector<2x32xf32>,
    %c5_i32_212 = arith.constant 5 : i32
    %c2_i32_213 = arith.constant 2 : i32
    %519 = arith.muli %c5_i32_212, %c2_i32_213 : i32
    %520 = tpu.assume_multiple %519, 2 : i32
    %cst_214 = arith.constant dense<0.000000e+00> : vector<2x32xf32>
    %521 = tpu.matmul %516, %336, %cst_214 {dimension_numbers = #tpu.dot_dimension_numbers<[1], [0], [0], [1], [0, 0, 1, 1], [], []>} : vector<2x32xf32>, vector<32x32xf32>, vector<2x32xf32> -> vector<2x32xf32>
    %cst_215 = arith.constant dense<0.000000e+00> : vector<2x32xf32>
    %522 = tpu.matmul %516, %338, %cst_215 {dimension_numbers = #tpu.dot_dimension_numbers<[1], [0], [0], [1], [0, 0, 1, 1], [], []>} : vector<2x32xf32>, vector<32x32xf32>, vector<2x32xf32> -> vector<2x32xf32>
    %cst_216 = arith.constant dense<0.000000e+00> : vector<2x32xf32>
    %523 = tpu.matmul %516, %340, %cst_216 {dimension_numbers = #tpu.dot_dimension_numbers<[1], [0], [0], [1], [0, 0, 1, 1], [], []>} : vector<2x32xf32>, vector<32x32xf32>, vector<2x32xf32> -> vector<2x32xf32>
    %524 = vector.broadcast %342 : vector<1x32xf32> to vector<2x32xf32>
    %525 = arith.addf %523, %524 : vector<2x32xf32>
    %526 = arith.index_cast %520 : i32 to index
    %c0_217 = arith.constant 0 : index
    %527 = vector.load %arg11[%526, %c0_217] : memref<16x32xf32, #tpu.memory_space<vmem>>, vector<2x32xf32>
    %528 = arith.addf %527, %521 : vector<2x32xf32>
    %529 = arith.negf %528 : vector<2x32xf32>
    %530 = math.exp %529 : vector<2x32xf32>
    %cst_218 = arith.constant 1.000000e+00 : f32
    %531 = vector.broadcast %cst_218 : f32 to vector<2x32xf32>
    %532 = arith.addf %531, %530 : vector<2x32xf32>
    %533 = arith.divf %531, %532 : vector<2x32xf32>
    %534 = arith.index_cast %520 : i32 to index
    %c0_219 = arith.constant 0 : index
    %535 = vector.load %arg12[%534, %c0_219] : memref<16x32xf32, #tpu.memory_space<vmem>>, vector<2x32xf32>
    %536 = arith.addf %535, %522 : vector<2x32xf32>
    %537 = arith.negf %536 : vector<2x32xf32>
    %538 = math.exp %537 : vector<2x32xf32>
    %cst_220 = arith.constant 1.000000e+00 : f32
    %539 = vector.broadcast %cst_220 : f32 to vector<2x32xf32>
    %540 = arith.addf %539, %538 : vector<2x32xf32>
    %541 = arith.divf %539, %540 : vector<2x32xf32>
    %542 = arith.index_cast %520 : i32 to index
    %c0_221 = arith.constant 0 : index
    %543 = vector.load %arg13[%542, %c0_221] : memref<16x32xf32, #tpu.memory_space<vmem>>, vector<2x32xf32>
    %544 = arith.mulf %533, %525 : vector<2x32xf32>
    %545 = arith.addf %543, %544 : vector<2x32xf32>
    %546 = math.tanh %545 : vector<2x32xf32>
    %cst_222 = arith.constant 1.000000e+00 : f32
    %547 = vector.broadcast %cst_222 : f32 to vector<2x32xf32>
    %548 = arith.subf %547, %541 : vector<2x32xf32>
    %549 = arith.mulf %548, %546 : vector<2x32xf32>
    %550 = arith.mulf %541, %516 : vector<2x32xf32>
    %551 = arith.addf %549, %550 : vector<2x32xf32>
    %552 = arith.index_cast %520 : i32 to index
    %c0_223 = arith.constant 0 : index
    %553 = vector.load %arg10[%552, %c0_223] : memref<16x32xf32, #tpu.memory_space<vmem>>, vector<2x32xf32>
    tpu.vector_store %arg10[%552, %c0_223], %551 {strides = array<i32>} : memref<16x32xf32, #tpu.memory_space<vmem>>, vector<2x32xf32>,
    %c6_i32_224 = arith.constant 6 : i32
    %c2_i32_225 = arith.constant 2 : i32
    %554 = arith.muli %c6_i32_224, %c2_i32_225 : i32
    %555 = tpu.assume_multiple %554, 2 : i32
    %cst_226 = arith.constant dense<0.000000e+00> : vector<2x32xf32>
    %556 = tpu.matmul %551, %336, %cst_226 {dimension_numbers = #tpu.dot_dimension_numbers<[1], [0], [0], [1], [0, 0, 1, 1], [], []>} : vector<2x32xf32>, vector<32x32xf32>, vector<2x32xf32> -> vector<2x32xf32>
    %cst_227 = arith.constant dense<0.000000e+00> : vector<2x32xf32>
    %557 = tpu.matmul %551, %338, %cst_227 {dimension_numbers = #tpu.dot_dimension_numbers<[1], [0], [0], [1], [0, 0, 1, 1], [], []>} : vector<2x32xf32>, vector<32x32xf32>, vector<2x32xf32> -> vector<2x32xf32>
    %cst_228 = arith.constant dense<0.000000e+00> : vector<2x32xf32>
    %558 = tpu.matmul %551, %340, %cst_228 {dimension_numbers = #tpu.dot_dimension_numbers<[1], [0], [0], [1], [0, 0, 1, 1], [], []>} : vector<2x32xf32>, vector<32x32xf32>, vector<2x32xf32> -> vector<2x32xf32>
    %559 = vector.broadcast %342 : vector<1x32xf32> to vector<2x32xf32>
    %560 = arith.addf %558, %559 : vector<2x32xf32>
    %561 = arith.index_cast %555 : i32 to index
    %c0_229 = arith.constant 0 : index
    %562 = vector.load %arg11[%561, %c0_229] : memref<16x32xf32, #tpu.memory_space<vmem>>, vector<2x32xf32>
    %563 = arith.addf %562, %556 : vector<2x32xf32>
    %564 = arith.negf %563 : vector<2x32xf32>
    %565 = math.exp %564 : vector<2x32xf32>
    %cst_230 = arith.constant 1.000000e+00 : f32
    %566 = vector.broadcast %cst_230 : f32 to vector<2x32xf32>
    %567 = arith.addf %566, %565 : vector<2x32xf32>
    %568 = arith.divf %566, %567 : vector<2x32xf32>
    %569 = arith.index_cast %555 : i32 to index
    %c0_231 = arith.constant 0 : index
    %570 = vector.load %arg12[%569, %c0_231] : memref<16x32xf32, #tpu.memory_space<vmem>>, vector<2x32xf32>
    %571 = arith.addf %570, %557 : vector<2x32xf32>
    %572 = arith.negf %571 : vector<2x32xf32>
    %573 = math.exp %572 : vector<2x32xf32>
    %cst_232 = arith.constant 1.000000e+00 : f32
    %574 = vector.broadcast %cst_232 : f32 to vector<2x32xf32>
    %575 = arith.addf %574, %573 : vector<2x32xf32>
    %576 = arith.divf %574, %575 : vector<2x32xf32>
    %577 = arith.index_cast %555 : i32 to index
    %c0_233 = arith.constant 0 : index
    %578 = vector.load %arg13[%577, %c0_233] : memref<16x32xf32, #tpu.memory_space<vmem>>, vector<2x32xf32>
    %579 = arith.mulf %568, %560 : vector<2x32xf32>
    %580 = arith.addf %578, %579 : vector<2x32xf32>
    %581 = math.tanh %580 : vector<2x32xf32>
    %cst_234 = arith.constant 1.000000e+00 : f32
    %582 = vector.broadcast %cst_234 : f32 to vector<2x32xf32>
    %583 = arith.subf %582, %576 : vector<2x32xf32>
    %584 = arith.mulf %583, %581 : vector<2x32xf32>
    %585 = arith.mulf %576, %551 : vector<2x32xf32>
    %586 = arith.addf %584, %585 : vector<2x32xf32>
    %587 = arith.index_cast %555 : i32 to index
    %c0_235 = arith.constant 0 : index
    %588 = vector.load %arg10[%587, %c0_235] : memref<16x32xf32, #tpu.memory_space<vmem>>, vector<2x32xf32>
    tpu.vector_store %arg10[%587, %c0_235], %586 {strides = array<i32>} : memref<16x32xf32, #tpu.memory_space<vmem>>, vector<2x32xf32>,
    %c7_i32_236 = arith.constant 7 : i32
    %c2_i32_237 = arith.constant 2 : i32
    %589 = arith.muli %c7_i32_236, %c2_i32_237 : i32
    %590 = tpu.assume_multiple %589, 2 : i32
    %cst_238 = arith.constant dense<0.000000e+00> : vector<2x32xf32>
    %591 = tpu.matmul %586, %336, %cst_238 {dimension_numbers = #tpu.dot_dimension_numbers<[1], [0], [0], [1], [0, 0, 1, 1], [], []>} : vector<2x32xf32>, vector<32x32xf32>, vector<2x32xf32> -> vector<2x32xf32>
    %cst_239 = arith.constant dense<0.000000e+00> : vector<2x32xf32>
    %592 = tpu.matmul %586, %338, %cst_239 {dimension_numbers = #tpu.dot_dimension_numbers<[1], [0], [0], [1], [0, 0, 1, 1], [], []>} : vector<2x32xf32>, vector<32x32xf32>, vector<2x32xf32> -> vector<2x32xf32>
    %cst_240 = arith.constant dense<0.000000e+00> : vector<2x32xf32>
    %593 = tpu.matmul %586, %340, %cst_240 {dimension_numbers = #tpu.dot_dimension_numbers<[1], [0], [0], [1], [0, 0, 1, 1], [], []>} : vector<2x32xf32>, vector<32x32xf32>, vector<2x32xf32> -> vector<2x32xf32>
    %594 = vector.broadcast %342 : vector<1x32xf32> to vector<2x32xf32>
    %595 = arith.addf %593, %594 : vector<2x32xf32>
    %596 = arith.index_cast %590 : i32 to index
    %c0_241 = arith.constant 0 : index
    %597 = vector.load %arg11[%596, %c0_241] : memref<16x32xf32, #tpu.memory_space<vmem>>, vector<2x32xf32>
    %598 = arith.addf %597, %591 : vector<2x32xf32>
    %599 = arith.negf %598 : vector<2x32xf32>
    %600 = math.exp %599 : vector<2x32xf32>
    %cst_242 = arith.constant 1.000000e+00 : f32
    %601 = vector.broadcast %cst_242 : f32 to vector<2x32xf32>
    %602 = arith.addf %601, %600 : vector<2x32xf32>
    %603 = arith.divf %601, %602 : vector<2x32xf32>
    %604 = arith.index_cast %590 : i32 to index
    %c0_243 = arith.constant 0 : index
    %605 = vector.load %arg12[%604, %c0_243] : memref<16x32xf32, #tpu.memory_space<vmem>>, vector<2x32xf32>
    %606 = arith.addf %605, %592 : vector<2x32xf32>
    %607 = arith.negf %606 : vector<2x32xf32>
    %608 = math.exp %607 : vector<2x32xf32>
    %cst_244 = arith.constant 1.000000e+00 : f32
    %609 = vector.broadcast %cst_244 : f32 to vector<2x32xf32>
    %610 = arith.addf %609, %608 : vector<2x32xf32>
    %611 = arith.divf %609, %610 : vector<2x32xf32>
    %612 = arith.index_cast %590 : i32 to index
    %c0_245 = arith.constant 0 : index
    %613 = vector.load %arg13[%612, %c0_245] : memref<16x32xf32, #tpu.memory_space<vmem>>, vector<2x32xf32>
    %614 = arith.mulf %603, %595 : vector<2x32xf32>
    %615 = arith.addf %613, %614 : vector<2x32xf32>
    %616 = math.tanh %615 : vector<2x32xf32>
    %cst_246 = arith.constant 1.000000e+00 : f32
    %617 = vector.broadcast %cst_246 : f32 to vector<2x32xf32>
    %618 = arith.subf %617, %611 : vector<2x32xf32>
    %619 = arith.mulf %618, %616 : vector<2x32xf32>
    %620 = arith.mulf %611, %586 : vector<2x32xf32>
    %621 = arith.addf %619, %620 : vector<2x32xf32>
    %622 = arith.index_cast %590 : i32 to index
    %c0_247 = arith.constant 0 : index
    %623 = vector.load %arg10[%622, %c0_247] : memref<16x32xf32, #tpu.memory_space<vmem>>, vector<2x32xf32>
    tpu.vector_store %arg10[%622, %c0_247], %621 {strides = array<i32>} : memref<16x32xf32, #tpu.memory_space<vmem>>, vector<2x32xf32>,
    %c8_i32_248 = arith.constant 8 : i32
    %c0_249 = arith.constant 0 : index
    %c0_250 = arith.constant 0 : index
    %624 = vector.load %arg10[%c0_249, %c0_250] : memref<16x32xf32, #tpu.memory_space<vmem>>, vector<16x32xf32>
    %c0_251 = arith.constant 0 : index
    %c0_252 = arith.constant 0 : index
    %625 = vector.load %arg7[%c0_251, %c0_252] : memref<32x128xf32, #tpu.memory_space<vmem>>, vector<32x128xf32>
    %cst_253 = arith.constant dense<0.000000e+00> : vector<16x128xf32>
    %626 = tpu.matmul %624, %625, %cst_253 {dimension_numbers = #tpu.dot_dimension_numbers<[1], [0], [0], [1], [0, 0, 1, 1], [], []>} : vector<16x32xf32>, vector<32x128xf32>, vector<16x128xf32> -> vector<16x128xf32>
    %c0_254 = arith.constant 0 : index
    %c0_255 = arith.constant 0 : index
    %627 = vector.load %arg8[%c0_254, %c0_255] : memref<1x128xf32, #tpu.memory_space<vmem>>, vector<1x128xf32>
    %628 = vector.broadcast %627 : vector<1x128xf32> to vector<16x128xf32>
    %629 = arith.addf %626, %628 : vector<16x128xf32>
    %c0_256 = arith.constant 0 : index
    %c0_257 = arith.constant 0 : index
    %630 = vector.load %arg9[%c0_256, %c0_257] : memref<16x128xf32, #tpu.memory_space<vmem>>, vector<16x128xf32>
    tpu.vector_store %arg9[%c0_256, %c0_257], %629 {strides = array<i32>} : memref<16x128xf32, #tpu.memory_space<vmem>>, vector<16x128xf32>,
    return
  }
}

</mosaic_0001>

<llo_original>
// kernel: tpu_custom_call.1
$region0: #{tpu_custom_call.1}
  #allocation0 [shape = 'u32[]', space=smem, size = 0x4, offset = 0x4, fixed_abs, tag = 'smem constant byte address 0x4 - core index']
  #allocation1 [shape = 'u32[144,128]{1,0:T(1,128)}', space=vmem, size = 0x12000, scoped, tag = 'internal scratch']
  #allocation2 [shape = 'f32[16,32]{1,0:T(8,128)}', space=vmem, size = 0x2000, scoped, tag = 'scratch operand']
  #allocation3 [shape = 'f32[16,32]{1,0:T(8,128)}', space=vmem, size = 0x2000, scoped, tag = 'scratch operand']
  #allocation4 [shape = 'f32[16,32]{1,0:T(8,128)}', space=vmem, size = 0x2000, scoped, tag = 'scratch operand']
  #allocation5 [shape = 'f32[16,32]{1,0:T(8,128)}', space=vmem, size = 0x2000, scoped, tag = 'scratch operand']
  %s0 = inlined_call_operand.hbm [shape: f32[16,12], index: 0, kind: input, shape index: {}]
  %s1 = inlined_call_operand.hbm [shape: f32[3,12,32], index: 1, kind: input, shape index: {}]
  %s2 = inlined_call_operand.hbm [shape: f32[3,32,32], index: 2, kind: input, shape index: {}]
  %s3 = inlined_call_operand.vmem [shape: f32[4,32], index: 3, kind: input, shape index: {}]
  %s4 = inlined_call_operand.hbm [shape: f32[3,32,32], index: 4, kind: input, shape index: {}]
  %s5 = inlined_call_operand.hbm [shape: f32[3,32,32], index: 5, kind: input, shape index: {}]
  %s6 = inlined_call_operand.vmem [shape: f32[4,32], index: 6, kind: input, shape index: {}]
  %s7 = inlined_call_operand.hbm [shape: f32[32,128], index: 7, kind: input, shape index: {}]
  %s8 = inlined_call_operand.vmem [shape: f32[1,128], index: 8, kind: input, shape index: {}]
  %s9 = inlined_call_operand.hbm [shape: f32[16,128], index: 9, kind: output, shape index: {}]
  %s10 = sld [smem:[#allocation0]]
  $region70: #{tpu_custom_call.1} parent=0
    _
  %s12 = ssub.s32 1, %s10
  %s13 = scalar_select 0, %s12, %s10
  $region1: #{tpu_custom_call.1} parent=0
    #allocation6 [shape = 'u8[8192]{0}', space=vmem, size = 0x2000, scoped, tag = 'input window, operand 0, single buffered']
    #allocation7 [shape = 's32[1]{0}', space=sflag, size = 0x4, scoped, tag = 'scoped memory for tpu_custom_call.1']
    #allocation8 [shape = 's32[1]{0}', space=sflag, size = 0x4, scoped, tag = 'scoped memory for tpu_custom_call.1']
    #allocation9 [shape = 'u8[24576]{0}', space=vmem, size = 0x6000, scoped, tag = 'input window, operand 1, single buffered']
    #allocation10 [shape = 's32[1]{0}', space=sflag, size = 0x4, scoped, tag = 'scoped memory for tpu_custom_call.1']
    #allocation11 [shape = 'u8[49152]{0}', space=vmem, size = 0xc000, scoped, tag = 'input window, operand 2, single buffered']
    #allocation12 [shape = 'u8[49152]{0}', space=vmem, size = 0xc000, scoped, tag = 'input window, operand 4, single buffered']
    #allocation13 [shape = 's32[1]{0}', space=sflag, size = 0x4, scoped, tag = 'scoped memory for tpu_custom_call.1']
    #allocation14 [shape = 'u8[49152]{0}', space=vmem, size = 0xc000, scoped, tag = 'input window, operand 5, single buffered']
    #allocation15 [shape = 'u8[16384]{0}', space=vmem, size = 0x4000, scoped, tag = 'input window, operand 7, single buffered']
    #allocation16 [shape = 's32[1]{0}', space=sflag, size = 0x4, scoped, tag = 'scoped memory for tpu_custom_call.1']
    #allocation17 [shape = 'u8[8192]{0}', space=vmem, size = 0x2000, scoped, tag = 'output window, operand 0, single buffered']
    %14 = vsyncpa [#allocation7], 0
    %15 = vsyncpa [#allocation10], 0
    %16 = vsyncpa [#allocation13], 0
    %17 = vsyncpa [#allocation16], 0
    %18 = vsyncpa [#allocation8], 0
    // Predicated region
    $region2: #{tpu_custom_call.1} parent=1 // pred_check
      _
    $region3: #{tpu_custom_call.1} parent=1 // pred_check_branch
      %20 = sbr.rel (0) target = $region5
    $region4: #{tpu_custom_call.1} parent=1 // pred_region
      %s22 = ssub.s32 256, 256
      %23 = vsyncadd [#allocation7], %s22
      %s24 = sshll.u32 [#allocation6], 4
      %s25 = int_to_ptr.vmem [resolvable:$true] %s24
      %30 = dma.hbm_to_vmem [thread:$0]  %s0, 256, %s25, [#allocation7], 128, 128, 8
    $region5: #{tpu_custom_call.1} parent=1 // pred_fallthru
      _
    // Predicated region
    $region6: #{tpu_custom_call.1} parent=1 // pred_check
      _
    $region7: #{tpu_custom_call.1} parent=1 // pred_check_branch
      %32 = sbr.rel (0) target = $region9
    $region8: #{tpu_custom_call.1} parent=1 // pred_region
      %s34 = ssub.s32 768, 768
      %35 = vsyncadd [#allocation10], %s34
      %s36 = sshll.u32 [#allocation9], 4
      %s37 = int_to_ptr.vmem [resolvable:$true] %s36
      %42 = dma.hbm_to_vmem [thread:$0]  %s1, 768, %s37, [#allocation10], 128, 128, 8
    $region9: #{tpu_custom_call.1} parent=1 // pred_fallthru
      _
    // Predicated region
    $region10: #{tpu_custom_call.1} parent=1 // pred_check
      _
    $region11: #{tpu_custom_call.1} parent=1 // pred_check_branch
      %44 = sbr.rel (0) target = $region13
    $region12: #{tpu_custom_call.1} parent=1 // pred_region
      %s46 = ssub.s32 1536, 1536
      %47 = vsyncadd [#allocation10], %s46
      %s48 = sshll.u32 [#allocation11], 4
      %s49 = int_to_ptr.vmem [resolvable:$true] %s48
      %54 = dma.hbm_to_vmem [thread:$0]  %s2, 1536, %s49, [#allocation10], 128, 128, 8
    $region13: #{tpu_custom_call.1} parent=1 // pred_fallthru
      _
    // Predicated region
    $region14: #{tpu_custom_call.1} parent=1 // pred_check
      _
    $region15: #{tpu_custom_call.1} parent=1 // pred_check_branch
      %56 = sbr.rel (0) target = $region17
    $region16: #{tpu_custom_call.1} parent=1 // pred_region
      _
    $region17: #{tpu_custom_call.1} parent=1 // pred_fallthru
      _
    // Predicated region
    $region18: #{tpu_custom_call.1} parent=1 // pred_check
      _
    $region19: #{tpu_custom_call.1} parent=1 // pred_check_branch
      %58 = sbr.rel (0) target = $region21
    $region20: #{tpu_custom_call.1} parent=1 // pred_region
      %s60 = ssub.s32 1536, 1536
      %61 = vsyncadd [#allocation13], %s60
      %s62 = sshll.u32 [#allocation12], 4
      %s63 = int_to_ptr.vmem [resolvable:$true] %s62
      %68 = dma.hbm_to_vmem [thread:$0]  %s4, 1536, %s63, [#allocation13], 128, 128, 8
    $region21: #{tpu_custom_call.1} parent=1 // pred_fallthru
      _
    // Predicated region
    $region22: #{tpu_custom_call.1} parent=1 // pred_check
      _
    $region23: #{tpu_custom_call.1} parent=1 // pred_check_branch
      %70 = sbr.rel (0) target = $region25
    $region24: #{tpu_custom_call.1} parent=1 // pred_region
      %s72 = ssub.s32 1536, 1536
      %73 = vsyncadd [#allocation13], %s72
      %s74 = sshll.u32 [#allocation14], 4
      %s75 = int_to_ptr.vmem [resolvable:$true] %s74
      %80 = dma.hbm_to_vmem [thread:$0]  %s5, 1536, %s75, [#allocation13], 128, 128, 8
    $region25: #{tpu_custom_call.1} parent=1 // pred_fallthru
      _
    // Predicated region
    $region26: #{tpu_custom_call.1} parent=1 // pred_check
      _
    $region27: #{tpu_custom_call.1} parent=1 // pred_check_branch
      %82 = sbr.rel (0) target = $region29
    $region28: #{tpu_custom_call.1} parent=1 // pred_region
      _
    $region29: #{tpu_custom_call.1} parent=1 // pred_fallthru
      _
    // Predicated region
    $region30: #{tpu_custom_call.1} parent=1 // pred_check
      _
    $region31: #{tpu_custom_call.1} parent=1 // pred_check_branch
      %84 = sbr.rel (0) target = $region33
    $region32: #{tpu_custom_call.1} parent=1 // pred_region
      %s86 = ssub.s32 512, 512
      %87 = vsyncadd [#allocation16], %s86
      %s88 = sshll.u32 [#allocation15], 4
      %s89 = int_to_ptr.vmem [resolvable:$true] %s88
      %94 = dma.hbm_to_vmem [thread:$0]  %s7, 512, %s89, [#allocation16], 128, 128, 8
    $region33: #{tpu_custom_call.1} parent=1 // pred_fallthru
      _
    // Predicated region
    $region34: #{tpu_custom_call.1} parent=1 // pred_check
      _
    $region35: #{tpu_custom_call.1} parent=1 // pred_check_branch
      %96 = sbr.rel (0) target = $region37
    $region36: #{tpu_custom_call.1} parent=1 // pred_region
      _
    $region37: #{tpu_custom_call.1} parent=1 // pred_fallthru
      _
    // Predicated region
    $region38: #{tpu_custom_call.1} parent=1 // pred_check
      _
    $region39: #{tpu_custom_call.1} parent=1 // pred_check_branch
      %98 = sbr.rel (0) target = $region41
    $region40: #{tpu_custom_call.1} parent=1 // pred_region
      %99 = dma.done [#allocation7], 256
    $region41: #{tpu_custom_call.1} parent=1 // pred_fallthru
      _
    // Predicated region
    $region42: #{tpu_custom_call.1} parent=1 // pred_check
      _
    $region43: #{tpu_custom_call.1} parent=1 // pred_check_branch
      %101 = sbr.rel (0) target = $region45
    $region44: #{tpu_custom_call.1} parent=1 // pred_region
      %102 = dma.done [#allocation10], 768
    $region45: #{tpu_custom_call.1} parent=1 // pred_fallthru
      _
    // Predicated region
    $region46: #{tpu_custom_call.1} parent=1 // pred_check
      _
    $region47: #{tpu_custom_call.1} parent=1 // pred_check_branch
      %104 = sbr.rel (0) target = $region49
    $region48: #{tpu_custom_call.1} parent=1 // pred_region
      %105 = dma.done [#allocation10], 1536
    $region49: #{tpu_custom_call.1} parent=1 // pred_fallthru
      _
    // Predicated region
    $region50: #{tpu_custom_call.1} parent=1 // pred_check
      _
    $region51: #{tpu_custom_call.1} parent=1 // pred_check_branch
      %107 = sbr.rel (0) target = $region53
    $region52: #{tpu_custom_call.1} parent=1 // pred_region
      %108 = dma.done [#allocation13], 1536
    $region53: #{tpu_custom_call.1} parent=1 // pred_fallthru
      _
    // Predicated region
    $region54: #{tpu_custom_call.1} parent=1 // pred_check
      _
    $region55: #{tpu_custom_call.1} parent=1 // pred_check_branch
      %110 = sbr.rel (0) target = $region57
    $region56: #{tpu_custom_call.1} parent=1 // pred_region
      %111 = dma.done [#allocation13], 1536
    $region57: #{tpu_custom_call.1} parent=1 // pred_fallthru
      _
    // Predicated region
    $region58: #{tpu_custom_call.1} parent=1 // pred_check
      _
    $region59: #{tpu_custom_call.1} parent=1 // pred_check_branch
      %113 = sbr.rel (0) target = $region61
    $region60: #{tpu_custom_call.1} parent=1 // pred_region
      %114 = dma.done [#allocation16], 512
    $region61: #{tpu_custom_call.1} parent=1 // pred_fallthru
      _
    %v115 = vld [vmem:[#allocation6] sm:$0xff]
    %v116 = vld [vmem:[#allocation6 + $0x8] sm:$0xff]
    %v117 = vld [vmem:[%s3] sm:$0xf]
    %v118 = vld [vmem:[#allocation9] sm:$0xff]
    %v119 = vld [vmem:[#allocation9 + $0x8] sm:$0xf]
    %v120 = vlaneseq
    %v121 = vshrl.u32 %v120, 7
    %v122 = vsub.s32 0, %v121
    %v123 = vrot.slane %v117, %v122
    %vm124 = vcmask 97280
    %v126 = vsel %vm124, %v115, 0
    %v129 = vsel %vm124, %v116, 0
    %vm131 = vcmask 1043456
    %v133 = vsel %vm131, %v119, 0
    %135 = vmatprep.subr.mxu0 0.0
    %136 = vmatpush1.msra.mxu0 0.0
    %137 = vmatprep.subr.mxu0 0.0
    %138 = vmatpush1.msra.mxu0 0.0
    %139 = vmatprep.subr.mxu0 0.0
    %140 = vmatpush1.msra.mxu0 0.0
    %141 = vmatprep.subr.mxu0 0.0
    %142 = vmatpush1.msra.mxu0 0.0
    %143 = vmatprep.subr.mxu0 0.0
    %144 = vmatpush1.msra.mxu0 0.0
    %145 = vmatprep.subr.mxu0 0.0
    %146 = vmatpush1.msra.mxu0 0.0
    %147 = vmatprep.subr.mxu0 0.0
    %148 = vmatpush1.msra.mxu0 0.0
    %149 = vmatprep.subr.mxu0 0.0
    %150 = vmatpush1.msra.mxu0 0.0
    %151 = vmatprep.subr.mxu0 0.0
    %152 = vmatpush1.msra.mxu0 0.0
    %153 = vmatprep.subr.mxu0 0.0
    %154 = vmatpush1.msra.mxu0 0.0
    %155 = vmatprep.subr.mxu0 0.0
    %156 = vmatpush1.msra.mxu0 0.0
    %157 = vmatprep.subr.mxu0 0.0
    %158 = vmatpush1.msra.mxu0 0.0
    %159 = vmatprep.subr.mxu0 0.0
    %160 = vmatpush1.msra.mxu0 0.0
    %161 = vmatprep.subr.mxu0 0.0
    %162 = vmatpush1.msra.mxu0 0.0
    %163 = vmatprep.subr.mxu0 0.0
    %164 = vmatpush1.msra.mxu0 %v133
    %165 = vmatprep.subr.mxu0 0.0
    %166 = vmatpush1.msra.mxu0 %v118
    %167 = vmatprep.subr.mxu0 0.0
    %168 = vmatpush2.msra.mxu0 0.0
    %169 = vmatprep.subr.mxu0 0.0
    %170 = vmatpush2.msra.mxu0 0.0
    %171 = vmatprep.subr.mxu0 0.0
    %172 = vmatpush2.msra.mxu0 0.0
    %173 = vmatprep.subr.mxu0 0.0
    %174 = vmatpush2.msra.mxu0 0.0
    %175 = vmatprep.subr.mxu0 0.0
    %176 = vmatpush2.msra.mxu0 0.0
    %177 = vmatprep.subr.mxu0 0.0
    %178 = vmatpush2.msra.mxu0 0.0
    %179 = vmatprep.subr.mxu0 0.0
    %180 = vmatpush2.msra.mxu0 0.0
    %181 = vmatprep.subr.mxu0 0.0
    %182 = vmatpush2.msra.mxu0 0.0
    %183 = vmatprep.subr.mxu0 0.0
    %184 = vmatpush2.msra.mxu0 0.0
    %185 = vmatprep.subr.mxu0 0.0
    %186 = vmatpush2.msra.mxu0 0.0
    %187 = vmatprep.subr.mxu0 0.0
    %188 = vmatpush2.msra.mxu0 0.0
    %189 = vmatprep.subr.mxu0 0.0
    %190 = vmatpush2.msra.mxu0 0.0
    %191 = vmatprep.subr.mxu0 0.0
    %192 = vmatpush2.msra.mxu0 0.0
    %193 = vmatprep.subr.mxu0 0.0
    %194 = vmatpush2.msra.mxu0 0.0
    %195 = vmatprep.subr.mxu0 0.0
    %196 = vmatpush2.msra.mxu0 0.0
    %197 = vmatprep.subr.mxu0 0.0
    %198 = vmatpush2.msra.mxu0 0.0
    %199 = vmatprep.mubr.f32.mxu0 0.0
    %200 = vmatmul.mubr.f32.gmra.mxu0 %v126
    %v201 = vpop.f32.mrf.mxu0
    %v202 = vadd.f32 %v123, %v201
    %v203 = vpop.f32.mrf.mxu0
    %204 = vmatprep.mubr.f32.mxu0 0.0
    %205 = vmatmul.mubr.f32.gmra.mxu0 %v129
    %v206 = vpop.f32.mrf.mxu0
    %v207 = vadd.f32 %v123, %v206
    %v208 = vpop.f32.mrf.mxu0
    %209 = vdwg.mxu0
    %vm210 = vcmask 261120
    %211 = vst.msk [vmem:[#allocation3] sm:$0xff] %vm210, %v202
    %212 = vst.msk [vmem:[#allocation3 + $0x8] sm:$0xff] %vm210, %v207
    %s213 = scalar_lea.vmem [#allocation9], 16
    %v214 = vld [vmem:[%s213] sm:$0xff]
    %v215 = vld [vmem:[%s213 + $0x8] sm:$0xf]
    %v216 = vlaneseq
    %v217 = vshrl.u32 %v216, 7
    %v218 = vsub.s32 1, %v217
    %v219 = vrot.slane %v117, %v218
    %v221 = vsel %vm131, %v215, 0
    %223 = vmatprep.subr.mxu0 0.0
    %224 = vmatpush1.msra.mxu0 0.0
    %225 = vmatprep.subr.mxu0 0.0
    %226 = vmatpush1.msra.mxu0 0.0
    %227 = vmatprep.subr.mxu0 0.0
    %228 = vmatpush1.msra.mxu0 0.0
    %229 = vmatprep.subr.mxu0 0.0
    %230 = vmatpush1.msra.mxu0 0.0
    %231 = vmatprep.subr.mxu0 0.0
    %232 = vmatpush1.msra.mxu0 0.0
    %233 = vmatprep.subr.mxu0 0.0
    %234 = vmatpush1.msra.mxu0 0.0
    %235 = vmatprep.subr.mxu0 0.0
    %236 = vmatpush1.msra.mxu0 0.0
    %237 = vmatprep.subr.mxu0 0.0
    %238 = vmatpush1.msra.mxu0 0.0
    %239 = vmatprep.subr.mxu0 0.0
    %240 = vmatpush1.msra.mxu0 0.0
    %241 = vmatprep.subr.mxu0 0.0
    %242 = vmatpush1.msra.mxu0 0.0
    %243 = vmatprep.subr.mxu0 0.0
    %244 = vmatpush1.msra.mxu0 0.0
    %245 = vmatprep.subr.mxu0 0.0
    %246 = vmatpush1.msra.mxu0 0.0
    %247 = vmatprep.subr.mxu0 0.0
    %248 = vmatpush1.msra.mxu0 0.0
    %249 = vmatprep.subr.mxu0 0.0
    %250 = vmatpush1.msra.mxu0 0.0
    %251 = vmatprep.subr.mxu0 0.0
    %252 = vmatpush1.msra.mxu0 %v221
    %253 = vmatprep.subr.mxu0 0.0
    %254 = vmatpush1.msra.mxu0 %v214
    %255 = vmatprep.subr.mxu0 0.0
    %256 = vmatpush2.msra.mxu0 0.0
    %257 = vmatprep.subr.mxu0 0.0
    %258 = vmatpush2.msra.mxu0 0.0
    %259 = vmatprep.subr.mxu0 0.0
    %260 = vmatpush2.msra.mxu0 0.0
    %261 = vmatprep.subr.mxu0 0.0
    %262 = vmatpush2.msra.mxu0 0.0
    %263 = vmatprep.subr.mxu0 0.0
    %264 = vmatpush2.msra.mxu0 0.0
    %265 = vmatprep.subr.mxu0 0.0
    %266 = vmatpush2.msra.mxu0 0.0
    %267 = vmatprep.subr.mxu0 0.0
    %268 = vmatpush2.msra.mxu0 0.0
    %269 = vmatprep.subr.mxu0 0.0
    %270 = vmatpush2.msra.mxu0 0.0
    %271 = vmatprep.subr.mxu0 0.0
    %272 = vmatpush2.msra.mxu0 0.0
    %273 = vmatprep.subr.mxu0 0.0
    %274 = vmatpush2.msra.mxu0 0.0
    %275 = vmatprep.subr.mxu0 0.0
    %276 = vmatpush2.msra.mxu0 0.0
    %277 = vmatprep.subr.mxu0 0.0
    %278 = vmatpush2.msra.mxu0 0.0
    %279 = vmatprep.subr.mxu0 0.0
    %280 = vmatpush2.msra.mxu0 0.0
    %281 = vmatprep.subr.mxu0 0.0
    %282 = vmatpush2.msra.mxu0 0.0
    %283 = vmatprep.subr.mxu0 0.0
    %284 = vmatpush2.msra.mxu0 0.0
    %285 = vmatprep.subr.mxu0 0.0
    %286 = vmatpush2.msra.mxu0 0.0
    %287 = vmatprep.mubr.f32.mxu0 0.0
    %288 = vmatmul.mubr.f32.gmra.mxu0 %v126
    %v289 = vpop.f32.mrf.mxu0
    %v290 = vadd.f32 %v219, %v289
    %v291 = vpop.f32.mrf.mxu0
    %292 = vmatprep.mubr.f32.mxu0 0.0
    %293 = vmatmul.mubr.f32.gmra.mxu0 %v129
    %v294 = vpop.f32.mrf.mxu0
    %v295 = vadd.f32 %v219, %v294
    %v296 = vpop.f32.mrf.mxu0
    %297 = vdwg.mxu0
    %298 = vst.msk [vmem:[#allocation4] sm:$0xff] %vm210, %v290
    %299 = vst.msk [vmem:[#allocation4 + $0x8] sm:$0xff] %vm210, %v295
    %s300 = scalar_lea.vmem [#allocation9], 32
    %v301 = vld [vmem:[%s300] sm:$0xff]
    %v302 = vld [vmem:[%s300 + $0x8] sm:$0xf]
    %v303 = vlaneseq
    %v304 = vshrl.u32 %v303, 7
    %v305 = vsub.s32 2, %v304
    %v306 = vrot.slane %v117, %v305
    %v308 = vsel %vm131, %v302, 0
    %310 = vmatprep.subr.mxu0 0.0
    %311 = vmatpush1.msra.mxu0 0.0
    %312 = vmatprep.subr.mxu0 0.0
    %313 = vmatpush1.msra.mxu0 0.0
    %314 = vmatprep.subr.mxu0 0.0
    %315 = vmatpush1.msra.mxu0 0.0
    %316 = vmatprep.subr.mxu0 0.0
    %317 = vmatpush1.msra.mxu0 0.0
    %318 = vmatprep.subr.mxu0 0.0
    %319 = vmatpush1.msra.mxu0 0.0
    %320 = vmatprep.subr.mxu0 0.0
    %321 = vmatpush1.msra.mxu0 0.0
    %322 = vmatprep.subr.mxu0 0.0
    %323 = vmatpush1.msra.mxu0 0.0
    %324 = vmatprep.subr.mxu0 0.0
    %325 = vmatpush1.msra.mxu0 0.0
    %326 = vmatprep.subr.mxu0 0.0
    %327 = vmatpush1.msra.mxu0 0.0
    %328 = vmatprep.subr.mxu0 0.0
    %329 = vmatpush1.msra.mxu0 0.0
    %330 = vmatprep.subr.mxu0 0.0
    %331 = vmatpush1.msra.mxu0 0.0
    %332 = vmatprep.subr.mxu0 0.0
    %333 = vmatpush1.msra.mxu0 0.0
    %334 = vmatprep.subr.mxu0 0.0
    %335 = vmatpush1.msra.mxu0 0.0
    %336 = vmatprep.subr.mxu0 0.0
    %337 = vmatpush1.msra.mxu0 0.0
    %338 = vmatprep.subr.mxu0 0.0
    %339 = vmatpush1.msra.mxu0 %v308
    %340 = vmatprep.subr.mxu0 0.0
    %341 = vmatpush1.msra.mxu0 %v301
    %342 = vmatprep.subr.mxu0 0.0
    %343 = vmatpush2.msra.mxu0 0.0
    %344 = vmatprep.subr.mxu0 0.0
    %345 = vmatpush2.msra.mxu0 0.0
    %346 = vmatprep.subr.mxu0 0.0
    %347 = vmatpush2.msra.mxu0 0.0
    %348 = vmatprep.subr.mxu0 0.0
    %349 = vmatpush2.msra.mxu0 0.0
    %350 = vmatprep.subr.mxu0 0.0
    %351 = vmatpush2.msra.mxu0 0.0
    %352 = vmatprep.subr.mxu0 0.0
    %353 = vmatpush2.msra.mxu0 0.0
    %354 = vmatprep.subr.mxu0 0.0
    %355 = vmatpush2.msra.mxu0 0.0
    %356 = vmatprep.subr.mxu0 0.0
    %357 = vmatpush2.msra.mxu0 0.0
    %358 = vmatprep.subr.mxu0 0.0
    %359 = vmatpush2.msra.mxu0 0.0
    %360 = vmatprep.subr.mxu0 0.0
    %361 = vmatpush2.msra.mxu0 0.0
    %362 = vmatprep.subr.mxu0 0.0
    %363 = vmatpush2.msra.mxu0 0.0
    %364 = vmatprep.subr.mxu0 0.0
    %365 = vmatpush2.msra.mxu0 0.0
    %366 = vmatprep.subr.mxu0 0.0
    %367 = vmatpush2.msra.mxu0 0.0
    %368 = vmatprep.subr.mxu0 0.0
    %369 = vmatpush2.msra.mxu0 0.0
    %370 = vmatprep.subr.mxu0 0.0
    %371 = vmatpush2.msra.mxu0 0.0
    %372 = vmatprep.subr.mxu0 0.0
    %373 = vmatpush2.msra.mxu0 0.0
    %374 = vmatprep.mubr.f32.mxu0 0.0
    %375 = vmatmul.mubr.f32.gmra.mxu0 %v126
    %v376 = vpop.f32.mrf.mxu0
    %v377 = vadd.f32 %v306, %v376
    %v378 = vpop.f32.mrf.mxu0
    %379 = vmatprep.mubr.f32.mxu0 0.0
    %380 = vmatmul.mubr.f32.gmra.mxu0 %v129
    %v381 = vpop.f32.mrf.mxu0
    %v382 = vadd.f32 %v306, %v381
    %v383 = vpop.f32.mrf.mxu0
    %384 = vdwg.mxu0
    %385 = vst.msk [vmem:[#allocation5] sm:$0xff] %vm210, %v377
    %386 = vst.msk [vmem:[#allocation5 + $0x8] sm:$0xff] %vm210, %v382
    %v387 = vld [vmem:[#allocation11] sm:$0xff]
    %v388 = vld [vmem:[#allocation11 + $0x8] sm:$0xff]
    %v389 = vld [vmem:[#allocation11 + $0x10] sm:$0xff]
    %v390 = vld [vmem:[#allocation11 + $0x18] sm:$0xff]
    %s391 = scalar_lea.vmem [#allocation11], 32
    %v392 = vld [vmem:[%s391] sm:$0xff]
    %v393 = vld [vmem:[%s391 + $0x8] sm:$0xff]
    %v394 = vld [vmem:[%s391 + $0x10] sm:$0xff]
    %v395 = vld [vmem:[%s391 + $0x18] sm:$0xff]
    %s396 = scalar_lea.vmem [#allocation11], 64
    %v397 = vld [vmem:[%s396] sm:$0xff]
    %v398 = vld [vmem:[%s396 + $0x8] sm:$0xff]
    %v399 = vld [vmem:[%s396 + $0x10] sm:$0xff]
    %v400 = vld [vmem:[%s396 + $0x18] sm:$0xff]
    %v401 = vld [vmem:[%s3] sm:$0xf]
    %v403 = vsel %vm210, 0.0, 0
    %405 = vmatprep.subr.mxu0 0.0
    %406 = vmatpush1.msra.mxu0 0.0
    %407 = vmatprep.subr.mxu0 0.0
    %408 = vmatpush1.msra.mxu0 0.0
    %409 = vmatprep.subr.mxu0 0.0
    %410 = vmatpush1.msra.mxu0 0.0
    %411 = vmatprep.subr.mxu0 0.0
    %412 = vmatpush1.msra.mxu0 0.0
    %413 = vmatprep.subr.mxu0 0.0
    %414 = vmatpush1.msra.mxu0 0.0
    %415 = vmatprep.subr.mxu0 0.0
    %416 = vmatpush1.msra.mxu0 0.0
    %417 = vmatprep.subr.mxu0 0.0
    %418 = vmatpush1.msra.mxu0 0.0
    %419 = vmatprep.subr.mxu0 0.0
    %420 = vmatpush1.msra.mxu0 0.0
    %421 = vmatprep.subr.mxu0 0.0
    %422 = vmatpush1.msra.mxu0 0.0
    %423 = vmatprep.subr.mxu0 0.0
    %424 = vmatpush1.msra.mxu0 0.0
    %425 = vmatprep.subr.mxu0 0.0
    %426 = vmatpush1.msra.mxu0 0.0
    %427 = vmatprep.subr.mxu0 0.0
    %428 = vmatpush1.msra.mxu0 0.0
    %429 = vmatprep.subr.mxu0 0.0
    %430 = vmatpush1.msra.mxu0 %v390
    %431 = vmatprep.subr.mxu0 0.0
    %432 = vmatpush1.msra.mxu0 %v389
    %433 = vmatprep.subr.mxu0 0.0
    %434 = vmatpush1.msra.mxu0 %v388
    %435 = vmatprep.subr.mxu0 0.0
    %436 = vmatpush1.msra.mxu0 %v387
    %437 = vmatprep.subr.mxu0 0.0
    %438 = vmatpush2.msra.mxu0 0.0
    %439 = vmatprep.subr.mxu0 0.0
    %440 = vmatpush2.msra.mxu0 0.0
    %441 = vmatprep.subr.mxu0 0.0
    %442 = vmatpush2.msra.mxu0 0.0
    %443 = vmatprep.subr.mxu0 0.0
    %444 = vmatpush2.msra.mxu0 0.0
    %445 = vmatprep.subr.mxu0 0.0
    %446 = vmatpush2.msra.mxu0 0.0
    %447 = vmatprep.subr.mxu0 0.0
    %448 = vmatpush2.msra.mxu0 0.0
    %449 = vmatprep.subr.mxu0 0.0
    %450 = vmatpush2.msra.mxu0 0.0
    %451 = vmatprep.subr.mxu0 0.0
    %452 = vmatpush2.msra.mxu0 0.0
    %453 = vmatprep.subr.mxu0 0.0
    %454 = vmatpush2.msra.mxu0 0.0
    %455 = vmatprep.subr.mxu0 0.0
    %456 = vmatpush2.msra.mxu0 0.0
    %457 = vmatprep.subr.mxu0 0.0
    %458 = vmatpush2.msra.mxu0 0.0
    %459 = vmatprep.subr.mxu0 0.0
    %460 = vmatpush2.msra.mxu0 0.0
    %461 = vmatprep.subr.mxu0 0.0
    %462 = vmatpush2.msra.mxu0 0.0
    %463 = vmatprep.subr.mxu0 0.0
    %464 = vmatpush2.msra.mxu0 0.0
    %465 = vmatprep.subr.mxu0 0.0
    %466 = vmatpush2.msra.mxu0 0.0
    %467 = vmatprep.subr.mxu0 0.0
    %468 = vmatpush2.msra.mxu0 0.0
    %469 = vmatprep.mubr.f32.mxu0 0.0
    %470 = vmatmul.mubr.f32.gmra.mxu0 %v403
    %v471 = vpop.f32.mrf.mxu0
    %v472 = vadd.f32 0.0, %v471
    %v473 = vpop.f32.mrf.mxu0
    %474 = vdwg.mxu0
    %475 = vmatprep.subr.mxu0 0.0
    %476 = vmatpush1.msra.mxu0 0.0
    %477 = vmatprep.subr.mxu0 0.0
    %478 = vmatpush1.msra.mxu0 0.0
    %479 = vmatprep.subr.mxu0 0.0
    %480 = vmatpush1.msra.mxu0 0.0
    %481 = vmatprep.subr.mxu0 0.0
    %482 = vmatpush1.msra.mxu0 0.0
    %483 = vmatprep.subr.mxu0 0.0
    %484 = vmatpush1.msra.mxu0 0.0
    %485 = vmatprep.subr.mxu0 0.0
    %486 = vmatpush1.msra.mxu0 0.0
    %487 = vmatprep.subr.mxu0 0.0
    %488 = vmatpush1.msra.mxu0 0.0
    %489 = vmatprep.subr.mxu0 0.0
    %490 = vmatpush1.msra.mxu0 0.0
    %491 = vmatprep.subr.mxu0 0.0
    %492 = vmatpush1.msra.mxu0 0.0
    %493 = vmatprep.subr.mxu0 0.0
    %494 = vmatpush1.msra.mxu0 0.0
    %495 = vmatprep.subr.mxu0 0.0
    %496 = vmatpush1.msra.mxu0 0.0
    %497 = vmatprep.subr.mxu0 0.0
    %498 = vmatpush1.msra.mxu0 0.0
    %499 = vmatprep.subr.mxu0 0.0
    %500 = vmatpush1.msra.mxu0 %v395
    %501 = vmatprep.subr.mxu0 0.0
    %502 = vmatpush1.msra.mxu0 %v394
    %503 = vmatprep.subr.mxu0 0.0
    %504 = vmatpush1.msra.mxu0 %v393
    %505 = vmatprep.subr.mxu0 0.0
    %506 = vmatpush1.msra.mxu0 %v392
    %507 = vmatprep.subr.mxu0 0.0
    %508 = vmatpush2.msra.mxu0 0.0
    %509 = vmatprep.subr.mxu0 0.0
    %510 = vmatpush2.msra.mxu0 0.0
    %511 = vmatprep.subr.mxu0 0.0
    %512 = vmatpush2.msra.mxu0 0.0
    %513 = vmatprep.subr.mxu0 0.0
    %514 = vmatpush2.msra.mxu0 0.0
    %515 = vmatprep.subr.mxu0 0.0
    %516 = vmatpush2.msra.mxu0 0.0
    %517 = vmatprep.subr.mxu0 0.0
    %518 = vmatpush2.msra.mxu0 0.0
    %519 = vmatprep.subr.mxu0 0.0
    %520 = vmatpush2.msra.mxu0 0.0
    %521 = vmatprep.subr.mxu0 0.0
    %522 = vmatpush2.msra.mxu0 0.0
    %523 = vmatprep.subr.mxu0 0.0
    %524 = vmatpush2.msra.mxu0 0.0
    %525 = vmatprep.subr.mxu0 0.0
    %526 = vmatpush2.msra.mxu0 0.0
    %527 = vmatprep.subr.mxu0 0.0
    %528 = vmatpush2.msra.mxu0 0.0
    %529 = vmatprep.subr.mxu0 0.0
    %530 = vmatpush2.msra.mxu0 0.0
    %531 = vmatprep.subr.mxu0 0.0
    %532 = vmatpush2.msra.mxu0 0.0
    %533 = vmatprep.subr.mxu0 0.0
    %534 = vmatpush2.msra.mxu0 0.0
    %535 = vmatprep.subr.mxu0 0.0
    %536 = vmatpush2.msra.mxu0 0.0
    %537 = vmatprep.subr.mxu0 0.0
    %538 = vmatpush2.msra.mxu0 0.0
    %539 = vmatprep.mubr.f32.mxu0 0.0
    %540 = vmatmul.mubr.f32.gmra.mxu0 %v403
    %v541 = vpop.f32.mrf.mxu0
    %v542 = vadd.f32 0.0, %v541
    %v543 = vpop.f32.mrf.mxu0
    %544 = vdwg.mxu0
    %v545 = vlaneseq
    %v546 = vshrl.u32 %v545, 7
    %v547 = vsub.s32 3, %v546
    %v548 = vrot.slane %v401, %v547
    %549 = vmatprep.subr.mxu0 0.0
    %550 = vmatpush1.msra.mxu0 0.0
    %551 = vmatprep.subr.mxu0 0.0
    %552 = vmatpush1.msra.mxu0 0.0
    %553 = vmatprep.subr.mxu0 0.0
    %554 = vmatpush1.msra.mxu0 0.0
    %555 = vmatprep.subr.mxu0 0.0
    %556 = vmatpush1.msra.mxu0 0.0
    %557 = vmatprep.subr.mxu0 0.0
    %558 = vmatpush1.msra.mxu0 0.0
    %559 = vmatprep.subr.mxu0 0.0
    %560 = vmatpush1.msra.mxu0 0.0
    %561 = vmatprep.subr.mxu0 0.0
    %562 = vmatpush1.msra.mxu0 0.0
    %563 = vmatprep.subr.mxu0 0.0
    %564 = vmatpush1.msra.mxu0 0.0
    %565 = vmatprep.subr.mxu0 0.0
    %566 = vmatpush1.msra.mxu0 0.0
    %567 = vmatprep.subr.mxu0 0.0
    %568 = vmatpush1.msra.mxu0 0.0
    %569 = vmatprep.subr.mxu0 0.0
    %570 = vmatpush1.msra.mxu0 0.0
    %571 = vmatprep.subr.mxu0 0.0
    %572 = vmatpush1.msra.mxu0 0.0
    %573 = vmatprep.subr.mxu0 0.0
    %574 = vmatpush1.msra.mxu0 %v400
    %575 = vmatprep.subr.mxu0 0.0
    %576 = vmatpush1.msra.mxu0 %v399
    %577 = vmatprep.subr.mxu0 0.0
    %578 = vmatpush1.msra.mxu0 %v398
    %579 = vmatprep.subr.mxu0 0.0
    %580 = vmatpush1.msra.mxu0 %v397
    %581 = vmatprep.subr.mxu0 0.0
    %582 = vmatpush2.msra.mxu0 0.0
    %583 = vmatprep.subr.mxu0 0.0
    %584 = vmatpush2.msra.mxu0 0.0
    %585 = vmatprep.subr.mxu0 0.0
    %586 = vmatpush2.msra.mxu0 0.0
    %587 = vmatprep.subr.mxu0 0.0
    %588 = vmatpush2.msra.mxu0 0.0
    %589 = vmatprep.subr.mxu0 0.0
    %590 = vmatpush2.msra.mxu0 0.0
    %591 = vmatprep.subr.mxu0 0.0
    %592 = vmatpush2.msra.mxu0 0.0
    %593 = vmatprep.subr.mxu0 0.0
    %594 = vmatpush2.msra.mxu0 0.0
    %595 = vmatprep.subr.mxu0 0.0
    %596 = vmatpush2.msra.mxu0 0.0
    %597 = vmatprep.subr.mxu0 0.0
    %598 = vmatpush2.msra.mxu0 0.0
    %599 = vmatprep.subr.mxu0 0.0
    %600 = vmatpush2.msra.mxu0 0.0
    %601 = vmatprep.subr.mxu0 0.0
    %602 = vmatpush2.msra.mxu0 0.0
    %603 = vmatprep.subr.mxu0 0.0
    %604 = vmatpush2.msra.mxu0 0.0
    %605 = vmatprep.subr.mxu0 0.0
    %606 = vmatpush2.msra.mxu0 0.0
    %607 = vmatprep.subr.mxu0 0.0
    %608 = vmatpush2.msra.mxu0 0.0
    %609 = vmatprep.subr.mxu0 0.0
    %610 = vmatpush2.msra.mxu0 0.0
    %611 = vmatprep.subr.mxu0 0.0
    %612 = vmatpush2.msra.mxu0 0.0
    %613 = vmatprep.mubr.f32.mxu0 0.0
    %614 = vmatmul.mubr.f32.gmra.mxu0 %v403
    %v615 = vpop.f32.mrf.mxu0
    %v616 = vadd.f32 %v548, %v615
    %v617 = vpop.f32.mrf.mxu0
    %618 = vdwg.mxu0
    %v619 = vld [vmem:[#allocation3] sm:$0x3]
    %v620 = vadd.f32 %v619, %v472
    %v621 = vxor.u32 %v620, 2147483648
    %v622 = vmul.f32 %v621, 1.442695
    %v623 = vpow.pop %v622
    %v624 = vadd.f32 %v623, 1.0
    %v625 = vrcp.pop %v624
    %v626 = vmul.f32 1.0, %v625
    %v627 = vld [vmem:[#allocation4] sm:$0x3]
    %v628 = vadd.f32 %v627, %v542
    %v629 = vxor.u32 %v628, 2147483648
    %v630 = vmul.f32 %v629, 1.442695
    %v631 = vpow.pop %v630
    %v632 = vadd.f32 %v631, 1.0
    %v633 = vrcp.pop %v632
    %v634 = vmul.f32 1.0, %v633
    %v635 = vld [vmem:[#allocation5] sm:$0x3]
    %v636 = vmul.f32 %v626, %v616
    %v637 = vadd.f32 %v635, %v636
    %v638 = vtanh.pop %v637
    %v639 = vsub.f32 1.0, %v634
    %v640 = vmul.f32 %v639, %v638
    %v641 = vmul.f32 %v634, 0.0
    %v642 = vadd.f32 %v640, %v641
    %vm643 = vcmask 254976
    %644 = vst.msk [vmem:[#allocation2] sm:$0x3] %vm643, %v642
    %v646 = vsel %vm210, %v642, 0
    %648 = vmatprep.subr.mxu0 0.0
    %649 = vmatpush1.msra.mxu0 0.0
    %650 = vmatprep.subr.mxu0 0.0
    %651 = vmatpush1.msra.mxu0 0.0
    %652 = vmatprep.subr.mxu0 0.0
    %653 = vmatpush1.msra.mxu0 0.0
    %654 = vmatprep.subr.mxu0 0.0
    %655 = vmatpush1.msra.mxu0 0.0
    %656 = vmatprep.subr.mxu0 0.0
    %657 = vmatpush1.msra.mxu0 0.0
    %658 = vmatprep.subr.mxu0 0.0
    %659 = vmatpush1.msra.mxu0 0.0
    %660 = vmatprep.subr.mxu0 0.0
    %661 = vmatpush1.msra.mxu0 0.0
    %662 = vmatprep.subr.mxu0 0.0
    %663 = vmatpush1.msra.mxu0 0.0
    %664 = vmatprep.subr.mxu0 0.0
    %665 = vmatpush1.msra.mxu0 0.0
    %666 = vmatprep.subr.mxu0 0.0
    %667 = vmatpush1.msra.mxu0 0.0
    %668 = vmatprep.subr.mxu0 0.0
    %669 = vmatpush1.msra.mxu0 0.0
    %670 = vmatprep.subr.mxu0 0.0
    %671 = vmatpush1.msra.mxu0 0.0
    %672 = vmatprep.subr.mxu0 0.0
    %673 = vmatpush1.msra.mxu0 %v390
    %674 = vmatprep.subr.mxu0 0.0
    %675 = vmatpush1.msra.mxu0 %v389
    %676 = vmatprep.subr.mxu0 0.0
    %677 = vmatpush1.msra.mxu0 %v388
    %678 = vmatprep.subr.mxu0 0.0
    %679 = vmatpush1.msra.mxu0 %v387
    %680 = vmatprep.subr.mxu0 0.0
    %681 = vmatpush2.msra.mxu0 0.0
    %682 = vmatprep.subr.mxu0 0.0
    %683 = vmatpush2.msra.mxu0 0.0
    %684 = vmatprep.subr.mxu0 0.0
    %685 = vmatpush2.msra.mxu0 0.0
    %686 = vmatprep.subr.mxu0 0.0
    %687 = vmatpush2.msra.mxu0 0.0
    %688 = vmatprep.subr.mxu0 0.0
    %689 = vmatpush2.msra.mxu0 0.0
    %690 = vmatprep.subr.mxu0 0.0
    %691 = vmatpush2.msra.mxu0 0.0
    %692 = vmatprep.subr.mxu0 0.0
    %693 = vmatpush2.msra.mxu0 0.0
    %694 = vmatprep.subr.mxu0 0.0
    %695 = vmatpush2.msra.mxu0 0.0
    %696 = vmatprep.subr.mxu0 0.0
    %697 = vmatpush2.msra.mxu0 0.0
    %698 = vmatprep.subr.mxu0 0.0
    %699 = vmatpush2.msra.mxu0 0.0
    %700 = vmatprep.subr.mxu0 0.0
    %701 = vmatpush2.msra.mxu0 0.0
    %702 = vmatprep.subr.mxu0 0.0
    %703 = vmatpush2.msra.mxu0 0.0
    %704 = vmatprep.subr.mxu0 0.0
    %705 = vmatpush2.msra.mxu0 0.0
    %706 = vmatprep.subr.mxu0 0.0
    %707 = vmatpush2.msra.mxu0 0.0
    %708 = vmatprep.subr.mxu0 0.0
    %709 = vmatpush2.msra.mxu0 0.0
    %710 = vmatprep.subr.mxu0 0.0
    %711 = vmatpush2.msra.mxu0 0.0
    %712 = vmatprep.mubr.f32.mxu0 0.0
    %713 = vmatmul.mubr.f32.gmra.mxu0 %v646
    %v714 = vpop.f32.mrf.mxu0
    %v715 = vadd.f32 0.0, %v714
    %v716 = vpop.f32.mrf.mxu0
    %717 = vdwg.mxu0
    %718 = vmatprep.subr.mxu0 0.0
    %719 = vmatpush1.msra.mxu0 0.0
    %720 = vmatprep.subr.mxu0 0.0
    %721 = vmatpush1.msra.mxu0 0.0
    %722 = vmatprep.subr.mxu0 0.0
    %723 = vmatpush1.msra.mxu0 0.0
    %724 = vmatprep.subr.mxu0 0.0
    %725 = vmatpush1.msra.mxu0 0.0
    %726 = vmatprep.subr.mxu0 0.0
    %727 = vmatpush1.msra.mxu0 0.0
    %728 = vmatprep.subr.mxu0 0.0
    %729 = vmatpush1.msra.mxu0 0.0
    %730 = vmatprep.subr.mxu0 0.0
    %731 = vmatpush1.msra.mxu0 0.0
    %732 = vmatprep.subr.mxu0 0.0
    %733 = vmatpush1.msra.mxu0 0.0
    %734 = vmatprep.subr.mxu0 0.0
    %735 = vmatpush1.msra.mxu0 0.0
    %736 = vmatprep.subr.mxu0 0.0
    %737 = vmatpush1.msra.mxu0 0.0
    %738 = vmatprep.subr.mxu0 0.0
    %739 = vmatpush1.msra.mxu0 0.0
    %740 = vmatprep.subr.mxu0 0.0
    %741 = vmatpush1.msra.mxu0 0.0
    %742 = vmatprep.subr.mxu0 0.0
    %743 = vmatpush1.msra.mxu0 %v395
    %744 = vmatprep.subr.mxu0 0.0
    %745 = vmatpush1.msra.mxu0 %v394
    %746 = vmatprep.subr.mxu0 0.0
    %747 = vmatpush1.msra.mxu0 %v393
    %748 = vmatprep.subr.mxu0 0.0
    %749 = vmatpush1.msra.mxu0 %v392
    %750 = vmatprep.subr.mxu0 0.0
    %751 = vmatpush2.msra.mxu0 0.0
    %752 = vmatprep.subr.mxu0 0.0
    %753 = vmatpush2.msra.mxu0 0.0
    %754 = vmatprep.subr.mxu0 0.0
    %755 = vmatpush2.msra.mxu0 0.0
    %756 = vmatprep.subr.mxu0 0.0
    %757 = vmatpush2.msra.mxu0 0.0
    %758 = vmatprep.subr.mxu0 0.0
    %759 = vmatpush2.msra.mxu0 0.0
    %760 = vmatprep.subr.mxu0 0.0
    %761 = vmatpush2.msra.mxu0 0.0
    %762 = vmatprep.subr.mxu0 0.0
    %763 = vmatpush2.msra.mxu0 0.0
    %764 = vmatprep.subr.mxu0 0.0
    %765 = vmatpush2.msra.mxu0 0.0
    %766 = vmatprep.subr.mxu0 0.0
    %767 = vmatpush2.msra.mxu0 0.0
    %768 = vmatprep.subr.mxu0 0.0
    %769 = vmatpush2.msra.mxu0 0.0
    %770 = vmatprep.subr.mxu0 0.0
    %771 = vmatpush2.msra.mxu0 0.0
    %772 = vmatprep.subr.mxu0 0.0
    %773 = vmatpush2.msra.mxu0 0.0
    %774 = vmatprep.subr.mxu0 0.0
    %775 = vmatpush2.msra.mxu0 0.0
    %776 = vmatprep.subr.mxu0 0.0
    %777 = vmatpush2.msra.mxu0 0.0
    %778 = vmatprep.subr.mxu0 0.0
    %779 = vmatpush2.msra.mxu0 0.0
    %780 = vmatprep.subr.mxu0 0.0
    %781 = vmatpush2.msra.mxu0 0.0
    %782 = vmatprep.mubr.f32.mxu0 0.0
    %783 = vmatmul.mubr.f32.gmra.mxu0 %v646
    %v784 = vpop.f32.mrf.mxu0
    %v785 = vadd.f32 0.0, %v784
    %v786 = vpop.f32.mrf.mxu0
    %787 = vdwg.mxu0
    %788 = vmatprep.subr.mxu0 0.0
    %789 = vmatpush1.msra.mxu0 0.0
    %790 = vmatprep.subr.mxu0 0.0
    %791 = vmatpush1.msra.mxu0 0.0
    %792 = vmatprep.subr.mxu0 0.0
    %793 = vmatpush1.msra.mxu0 0.0
    %794 = vmatprep.subr.mxu0 0.0
    %795 = vmatpush1.msra.mxu0 0.0
    %796 = vmatprep.subr.mxu0 0.0
    %797 = vmatpush1.msra.mxu0 0.0
    %798 = vmatprep.subr.mxu0 0.0
    %799 = vmatpush1.msra.mxu0 0.0
    %800 = vmatprep.subr.mxu0 0.0
    %801 = vmatpush1.msra.mxu0 0.0
    %802 = vmatprep.subr.mxu0 0.0
    %803 = vmatpush1.msra.mxu0 0.0
    %804 = vmatprep.subr.mxu0 0.0
    %805 = vmatpush1.msra.mxu0 0.0
    %806 = vmatprep.subr.mxu0 0.0
    %807 = vmatpush1.msra.mxu0 0.0
    %808 = vmatprep.subr.mxu0 0.0
    %809 = vmatpush1.msra.mxu0 0.0
    %810 = vmatprep.subr.mxu0 0.0
    %811 = vmatpush1.msra.mxu0 0.0
    %812 = vmatprep.subr.mxu0 0.0
    %813 = vmatpush1.msra.mxu0 %v400
    %814 = vmatprep.subr.mxu0 0.0
    %815 = vmatpush1.msra.mxu0 %v399
    %816 = vmatprep.subr.mxu0 0.0
    %817 = vmatpush1.msra.mxu0 %v398
    %818 = vmatprep.subr.mxu0 0.0
    %819 = vmatpush1.msra.mxu0 %v397
    %820 = vmatprep.subr.mxu0 0.0
    %821 = vmatpush2.msra.mxu0 0.0
    %822 = vmatprep.subr.mxu0 0.0
    %823 = vmatpush2.msra.mxu0 0.0
    %824 = vmatprep.subr.mxu0 0.0
    %825 = vmatpush2.msra.mxu0 0.0
    %826 = vmatprep.subr.mxu0 0.0
    %827 = vmatpush2.msra.mxu0 0.0
    %828 = vmatprep.subr.mxu0 0.0
    %829 = vmatpush2.msra.mxu0 0.0
    %830 = vmatprep.subr.mxu0 0.0
    %831 = vmatpush2.msra.mxu0 0.0
    %832 = vmatprep.subr.mxu0 0.0
    %833 = vmatpush2.msra.mxu0 0.0
    %834 = vmatprep.subr.mxu0 0.0
    %835 = vmatpush2.msra.mxu0 0.0
    %836 = vmatprep.subr.mxu0 0.0
    %837 = vmatpush2.msra.mxu0 0.0
    %838 = vmatprep.subr.mxu0 0.0
    %839 = vmatpush2.msra.mxu0 0.0
    %840 = vmatprep.subr.mxu0 0.0
    %841 = vmatpush2.msra.mxu0 0.0
    %842 = vmatprep.subr.mxu0 0.0
    %843 = vmatpush2.msra.mxu0 0.0
    %844 = vmatprep.subr.mxu0 0.0
    %845 = vmatpush2.msra.mxu0 0.0
    %846 = vmatprep.subr.mxu0 0.0
    %847 = vmatpush2.msra.mxu0 0.0
    %848 = vmatprep.subr.mxu0 0.0
    %849 = vmatpush2.msra.mxu0 0.0
    %850 = vmatprep.subr.mxu0 0.0
    %851 = vmatpush2.msra.mxu0 0.0
    %852 = vmatprep.mubr.f32.mxu0 0.0
    %853 = vmatmul.mubr.f32.gmra.mxu0 %v646
    %v854 = vpop.f32.mrf.mxu0
    %v855 = vadd.f32 %v548, %v854
    %v856 = vpop.f32.mrf.mxu0
    %857 = vdwg.mxu0
    %s858 = scalar_lea.vmem [#allocation3], 2
    %v859 = vld [vmem:[%s858] sm:$0x3]
    %v860 = vadd.f32 %v859, %v715
    %v861 = vxor.u32 %v860, 2147483648
    %v862 = vmul.f32 %v861, 1.442695
    %v863 = vpow.pop %v862
    %v864 = vadd.f32 %v863, 1.0
    %v865 = vrcp.pop %v864
    %v866 = vmul.f32 1.0, %v865
    %s867 = scalar_lea.vmem [#allocation4], 2
    %v868 = vld [vmem:[%s867] sm:$0x3]
    %v869 = vadd.f32 %v868, %v785
    %v870 = vxor.u32 %v869, 2147483648
    %v871 = vmul.f32 %v870, 1.442695
    %v872 = vpow.pop %v871
    %v873 = vadd.f32 %v872, 1.0
    %v874 = vrcp.pop %v873
    %v875 = vmul.f32 1.0, %v874
    %s876 = scalar_lea.vmem [#allocation5], 2
    %v877 = vld [vmem:[%s876] sm:$0x3]
    %v878 = vmul.f32 %v866, %v855
    %v879 = vadd.f32 %v877, %v878
    %v880 = vtanh.pop %v879
    %v881 = vsub.f32 1.0, %v875
    %v882 = vmul.f32 %v881, %v880
    %v883 = vmul.f32 %v875, %v642
    %v884 = vadd.f32 %v882, %v883
    %s885 = scalar_lea.vmem [#allocation2], 2
    %886 = vst.msk [vmem:[%s885] sm:$0x3] %vm643, %v884
    %v888 = vsel %vm210, %v884, 0
    %890 = vmatprep.subr.mxu0 0.0
    %891 = vmatpush1.msra.mxu0 0.0
    %892 = vmatprep.subr.mxu0 0.0
    %893 = vmatpush1.msra.mxu0 0.0
    %894 = vmatprep.subr.mxu0 0.0
    %895 = vmatpush1.msra.mxu0 0.0
    %896 = vmatprep.subr.mxu0 0.0
    %897 = vmatpush1.msra.mxu0 0.0
    %898 = vmatprep.subr.mxu0 0.0
    %899 = vmatpush1.msra.mxu0 0.0
    %900 = vmatprep.subr.mxu0 0.0
    %901 = vmatpush1.msra.mxu0 0.0
    %902 = vmatprep.subr.mxu0 0.0
    %903 = vmatpush1.msra.mxu0 0.0
    %904 = vmatprep.subr.mxu0 0.0
    %905 = vmatpush1.msra.mxu0 0.0
    %906 = vmatprep.subr.mxu0 0.0
    %907 = vmatpush1.msra.mxu0 0.0
    %908 = vmatprep.subr.mxu0 0.0
    %909 = vmatpush1.msra.mxu0 0.0
    %910 = vmatprep.subr.mxu0 0.0
    %911 = vmatpush1.msra.mxu0 0.0
    %912 = vmatprep.subr.mxu0 0.0
    %913 = vmatpush1.msra.mxu0 0.0
    %914 = vmatprep.subr.mxu0 0.0
    %915 = vmatpush1.msra.mxu0 %v390
    %916 = vmatprep.subr.mxu0 0.0
    %917 = vmatpush1.msra.mxu0 %v389
    %918 = vmatprep.subr.mxu0 0.0
    %919 = vmatpush1.msra.mxu0 %v388
    %920 = vmatprep.subr.mxu0 0.0
    %921 = vmatpush1.msra.mxu0 %v387
    %922 = vmatprep.subr.mxu0 0.0
    %923 = vmatpush2.msra.mxu0 0.0
    %924 = vmatprep.subr.mxu0 0.0
    %925 = vmatpush2.msra.mxu0 0.0
    %926 = vmatprep.subr.mxu0 0.0
    %927 = vmatpush2.msra.mxu0 0.0
    %928 = vmatprep.subr.mxu0 0.0
    %929 = vmatpush2.msra.mxu0 0.0
    %930 = vmatprep.subr.mxu0 0.0
    %931 = vmatpush2.msra.mxu0 0.0
    %932 = vmatprep.subr.mxu0 0.0
    %933 = vmatpush2.msra.mxu0 0.0
    %934 = vmatprep.subr.mxu0 0.0
    %935 = vmatpush2.msra.mxu0 0.0
    %936 = vmatprep.subr.mxu0 0.0
    %937 = vmatpush2.msra.mxu0 0.0
    %938 = vmatprep.subr.mxu0 0.0
    %939 = vmatpush2.msra.mxu0 0.0
    %940 = vmatprep.subr.mxu0 0.0
    %941 = vmatpush2.msra.mxu0 0.0
    %942 = vmatprep.subr.mxu0 0.0
    %943 = vmatpush2.msra.mxu0 0.0
    %944 = vmatprep.subr.mxu0 0.0
    %945 = vmatpush2.msra.mxu0 0.0
    %946 = vmatprep.subr.mxu0 0.0
    %947 = vmatpush2.msra.mxu0 0.0
    %948 = vmatprep.subr.mxu0 0.0
    %949 = vmatpush2.msra.mxu0 0.0
    %950 = vmatprep.subr.mxu0 0.0
    %951 = vmatpush2.msra.mxu0 0.0
    %952 = vmatprep.subr.mxu0 0.0
    %953 = vmatpush2.msra.mxu0 0.0
    %954 = vmatprep.mubr.f32.mxu0 0.0
    %955 = vmatmul.mubr.f32.gmra.mxu0 %v888
    %v956 = vpop.f32.mrf.mxu0
    %v957 = vadd.f32 0.0, %v956
    %v958 = vpop.f32.mrf.mxu0
    %959 = vdwg.mxu0
    %960 = vmatprep.subr.mxu0 0.0
    %961 = vmatpush1.msra.mxu0 0.0
    %962 = vmatprep.subr.mxu0 0.0
    %963 = vmatpush1.msra.mxu0 0.0
    %964 = vmatprep.subr.mxu0 0.0
    %965 = vmatpush1.msra.mxu0 0.0
    %966 = vmatprep.subr.mxu0 0.0
    %967 = vmatpush1.msra.mxu0 0.0
    %968 = vmatprep.subr.mxu0 0.0
    %969 = vmatpush1.msra.mxu0 0.0
    %970 = vmatprep.subr.mxu0 0.0
    %971 = vmatpush1.msra.mxu0 0.0
    %972 = vmatprep.subr.mxu0 0.0
    %973 = vmatpush1.msra.mxu0 0.0
    %974 = vmatprep.subr.mxu0 0.0
    %975 = vmatpush1.msra.mxu0 0.0
    %976 = vmatprep.subr.mxu0 0.0
    %977 = vmatpush1.msra.mxu0 0.0
    %978 = vmatprep.subr.mxu0 0.0
    %979 = vmatpush1.msra.mxu0 0.0
    %980 = vmatprep.subr.mxu0 0.0
    %981 = vmatpush1.msra.mxu0 0.0
    %982 = vmatprep.subr.mxu0 0.0
    %983 = vmatpush1.msra.mxu0 0.0
    %984 = vmatprep.subr.mxu0 0.0
    %985 = vmatpush1.msra.mxu0 %v395
    %986 = vmatprep.subr.mxu0 0.0
    %987 = vmatpush1.msra.mxu0 %v394
    %988 = vmatprep.subr.mxu0 0.0
    %989 = vmatpush1.msra.mxu0 %v393
    %990 = vmatprep.subr.mxu0 0.0
    %991 = vmatpush1.msra.mxu0 %v392
    %992 = vmatprep.subr.mxu0 0.0
    %993 = vmatpush2.msra.mxu0 0.0
    %994 = vmatprep.subr.mxu0 0.0
    %995 = vmatpush2.msra.mxu0 0.0
    %996 = vmatprep.subr.mxu0 0.0
    %997 = vmatpush2.msra.mxu0 0.0
    %998 = vmatprep.subr.mxu0 0.0
    %999 = vmatpush2.msra.mxu0 0.0
    %1000 = vmatprep.subr.mxu0 0.0
    %1001 = vmatpush2.msra.mxu0 0.0
    %1002 = vmatprep.subr.mxu0 0.0
    %1003 = vmatpush2.msra.mxu0 0.0
    %1004 = vmatprep.subr.mxu0 0.0
    %1005 = vmatpush2.msra.mxu0 0.0
    %1006 = vmatprep.subr.mxu0 0.0
    %1007 = vmatpush2.msra.mxu0 0.0
    %1008 = vmatprep.subr.mxu0 0.0
    %1009 = vmatpush2.msra.mxu0 0.0
    %1010 = vmatprep.subr.mxu0 0.0
    %1011 = vmatpush2.msra.mxu0 0.0
    %1012 = vmatprep.subr.mxu0 0.0
    %1013 = vmatpush2.msra.mxu0 0.0
    %1014 = vmatprep.subr.mxu0 0.0
    %1015 = vmatpush2.msra.mxu0 0.0
    %1016 = vmatprep.subr.mxu0 0.0
    %1017 = vmatpush2.msra.mxu0 0.0
    %1018 = vmatprep.subr.mxu0 0.0
    %1019 = vmatpush2.msra.mxu0 0.0
    %1020 = vmatprep.subr.mxu0 0.0
    %1021 = vmatpush2.msra.mxu0 0.0
    %1022 = vmatprep.subr.mxu0 0.0
    %1023 = vmatpush2.msra.mxu0 0.0
    %1024 = vmatprep.mubr.f32.mxu0 0.0
    %1025 = vmatmul.mubr.f32.gmra.mxu0 %v888
    %v1026 = vpop.f32.mrf.mxu0
    %v1027 = vadd.f32 0.0, %v1026
    %v1028 = vpop.f32.mrf.mxu0
    %1029 = vdwg.mxu0
    %1030 = vmatprep.subr.mxu0 0.0
    %1031 = vmatpush1.msra.mxu0 0.0
    %1032 = vmatprep.subr.mxu0 0.0
    %1033 = vmatpush1.msra.mxu0 0.0
    %1034 = vmatprep.subr.mxu0 0.0
    %1035 = vmatpush1.msra.mxu0 0.0
    %1036 = vmatprep.subr.mxu0 0.0
    %1037 = vmatpush1.msra.mxu0 0.0
    %1038 = vmatprep.subr.mxu0 0.0
    %1039 = vmatpush1.msra.mxu0 0.0
    %1040 = vmatprep.subr.mxu0 0.0
    %1041 = vmatpush1.msra.mxu0 0.0
    %1042 = vmatprep.subr.mxu0 0.0
    %1043 = vmatpush1.msra.mxu0 0.0
    %1044 = vmatprep.subr.mxu0 0.0
    %1045 = vmatpush1.msra.mxu0 0.0
    %1046 = vmatprep.subr.mxu0 0.0
    %1047 = vmatpush1.msra.mxu0 0.0
    %1048 = vmatprep.subr.mxu0 0.0
    %1049 = vmatpush1.msra.mxu0 0.0
    %1050 = vmatprep.subr.mxu0 0.0
    %1051 = vmatpush1.msra.mxu0 0.0
    %1052 = vmatprep.subr.mxu0 0.0
    %1053 = vmatpush1.msra.mxu0 0.0
    %1054 = vmatprep.subr.mxu0 0.0
    %1055 = vmatpush1.msra.mxu0 %v400
    %1056 = vmatprep.subr.mxu0 0.0
    %1057 = vmatpush1.msra.mxu0 %v399
    %1058 = vmatprep.subr.mxu0 0.0
    %1059 = vmatpush1.msra.mxu0 %v398
    %1060 = vmatprep.subr.mxu0 0.0
    %1061 = vmatpush1.msra.mxu0 %v397
    %1062 = vmatprep.subr.mxu0 0.0
    %1063 = vmatpush2.msra.mxu0 0.0
    %1064 = vmatprep.subr.mxu0 0.0
    %1065 = vmatpush2.msra.mxu0 0.0
    %1066 = vmatprep.subr.mxu0 0.0
    %1067 = vmatpush2.msra.mxu0 0.0
    %1068 = vmatprep.subr.mxu0 0.0
    %1069 = vmatpush2.msra.mxu0 0.0
    %1070 = vmatprep.subr.mxu0 0.0
    %1071 = vmatpush2.msra.mxu0 0.0
    %1072 = vmatprep.subr.mxu0 0.0
    %1073 = vmatpush2.msra.mxu0 0.0
    %1074 = vmatprep.subr.mxu0 0.0
    %1075 = vmatpush2.msra.mxu0 0.0
    %1076 = vmatprep.subr.mxu0 0.0
    %1077 = vmatpush2.msra.mxu0 0.0
    %1078 = vmatprep.subr.mxu0 0.0
    %1079 = vmatpush2.msra.mxu0 0.0
    %1080 = vmatprep.subr.mxu0 0.0
    %1081 = vmatpush2.msra.mxu0 0.0
    %1082 = vmatprep.subr.mxu0 0.0
    %1083 = vmatpush2.msra.mxu0 0.0
    %1084 = vmatprep.subr.mxu0 0.0
    %1085 = vmatpush2.msra.mxu0 0.0
    %1086 = vmatprep.subr.mxu0 0.0
    %1087 = vmatpush2.msra.mxu0 0.0
    %1088 = vmatprep.subr.mxu0 0.0
    %1089 = vmatpush2.msra.mxu0 0.0
    %1090 = vmatprep.subr.mxu0 0.0
    %1091 = vmatpush2.msra.mxu0 0.0
    %1092 = vmatprep.subr.mxu0 0.0
    %1093 = vmatpush2.msra.mxu0 0.0
    %1094 = vmatprep.mubr.f32.mxu0 0.0
    %1095 = vmatmul.mubr.f32.gmra.mxu0 %v888
    %v1096 = vpop.f32.mrf.mxu0
    %v1097 = vadd.f32 %v548, %v1096
    %v1098 = vpop.f32.mrf.mxu0
    %1099 = vdwg.mxu0
    %s1100 = scalar_lea.vmem [#allocation3], 4
    %v1101 = vld [vmem:[%s1100] sm:$0x3]
    %v1102 = vadd.f32 %v1101, %v957
    %v1103 = vxor.u32 %v1102, 2147483648
    %v1104 = vmul.f32 %v1103, 1.442695
    %v1105 = vpow.pop %v1104
    %v1106 = vadd.f32 %v1105, 1.0
    %v1107 = vrcp.pop %v1106
    %v1108 = vmul.f32 1.0, %v1107
    %s1109 = scalar_lea.vmem [#allocation4], 4
    %v1110 = vld [vmem:[%s1109] sm:$0x3]
    %v1111 = vadd.f32 %v1110, %v1027
    %v1112 = vxor.u32 %v1111, 2147483648
    %v1113 = vmul.f32 %v1112, 1.442695
    %v1114 = vpow.pop %v1113
    %v1115 = vadd.f32 %v1114, 1.0
    %v1116 = vrcp.pop %v1115
    %v1117 = vmul.f32 1.0, %v1116
    %s1118 = scalar_lea.vmem [#allocation5], 4
    %v1119 = vld [vmem:[%s1118] sm:$0x3]
    %v1120 = vmul.f32 %v1108, %v1097
    %v1121 = vadd.f32 %v1119, %v1120
    %v1122 = vtanh.pop %v1121
    %v1123 = vsub.f32 1.0, %v1117
    %v1124 = vmul.f32 %v1123, %v1122
    %v1125 = vmul.f32 %v1117, %v884
    %v1126 = vadd.f32 %v1124, %v1125
    %s1127 = scalar_lea.vmem [#allocation2], 4
    %1128 = vst.msk [vmem:[%s1127] sm:$0x3] %vm643, %v1126
    %v1130 = vsel %vm210, %v1126, 0
    %1132 = vmatprep.subr.mxu0 0.0
    %1133 = vmatpush1.msra.mxu0 0.0
    %1134 = vmatprep.subr.mxu0 0.0
    %1135 = vmatpush1.msra.mxu0 0.0
    %1136 = vmatprep.subr.mxu0 0.0
    %1137 = vmatpush1.msra.mxu0 0.0
    %1138 = vmatprep.subr.mxu0 0.0
    %1139 = vmatpush1.msra.mxu0 0.0
    %1140 = vmatprep.subr.mxu0 0.0
    %1141 = vmatpush1.msra.mxu0 0.0
    %1142 = vmatprep.subr.mxu0 0.0
    %1143 = vmatpush1.msra.mxu0 0.0
    %1144 = vmatprep.subr.mxu0 0.0
    %1145 = vmatpush1.msra.mxu0 0.0
    %1146 = vmatprep.subr.mxu0 0.0
    %1147 = vmatpush1.msra.mxu0 0.0
    %1148 = vmatprep.subr.mxu0 0.0
    %1149 = vmatpush1.msra.mxu0 0.0
    %1150 = vmatprep.subr.mxu0 0.0
    %1151 = vmatpush1.msra.mxu0 0.0
    %1152 = vmatprep.subr.mxu0 0.0
    %1153 = vmatpush1.msra.mxu0 0.0
    %1154 = vmatprep.subr.mxu0 0.0
    %1155 = vmatpush1.msra.mxu0 0.0
    %1156 = vmatprep.subr.mxu0 0.0
    %1157 = vmatpush1.msra.mxu0 %v390
    %1158 = vmatprep.subr.mxu0 0.0
    %1159 = vmatpush1.msra.mxu0 %v389
    %1160 = vmatprep.subr.mxu0 0.0
    %1161 = vmatpush1.msra.mxu0 %v388
    %1162 = vmatprep.subr.mxu0 0.0
    %1163 = vmatpush1.msra.mxu0 %v387
    %1164 = vmatprep.subr.mxu0 0.0
    %1165 = vmatpush2.msra.mxu0 0.0
    %1166 = vmatprep.subr.mxu0 0.0
    %1167 = vmatpush2.msra.mxu0 0.0
    %1168 = vmatprep.subr.mxu0 0.0
    %1169 = vmatpush2.msra.mxu0 0.0
    %1170 = vmatprep.subr.mxu0 0.0
    %1171 = vmatpush2.msra.mxu0 0.0
    %1172 = vmatprep.subr.mxu0 0.0
    %1173 = vmatpush2.msra.mxu0 0.0
    %1174 = vmatprep.subr.mxu0 0.0
    %1175 = vmatpush2.msra.mxu0 0.0
    %1176 = vmatprep.subr.mxu0 0.0
    %1177 = vmatpush2.msra.mxu0 0.0
    %1178 = vmatprep.subr.mxu0 0.0
    %1179 = vmatpush2.msra.mxu0 0.0
    %1180 = vmatprep.subr.mxu0 0.0
    %1181 = vmatpush2.msra.mxu0 0.0
    %1182 = vmatprep.subr.mxu0 0.0
    %1183 = vmatpush2.msra.mxu0 0.0
    %1184 = vmatprep.subr.mxu0 0.0
    %1185 = vmatpush2.msra.mxu0 0.0
    %1186 = vmatprep.subr.mxu0 0.0
    %1187 = vmatpush2.msra.mxu0 0.0
    %1188 = vmatprep.subr.mxu0 0.0
    %1189 = vmatpush2.msra.mxu0 0.0
    %1190 = vmatprep.subr.mxu0 0.0
    %1191 = vmatpush2.msra.mxu0 0.0
    %1192 = vmatprep.subr.mxu0 0.0
    %1193 = vmatpush2.msra.mxu0 0.0
    %1194 = vmatprep.subr.mxu0 0.0
    %1195 = vmatpush2.msra.mxu0 0.0
    %1196 = vmatprep.mubr.f32.mxu0 0.0
    %1197 = vmatmul.mubr.f32.gmra.mxu0 %v1130
    %v1198 = vpop.f32.mrf.mxu0
    %v1199 = vadd.f32 0.0, %v1198
    %v1200 = vpop.f32.mrf.mxu0
    %1201 = vdwg.mxu0
    %1202 = vmatprep.subr.mxu0 0.0
    %1203 = vmatpush1.msra.mxu0 0.0
    %1204 = vmatprep.subr.mxu0 0.0
    %1205 = vmatpush1.msra.mxu0 0.0
    %1206 = vmatprep.subr.mxu0 0.0
    %1207 = vmatpush1.msra.mxu0 0.0
    %1208 = vmatprep.subr.mxu0 0.0
    %1209 = vmatpush1.msra.mxu0 0.0
    %1210 = vmatprep.subr.mxu0 0.0
    %1211 = vmatpush1.msra.mxu0 0.0
    %1212 = vmatprep.subr.mxu0 0.0
    %1213 = vmatpush1.msra.mxu0 0.0
    %1214 = vmatprep.subr.mxu0 0.0
    %1215 = vmatpush1.msra.mxu0 0.0
    %1216 = vmatprep.subr.mxu0 0.0
    %1217 = vmatpush1.msra.mxu0 0.0
    %1218 = vmatprep.subr.mxu0 0.0
    %1219 = vmatpush1.msra.mxu0 0.0
    %1220 = vmatprep.subr.mxu0 0.0
    %1221 = vmatpush1.msra.mxu0 0.0
    %1222 = vmatprep.subr.mxu0 0.0
    %1223 = vmatpush1.msra.mxu0 0.0
    %1224 = vmatprep.subr.mxu0 0.0
    %1225 = vmatpush1.msra.mxu0 0.0
    %1226 = vmatprep.subr.mxu0 0.0
    %1227 = vmatpush1.msra.mxu0 %v395
    %1228 = vmatprep.subr.mxu0 0.0
    %1229 = vmatpush1.msra.mxu0 %v394
    %1230 = vmatprep.subr.mxu0 0.0
    %1231 = vmatpush1.msra.mxu0 %v393
    %1232 = vmatprep.subr.mxu0 0.0
    %1233 = vmatpush1.msra.mxu0 %v392
    %1234 = vmatprep.subr.mxu0 0.0
    %1235 = vmatpush2.msra.mxu0 0.0
    %1236 = vmatprep.subr.mxu0 0.0
    %1237 = vmatpush2.msra.mxu0 0.0
    %1238 = vmatprep.subr.mxu0 0.0
    %1239 = vmatpush2.msra.mxu0 0.0
    %1240 = vmatprep.subr.mxu0 0.0
    %1241 = vmatpush2.msra.mxu0 0.0
    %1242 = vmatprep.subr.mxu0 0.0
    %1243 = vmatpush2.msra.mxu0 0.0
    %1244 = vmatprep.subr.mxu0 0.0
    %1245 = vmatpush2.msra.mxu0 0.0
    %1246 = vmatprep.subr.mxu0 0.0
    %1247 = vmatpush2.msra.mxu0 0.0
    %1248 = vmatprep.subr.mxu0 0.0
    %1249 = vmatpush2.msra.mxu0 0.0
    %1250 = vmatprep.subr.mxu0 0.0
    %1251 = vmatpush2.msra.mxu0 0.0
    %1252 = vmatprep.subr.mxu0 0.0
    %1253 = vmatpush2.msra.mxu0 0.0
    %1254 = vmatprep.subr.mxu0 0.0
    %1255 = vmatpush2.msra.mxu0 0.0
    %1256 = vmatprep.subr.mxu0 0.0
    %1257 = vmatpush2.msra.mxu0 0.0
    %1258 = vmatprep.subr.mxu0 0.0
    %1259 = vmatpush2.msra.mxu0 0.0
    %1260 = vmatprep.subr.mxu0 0.0
    %1261 = vmatpush2.msra.mxu0 0.0
    %1262 = vmatprep.subr.mxu0 0.0
    %1263 = vmatpush2.msra.mxu0 0.0
    %1264 = vmatprep.subr.mxu0 0.0
    %1265 = vmatpush2.msra.mxu0 0.0
    %1266 = vmatprep.mubr.f32.mxu0 0.0
    %1267 = vmatmul.mubr.f32.gmra.mxu0 %v1130
    %v1268 = vpop.f32.mrf.mxu0
    %v1269 = vadd.f32 0.0, %v1268
    %v1270 = vpop.f32.mrf.mxu0
    %1271 = vdwg.mxu0
    %1272 = vmatprep.subr.mxu0 0.0
    %1273 = vmatpush1.msra.mxu0 0.0
    %1274 = vmatprep.subr.mxu0 0.0
    %1275 = vmatpush1.msra.mxu0 0.0
    %1276 = vmatprep.subr.mxu0 0.0
    %1277 = vmatpush1.msra.mxu0 0.0
    %1278 = vmatprep.subr.mxu0 0.0
    %1279 = vmatpush1.msra.mxu0 0.0
    %1280 = vmatprep.subr.mxu0 0.0
    %1281 = vmatpush1.msra.mxu0 0.0
    %1282 = vmatprep.subr.mxu0 0.0
    %1283 = vmatpush1.msra.mxu0 0.0
    %1284 = vmatprep.subr.mxu0 0.0
    %1285 = vmatpush1.msra.mxu0 0.0
    %1286 = vmatprep.subr.mxu0 0.0
    %1287 = vmatpush1.msra.mxu0 0.0
    %1288 = vmatprep.subr.mxu0 0.0
    %1289 = vmatpush1.msra.mxu0 0.0
    %1290 = vmatprep.subr.mxu0 0.0
    %1291 = vmatpush1.msra.mxu0 0.0
    %1292 = vmatprep.subr.mxu0 0.0
    %1293 = vmatpush1.msra.mxu0 0.0
    %1294 = vmatprep.subr.mxu0 0.0
    %1295 = vmatpush1.msra.mxu0 0.0
    %1296 = vmatprep.subr.mxu0 0.0
    %1297 = vmatpush1.msra.mxu0 %v400
    %1298 = vmatprep.subr.mxu0 0.0
    %1299 = vmatpush1.msra.mxu0 %v399
    %1300 = vmatprep.subr.mxu0 0.0
    %1301 = vmatpush1.msra.mxu0 %v398
    %1302 = vmatprep.subr.mxu0 0.0
    %1303 = vmatpush1.msra.mxu0 %v397
    %1304 = vmatprep.subr.mxu0 0.0
    %1305 = vmatpush2.msra.mxu0 0.0
    %1306 = vmatprep.subr.mxu0 0.0
    %1307 = vmatpush2.msra.mxu0 0.0
    %1308 = vmatprep.subr.mxu0 0.0
    %1309 = vmatpush2.msra.mxu0 0.0
    %1310 = vmatprep.subr.mxu0 0.0
    %1311 = vmatpush2.msra.mxu0 0.0
    %1312 = vmatprep.subr.mxu0 0.0
    %1313 = vmatpush2.msra.mxu0 0.0
    %1314 = vmatprep.subr.mxu0 0.0
    %1315 = vmatpush2.msra.mxu0 0.0
    %1316 = vmatprep.subr.mxu0 0.0
    %1317 = vmatpush2.msra.mxu0 0.0
    %1318 = vmatprep.subr.mxu0 0.0
    %1319 = vmatpush2.msra.mxu0 0.0
    %1320 = vmatprep.subr.mxu0 0.0
    %1321 = vmatpush2.msra.mxu0 0.0
    %1322 = vmatprep.subr.mxu0 0.0
    %1323 = vmatpush2.msra.mxu0 0.0
    %1324 = vmatprep.subr.mxu0 0.0
    %1325 = vmatpush2.msra.mxu0 0.0
    %1326 = vmatprep.subr.mxu0 0.0
    %1327 = vmatpush2.msra.mxu0 0.0
    %1328 = vmatprep.subr.mxu0 0.0
    %1329 = vmatpush2.msra.mxu0 0.0
    %1330 = vmatprep.subr.mxu0 0.0
    %1331 = vmatpush2.msra.mxu0 0.0
    %1332 = vmatprep.subr.mxu0 0.0
    %1333 = vmatpush2.msra.mxu0 0.0
    %1334 = vmatprep.subr.mxu0 0.0
    %1335 = vmatpush2.msra.mxu0 0.0
    %1336 = vmatprep.mubr.f32.mxu0 0.0
    %1337 = vmatmul.mubr.f32.gmra.mxu0 %v1130
    %v1338 = vpop.f32.mrf.mxu0
    %v1339 = vadd.f32 %v548, %v1338
    %v1340 = vpop.f32.mrf.mxu0
    %1341 = vdwg.mxu0
    %s1342 = scalar_lea.vmem [#allocation3], 6
    %v1343 = vld [vmem:[%s1342] sm:$0x3]
    %v1344 = vadd.f32 %v1343, %v1199
    %v1345 = vxor.u32 %v1344, 2147483648
    %v1346 = vmul.f32 %v1345, 1.442695
    %v1347 = vpow.pop %v1346
    %v1348 = vadd.f32 %v1347, 1.0
    %v1349 = vrcp.pop %v1348
    %v1350 = vmul.f32 1.0, %v1349
    %s1351 = scalar_lea.vmem [#allocation4], 6
    %v1352 = vld [vmem:[%s1351] sm:$0x3]
    %v1353 = vadd.f32 %v1352, %v1269
    %v1354 = vxor.u32 %v1353, 2147483648
    %v1355 = vmul.f32 %v1354, 1.442695
    %v1356 = vpow.pop %v1355
    %v1357 = vadd.f32 %v1356, 1.0
    %v1358 = vrcp.pop %v1357
    %v1359 = vmul.f32 1.0, %v1358
    %s1360 = scalar_lea.vmem [#allocation5], 6
    %v1361 = vld [vmem:[%s1360] sm:$0x3]
    %v1362 = vmul.f32 %v1350, %v1339
    %v1363 = vadd.f32 %v1361, %v1362
    %v1364 = vtanh.pop %v1363
    %v1365 = vsub.f32 1.0, %v1359
    %v1366 = vmul.f32 %v1365, %v1364
    %v1367 = vmul.f32 %v1359, %v1126
    %v1368 = vadd.f32 %v1366, %v1367
    %s1369 = scalar_lea.vmem [#allocation2], 6
    %1370 = vst.msk [vmem:[%s1369] sm:$0x3] %vm643, %v1368
    %v1372 = vsel %vm210, %v1368, 0
    %1374 = vmatprep.subr.mxu0 0.0
    %1375 = vmatpush1.msra.mxu0 0.0
    %1376 = vmatprep.subr.mxu0 0.0
    %1377 = vmatpush1.msra.mxu0 0.0
    %1378 = vmatprep.subr.mxu0 0.0
    %1379 = vmatpush1.msra.mxu0 0.0
    %1380 = vmatprep.subr.mxu0 0.0
    %1381 = vmatpush1.msra.mxu0 0.0
    %1382 = vmatprep.subr.mxu0 0.0
    %1383 = vmatpush1.msra.mxu0 0.0
    %1384 = vmatprep.subr.mxu0 0.0
    %1385 = vmatpush1.msra.mxu0 0.0
    %1386 = vmatprep.subr.mxu0 0.0
    %1387 = vmatpush1.msra.mxu0 0.0
    %1388 = vmatprep.subr.mxu0 0.0
    %1389 = vmatpush1.msra.mxu0 0.0
    %1390 = vmatprep.subr.mxu0 0.0
    %1391 = vmatpush1.msra.mxu0 0.0
    %1392 = vmatprep.subr.mxu0 0.0
    %1393 = vmatpush1.msra.mxu0 0.0
    %1394 = vmatprep.subr.mxu0 0.0
    %1395 = vmatpush1.msra.mxu0 0.0
    %1396 = vmatprep.subr.mxu0 0.0
    %1397 = vmatpush1.msra.mxu0 0.0
    %1398 = vmatprep.subr.mxu0 0.0
    %1399 = vmatpush1.msra.mxu0 %v390
    %1400 = vmatprep.subr.mxu0 0.0
    %1401 = vmatpush1.msra.mxu0 %v389
    %1402 = vmatprep.subr.mxu0 0.0
    %1403 = vmatpush1.msra.mxu0 %v388
    %1404 = vmatprep.subr.mxu0 0.0
    %1405 = vmatpush1.msra.mxu0 %v387
    %1406 = vmatprep.subr.mxu0 0.0
    %1407 = vmatpush2.msra.mxu0 0.0
    %1408 = vmatprep.subr.mxu0 0.0
    %1409 = vmatpush2.msra.mxu0 0.0
    %1410 = vmatprep.subr.mxu0 0.0
    %1411 = vmatpush2.msra.mxu0 0.0
    %1412 = vmatprep.subr.mxu0 0.0
    %1413 = vmatpush2.msra.mxu0 0.0
    %1414 = vmatprep.subr.mxu0 0.0
    %1415 = vmatpush2.msra.mxu0 0.0
    %1416 = vmatprep.subr.mxu0 0.0
    %1417 = vmatpush2.msra.mxu0 0.0
    %1418 = vmatprep.subr.mxu0 0.0
    %1419 = vmatpush2.msra.mxu0 0.0
    %1420 = vmatprep.subr.mxu0 0.0
    %1421 = vmatpush2.msra.mxu0 0.0
    %1422 = vmatprep.subr.mxu0 0.0
    %1423 = vmatpush2.msra.mxu0 0.0
    %1424 = vmatprep.subr.mxu0 0.0
    %1425 = vmatpush2.msra.mxu0 0.0
    %1426 = vmatprep.subr.mxu0 0.0
    %1427 = vmatpush2.msra.mxu0 0.0
    %1428 = vmatprep.subr.mxu0 0.0
    %1429 = vmatpush2.msra.mxu0 0.0
    %1430 = vmatprep.subr.mxu0 0.0
    %1431 = vmatpush2.msra.mxu0 0.0
    %1432 = vmatprep.subr.mxu0 0.0
    %1433 = vmatpush2.msra.mxu0 0.0
    %1434 = vmatprep.subr.mxu0 0.0
    %1435 = vmatpush2.msra.mxu0 0.0
    %1436 = vmatprep.subr.mxu0 0.0
    %1437 = vmatpush2.msra.mxu0 0.0
    %1438 = vmatprep.mubr.f32.mxu0 0.0
    %1439 = vmatmul.mubr.f32.gmra.mxu0 %v1372
    %v1440 = vpop.f32.mrf.mxu0
    %v1441 = vadd.f32 0.0, %v1440
    %v1442 = vpop.f32.mrf.mxu0
    %1443 = vdwg.mxu0
    %1444 = vmatprep.subr.mxu0 0.0
    %1445 = vmatpush1.msra.mxu0 0.0
    %1446 = vmatprep.subr.mxu0 0.0
    %1447 = vmatpush1.msra.mxu0 0.0
    %1448 = vmatprep.subr.mxu0 0.0
    %1449 = vmatpush1.msra.mxu0 0.0
    %1450 = vmatprep.subr.mxu0 0.0
    %1451 = vmatpush1.msra.mxu0 0.0
    %1452 = vmatprep.subr.mxu0 0.0
    %1453 = vmatpush1.msra.mxu0 0.0
    %1454 = vmatprep.subr.mxu0 0.0
    %1455 = vmatpush1.msra.mxu0 0.0
    %1456 = vmatprep.subr.mxu0 0.0
    %1457 = vmatpush1.msra.mxu0 0.0
    %1458 = vmatprep.subr.mxu0 0.0
    %1459 = vmatpush1.msra.mxu0 0.0
    %1460 = vmatprep.subr.mxu0 0.0
    %1461 = vmatpush1.msra.mxu0 0.0
    %1462 = vmatprep.subr.mxu0 0.0
    %1463 = vmatpush1.msra.mxu0 0.0
    %1464 = vmatprep.subr.mxu0 0.0
    %1465 = vmatpush1.msra.mxu0 0.0
    %1466 = vmatprep.subr.mxu0 0.0
    %1467 = vmatpush1.msra.mxu0 0.0
    %1468 = vmatprep.subr.mxu0 0.0
    %1469 = vmatpush1.msra.mxu0 %v395
    %1470 = vmatprep.subr.mxu0 0.0
    %1471 = vmatpush1.msra.mxu0 %v394
    %1472 = vmatprep.subr.mxu0 0.0
    %1473 = vmatpush1.msra.mxu0 %v393
    %1474 = vmatprep.subr.mxu0 0.0
    %1475 = vmatpush1.msra.mxu0 %v392
    %1476 = vmatprep.subr.mxu0 0.0
    %1477 = vmatpush2.msra.mxu0 0.0
    %1478 = vmatprep.subr.mxu0 0.0
    %1479 = vmatpush2.msra.mxu0 0.0
    %1480 = vmatprep.subr.mxu0 0.0
    %1481 = vmatpush2.msra.mxu0 0.0
    %1482 = vmatprep.subr.mxu0 0.0
    %1483 = vmatpush2.msra.mxu0 0.0
    %1484 = vmatprep.subr.mxu0 0.0
    %1485 = vmatpush2.msra.mxu0 0.0
    %1486 = vmatprep.subr.mxu0 0.0
    %1487 = vmatpush2.msra.mxu0 0.0
    %1488 = vmatprep.subr.mxu0 0.0
    %1489 = vmatpush2.msra.mxu0 0.0
    %1490 = vmatprep.subr.mxu0 0.0
    %1491 = vmatpush2.msra.mxu0 0.0
    %1492 = vmatprep.subr.mxu0 0.0
    %1493 = vmatpush2.msra.mxu0 0.0
    %1494 = vmatprep.subr.mxu0 0.0
    %1495 = vmatpush2.msra.mxu0 0.0
    %1496 = vmatprep.subr.mxu0 0.0
    %1497 = vmatpush2.msra.mxu0 0.0
    %1498 = vmatprep.subr.mxu0 0.0
    %1499 = vmatpush2.msra.mxu0 0.0
    %1500 = vmatprep.subr.mxu0 0.0
    %1501 = vmatpush2.msra.mxu0 0.0
    %1502 = vmatprep.subr.mxu0 0.0
    %1503 = vmatpush2.msra.mxu0 0.0
    %1504 = vmatprep.subr.mxu0 0.0
    %1505 = vmatpush2.msra.mxu0 0.0
    %1506 = vmatprep.subr.mxu0 0.0
    %1507 = vmatpush2.msra.mxu0 0.0
    %1508 = vmatprep.mubr.f32.mxu0 0.0
    %1509 = vmatmul.mubr.f32.gmra.mxu0 %v1372
    %v1510 = vpop.f32.mrf.mxu0
    %v1511 = vadd.f32 0.0, %v1510
    %v1512 = vpop.f32.mrf.mxu0
    %1513 = vdwg.mxu0
    %1514 = vmatprep.subr.mxu0 0.0
    %1515 = vmatpush1.msra.mxu0 0.0
    %1516 = vmatprep.subr.mxu0 0.0
    %1517 = vmatpush1.msra.mxu0 0.0
    %1518 = vmatprep.subr.mxu0 0.0
    %1519 = vmatpush1.msra.mxu0 0.0
    %1520 = vmatprep.subr.mxu0 0.0
    %1521 = vmatpush1.msra.mxu0 0.0
    %1522 = vmatprep.subr.mxu0 0.0
    %1523 = vmatpush1.msra.mxu0 0.0
    %1524 = vmatprep.subr.mxu0 0.0
    %1525 = vmatpush1.msra.mxu0 0.0
    %1526 = vmatprep.subr.mxu0 0.0
    %1527 = vmatpush1.msra.mxu0 0.0
    %1528 = vmatprep.subr.mxu0 0.0
    %1529 = vmatpush1.msra.mxu0 0.0
    %1530 = vmatprep.subr.mxu0 0.0
    %1531 = vmatpush1.msra.mxu0 0.0
    %1532 = vmatprep.subr.mxu0 0.0
    %1533 = vmatpush1.msra.mxu0 0.0
    %1534 = vmatprep.subr.mxu0 0.0
    %1535 = vmatpush1.msra.mxu0 0.0
    %1536 = vmatprep.subr.mxu0 0.0
    %1537 = vmatpush1.msra.mxu0 0.0
    %1538 = vmatprep.subr.mxu0 0.0
    %1539 = vmatpush1.msra.mxu0 %v400
    %1540 = vmatprep.subr.mxu0 0.0
    %1541 = vmatpush1.msra.mxu0 %v399
    %1542 = vmatprep.subr.mxu0 0.0
    %1543 = vmatpush1.msra.mxu0 %v398
    %1544 = vmatprep.subr.mxu0 0.0
    %1545 = vmatpush1.msra.mxu0 %v397
    %1546 = vmatprep.subr.mxu0 0.0
    %1547 = vmatpush2.msra.mxu0 0.0
    %1548 = vmatprep.subr.mxu0 0.0
    %1549 = vmatpush2.msra.mxu0 0.0
    %1550 = vmatprep.subr.mxu0 0.0
    %1551 = vmatpush2.msra.mxu0 0.0
    %1552 = vmatprep.subr.mxu0 0.0
    %1553 = vmatpush2.msra.mxu0 0.0
    %1554 = vmatprep.subr.mxu0 0.0
    %1555 = vmatpush2.msra.mxu0 0.0
    %1556 = vmatprep.subr.mxu0 0.0
    %1557 = vmatpush2.msra.mxu0 0.0
    %1558 = vmatprep.subr.mxu0 0.0
    %1559 = vmatpush2.msra.mxu0 0.0
    %1560 = vmatprep.subr.mxu0 0.0
    %1561 = vmatpush2.msra.mxu0 0.0
    %1562 = vmatprep.subr.mxu0 0.0
    %1563 = vmatpush2.msra.mxu0 0.0
    %1564 = vmatprep.subr.mxu0 0.0
    %1565 = vmatpush2.msra.mxu0 0.0
    %1566 = vmatprep.subr.mxu0 0.0
    %1567 = vmatpush2.msra.mxu0 0.0
    %1568 = vmatprep.subr.mxu0 0.0
    %1569 = vmatpush2.msra.mxu0 0.0
    %1570 = vmatprep.subr.mxu0 0.0
    %1571 = vmatpush2.msra.mxu0 0.0
    %1572 = vmatprep.subr.mxu0 0.0
    %1573 = vmatpush2.msra.mxu0 0.0
    %1574 = vmatprep.subr.mxu0 0.0
    %1575 = vmatpush2.msra.mxu0 0.0
    %1576 = vmatprep.subr.mxu0 0.0
    %1577 = vmatpush2.msra.mxu0 0.0
    %1578 = vmatprep.mubr.f32.mxu0 0.0
    %1579 = vmatmul.mubr.f32.gmra.mxu0 %v1372
    %v1580 = vpop.f32.mrf.mxu0
    %v1581 = vadd.f32 %v548, %v1580
    %v1582 = vpop.f32.mrf.mxu0
    %1583 = vdwg.mxu0
    %s1584 = scalar_lea.vmem [#allocation3], 8
    %v1585 = vld [vmem:[%s1584] sm:$0x3]
    %v1586 = vadd.f32 %v1585, %v1441
    %v1587 = vxor.u32 %v1586, 2147483648
    %v1588 = vmul.f32 %v1587, 1.442695
    %v1589 = vpow.pop %v1588
    %v1590 = vadd.f32 %v1589, 1.0
    %v1591 = vrcp.pop %v1590
    %v1592 = vmul.f32 1.0, %v1591
    %s1593 = scalar_lea.vmem [#allocation4], 8
    %v1594 = vld [vmem:[%s1593] sm:$0x3]
    %v1595 = vadd.f32 %v1594, %v1511
    %v1596 = vxor.u32 %v1595, 2147483648
    %v1597 = vmul.f32 %v1596, 1.442695
    %v1598 = vpow.pop %v1597
    %v1599 = vadd.f32 %v1598, 1.0
    %v1600 = vrcp.pop %v1599
    %v1601 = vmul.f32 1.0, %v1600
    %s1602 = scalar_lea.vmem [#allocation5], 8
    %v1603 = vld [vmem:[%s1602] sm:$0x3]
    %v1604 = vmul.f32 %v1592, %v1581
    %v1605 = vadd.f32 %v1603, %v1604
    %v1606 = vtanh.pop %v1605
    %v1607 = vsub.f32 1.0, %v1601
    %v1608 = vmul.f32 %v1607, %v1606
    %v1609 = vmul.f32 %v1601, %v1368
    %v1610 = vadd.f32 %v1608, %v1609
    %s1611 = scalar_lea.vmem [#allocation2], 8
    %1612 = vst.msk [vmem:[%s1611] sm:$0x3] %vm643, %v1610
    %v1614 = vsel %vm210, %v1610, 0
    %1616 = vmatprep.subr.mxu0 0.0
    %1617 = vmatpush1.msra.mxu0 0.0
    %1618 = vmatprep.subr.mxu0 0.0
    %1619 = vmatpush1.msra.mxu0 0.0
    %1620 = vmatprep.subr.mxu0 0.0
    %1621 = vmatpush1.msra.mxu0 0.0
    %1622 = vmatprep.subr.mxu0 0.0
    %1623 = vmatpush1.msra.mxu0 0.0
    %1624 = vmatprep.subr.mxu0 0.0
    %1625 = vmatpush1.msra.mxu0 0.0
    %1626 = vmatprep.subr.mxu0 0.0
    %1627 = vmatpush1.msra.mxu0 0.0
    %1628 = vmatprep.subr.mxu0 0.0
    %1629 = vmatpush1.msra.mxu0 0.0
    %1630 = vmatprep.subr.mxu0 0.0
    %1631 = vmatpush1.msra.mxu0 0.0
    %1632 = vmatprep.subr.mxu0 0.0
    %1633 = vmatpush1.msra.mxu0 0.0
    %1634 = vmatprep.subr.mxu0 0.0
    %1635 = vmatpush1.msra.mxu0 0.0
    %1636 = vmatprep.subr.mxu0 0.0
    %1637 = vmatpush1.msra.mxu0 0.0
    %1638 = vmatprep.subr.mxu0 0.0
    %1639 = vmatpush1.msra.mxu0 0.0
    %1640 = vmatprep.subr.mxu0 0.0
    %1641 = vmatpush1.msra.mxu0 %v390
    %1642 = vmatprep.subr.mxu0 0.0
    %1643 = vmatpush1.msra.mxu0 %v389
    %1644 = vmatprep.subr.mxu0 0.0
    %1645 = vmatpush1.msra.mxu0 %v388
    %1646 = vmatprep.subr.mxu0 0.0
    %1647 = vmatpush1.msra.mxu0 %v387
    %1648 = vmatprep.subr.mxu0 0.0
    %1649 = vmatpush2.msra.mxu0 0.0
    %1650 = vmatprep.subr.mxu0 0.0
    %1651 = vmatpush2.msra.mxu0 0.0
    %1652 = vmatprep.subr.mxu0 0.0
    %1653 = vmatpush2.msra.mxu0 0.0
    %1654 = vmatprep.subr.mxu0 0.0
    %1655 = vmatpush2.msra.mxu0 0.0
    %1656 = vmatprep.subr.mxu0 0.0
    %1657 = vmatpush2.msra.mxu0 0.0
    %1658 = vmatprep.subr.mxu0 0.0
    %1659 = vmatpush2.msra.mxu0 0.0
    %1660 = vmatprep.subr.mxu0 0.0
    %1661 = vmatpush2.msra.mxu0 0.0
    %1662 = vmatprep.subr.mxu0 0.0
    %1663 = vmatpush2.msra.mxu0 0.0
    %1664 = vmatprep.subr.mxu0 0.0
    %1665 = vmatpush2.msra.mxu0 0.0
    %1666 = vmatprep.subr.mxu0 0.0
    %1667 = vmatpush2.msra.mxu0 0.0
    %1668 = vmatprep.subr.mxu0 0.0
    %1669 = vmatpush2.msra.mxu0 0.0
    %1670 = vmatprep.subr.mxu0 0.0
    %1671 = vmatpush2.msra.mxu0 0.0
    %1672 = vmatprep.subr.mxu0 0.0
    %1673 = vmatpush2.msra.mxu0 0.0
    %1674 = vmatprep.subr.mxu0 0.0
    %1675 = vmatpush2.msra.mxu0 0.0
    %1676 = vmatprep.subr.mxu0 0.0
    %1677 = vmatpush2.msra.mxu0 0.0
    %1678 = vmatprep.subr.mxu0 0.0
    %1679 = vmatpush2.msra.mxu0 0.0
    %1680 = vmatprep.mubr.f32.mxu0 0.0
    %1681 = vmatmul.mubr.f32.gmra.mxu0 %v1614
    %v1682 = vpop.f32.mrf.mxu0
    %v1683 = vadd.f32 0.0, %v1682
    %v1684 = vpop.f32.mrf.mxu0
    %1685 = vdwg.mxu0
    %1686 = vmatprep.subr.mxu0 0.0
    %1687 = vmatpush1.msra.mxu0 0.0
    %1688 = vmatprep.subr.mxu0 0.0
    %1689 = vmatpush1.msra.mxu0 0.0
    %1690 = vmatprep.subr.mxu0 0.0
    %1691 = vmatpush1.msra.mxu0 0.0
    %1692 = vmatprep.subr.mxu0 0.0
    %1693 = vmatpush1.msra.mxu0 0.0
    %1694 = vmatprep.subr.mxu0 0.0
    %1695 = vmatpush1.msra.mxu0 0.0
    %1696 = vmatprep.subr.mxu0 0.0
    %1697 = vmatpush1.msra.mxu0 0.0
    %1698 = vmatprep.subr.mxu0 0.0
    %1699 = vmatpush1.msra.mxu0 0.0
    %1700 = vmatprep.subr.mxu0 0.0
    %1701 = vmatpush1.msra.mxu0 0.0
    %1702 = vmatprep.subr.mxu0 0.0
    %1703 = vmatpush1.msra.mxu0 0.0
    %1704 = vmatprep.subr.mxu0 0.0
    %1705 = vmatpush1.msra.mxu0 0.0
    %1706 = vmatprep.subr.mxu0 0.0
    %1707 = vmatpush1.msra.mxu0 0.0
    %1708 = vmatprep.subr.mxu0 0.0
    %1709 = vmatpush1.msra.mxu0 0.0
    %1710 = vmatprep.subr.mxu0 0.0
    %1711 = vmatpush1.msra.mxu0 %v395
    %1712 = vmatprep.subr.mxu0 0.0
    %1713 = vmatpush1.msra.mxu0 %v394
    %1714 = vmatprep.subr.mxu0 0.0
    %1715 = vmatpush1.msra.mxu0 %v393
    %1716 = vmatprep.subr.mxu0 0.0
    %1717 = vmatpush1.msra.mxu0 %v392
    %1718 = vmatprep.subr.mxu0 0.0
    %1719 = vmatpush2.msra.mxu0 0.0
    %1720 = vmatprep.subr.mxu0 0.0
    %1721 = vmatpush2.msra.mxu0 0.0
    %1722 = vmatprep.subr.mxu0 0.0
    %1723 = vmatpush2.msra.mxu0 0.0
    %1724 = vmatprep.subr.mxu0 0.0
    %1725 = vmatpush2.msra.mxu0 0.0
    %1726 = vmatprep.subr.mxu0 0.0
    %1727 = vmatpush2.msra.mxu0 0.0
    %1728 = vmatprep.subr.mxu0 0.0
    %1729 = vmatpush2.msra.mxu0 0.0
    %1730 = vmatprep.subr.mxu0 0.0
    %1731 = vmatpush2.msra.mxu0 0.0
    %1732 = vmatprep.subr.mxu0 0.0
    %1733 = vmatpush2.msra.mxu0 0.0
    %1734 = vmatprep.subr.mxu0 0.0
    %1735 = vmatpush2.msra.mxu0 0.0
    %1736 = vmatprep.subr.mxu0 0.0
    %1737 = vmatpush2.msra.mxu0 0.0
    %1738 = vmatprep.subr.mxu0 0.0
    %1739 = vmatpush2.msra.mxu0 0.0
    %1740 = vmatprep.subr.mxu0 0.0
    %1741 = vmatpush2.msra.mxu0 0.0
    %1742 = vmatprep.subr.mxu0 0.0
    %1743 = vmatpush2.msra.mxu0 0.0
    %1744 = vmatprep.subr.mxu0 0.0
    %1745 = vmatpush2.msra.mxu0 0.0
    %1746 = vmatprep.subr.mxu0 0.0
    %1747 = vmatpush2.msra.mxu0 0.0
    %1748 = vmatprep.subr.mxu0 0.0
    %1749 = vmatpush2.msra.mxu0 0.0
    %1750 = vmatprep.mubr.f32.mxu0 0.0
    %1751 = vmatmul.mubr.f32.gmra.mxu0 %v1614
    %v1752 = vpop.f32.mrf.mxu0
    %v1753 = vadd.f32 0.0, %v1752
    %v1754 = vpop.f32.mrf.mxu0
    %1755 = vdwg.mxu0
    %1756 = vmatprep.subr.mxu0 0.0
    %1757 = vmatpush1.msra.mxu0 0.0
    %1758 = vmatprep.subr.mxu0 0.0
    %1759 = vmatpush1.msra.mxu0 0.0
    %1760 = vmatprep.subr.mxu0 0.0
    %1761 = vmatpush1.msra.mxu0 0.0
    %1762 = vmatprep.subr.mxu0 0.0
    %1763 = vmatpush1.msra.mxu0 0.0
    %1764 = vmatprep.subr.mxu0 0.0
    %1765 = vmatpush1.msra.mxu0 0.0
    %1766 = vmatprep.subr.mxu0 0.0
    %1767 = vmatpush1.msra.mxu0 0.0
    %1768 = vmatprep.subr.mxu0 0.0
    %1769 = vmatpush1.msra.mxu0 0.0
    %1770 = vmatprep.subr.mxu0 0.0
    %1771 = vmatpush1.msra.mxu0 0.0
    %1772 = vmatprep.subr.mxu0 0.0
    %1773 = vmatpush1.msra.mxu0 0.0
    %1774 = vmatprep.subr.mxu0 0.0
    %1775 = vmatpush1.msra.mxu0 0.0
    %1776 = vmatprep.subr.mxu0 0.0
    %1777 = vmatpush1.msra.mxu0 0.0
    %1778 = vmatprep.subr.mxu0 0.0
    %1779 = vmatpush1.msra.mxu0 0.0
    %1780 = vmatprep.subr.mxu0 0.0
    %1781 = vmatpush1.msra.mxu0 %v400
    %1782 = vmatprep.subr.mxu0 0.0
    %1783 = vmatpush1.msra.mxu0 %v399
    %1784 = vmatprep.subr.mxu0 0.0
    %1785 = vmatpush1.msra.mxu0 %v398
    %1786 = vmatprep.subr.mxu0 0.0
    %1787 = vmatpush1.msra.mxu0 %v397
    %1788 = vmatprep.subr.mxu0 0.0
    %1789 = vmatpush2.msra.mxu0 0.0
    %1790 = vmatprep.subr.mxu0 0.0
    %1791 = vmatpush2.msra.mxu0 0.0
    %1792 = vmatprep.subr.mxu0 0.0
    %1793 = vmatpush2.msra.mxu0 0.0
    %1794 = vmatprep.subr.mxu0 0.0
    %1795 = vmatpush2.msra.mxu0 0.0
    %1796 = vmatprep.subr.mxu0 0.0
    %1797 = vmatpush2.msra.mxu0 0.0
    %1798 = vmatprep.subr.mxu0 0.0
    %1799 = vmatpush2.msra.mxu0 0.0
    %1800 = vmatprep.subr.mxu0 0.0
    %1801 = vmatpush2.msra.mxu0 0.0
    %1802 = vmatprep.subr.mxu0 0.0
    %1803 = vmatpush2.msra.mxu0 0.0
    %1804 = vmatprep.subr.mxu0 0.0
    %1805 = vmatpush2.msra.mxu0 0.0
    %1806 = vmatprep.subr.mxu0 0.0
    %1807 = vmatpush2.msra.mxu0 0.0
    %1808 = vmatprep.subr.mxu0 0.0
    %1809 = vmatpush2.msra.mxu0 0.0
    %1810 = vmatprep.subr.mxu0 0.0
    %1811 = vmatpush2.msra.mxu0 0.0
    %1812 = vmatprep.subr.mxu0 0.0
    %1813 = vmatpush2.msra.mxu0 0.0
    %1814 = vmatprep.subr.mxu0 0.0
    %1815 = vmatpush2.msra.mxu0 0.0
    %1816 = vmatprep.subr.mxu0 0.0
    %1817 = vmatpush2.msra.mxu0 0.0
    %1818 = vmatprep.subr.mxu0 0.0
    %1819 = vmatpush2.msra.mxu0 0.0
    %1820 = vmatprep.mubr.f32.mxu0 0.0
    %1821 = vmatmul.mubr.f32.gmra.mxu0 %v1614
    %v1822 = vpop.f32.mrf.mxu0
    %v1823 = vadd.f32 %v548, %v1822
    %v1824 = vpop.f32.mrf.mxu0
    %1825 = vdwg.mxu0
    %s1826 = scalar_lea.vmem [#allocation3], 10
    %v1827 = vld [vmem:[%s1826] sm:$0x3]
    %v1828 = vadd.f32 %v1827, %v1683
    %v1829 = vxor.u32 %v1828, 2147483648
    %v1830 = vmul.f32 %v1829, 1.442695
    %v1831 = vpow.pop %v1830
    %v1832 = vadd.f32 %v1831, 1.0
    %v1833 = vrcp.pop %v1832
    %v1834 = vmul.f32 1.0, %v1833
    %s1835 = scalar_lea.vmem [#allocation4], 10
    %v1836 = vld [vmem:[%s1835] sm:$0x3]
    %v1837 = vadd.f32 %v1836, %v1753
    %v1838 = vxor.u32 %v1837, 2147483648
    %v1839 = vmul.f32 %v1838, 1.442695
    %v1840 = vpow.pop %v1839
    %v1841 = vadd.f32 %v1840, 1.0
    %v1842 = vrcp.pop %v1841
    %v1843 = vmul.f32 1.0, %v1842
    %s1844 = scalar_lea.vmem [#allocation5], 10
    %v1845 = vld [vmem:[%s1844] sm:$0x3]
    %v1846 = vmul.f32 %v1834, %v1823
    %v1847 = vadd.f32 %v1845, %v1846
    %v1848 = vtanh.pop %v1847
    %v1849 = vsub.f32 1.0, %v1843
    %v1850 = vmul.f32 %v1849, %v1848
    %v1851 = vmul.f32 %v1843, %v1610
    %v1852 = vadd.f32 %v1850, %v1851
    %s1853 = scalar_lea.vmem [#allocation2], 10
    %1854 = vst.msk [vmem:[%s1853] sm:$0x3] %vm643, %v1852
    %v1856 = vsel %vm210, %v1852, 0
    %1858 = vmatprep.subr.mxu0 0.0
    %1859 = vmatpush1.msra.mxu0 0.0
    %1860 = vmatprep.subr.mxu0 0.0
    %1861 = vmatpush1.msra.mxu0 0.0
    %1862 = vmatprep.subr.mxu0 0.0
    %1863 = vmatpush1.msra.mxu0 0.0
    %1864 = vmatprep.subr.mxu0 0.0
    %1865 = vmatpush1.msra.mxu0 0.0
    %1866 = vmatprep.subr.mxu0 0.0
    %1867 = vmatpush1.msra.mxu0 0.0
    %1868 = vmatprep.subr.mxu0 0.0
    %1869 = vmatpush1.msra.mxu0 0.0
    %1870 = vmatprep.subr.mxu0 0.0
    %1871 = vmatpush1.msra.mxu0 0.0
    %1872 = vmatprep.subr.mxu0 0.0
    %1873 = vmatpush1.msra.mxu0 0.0
    %1874 = vmatprep.subr.mxu0 0.0
    %1875 = vmatpush1.msra.mxu0 0.0
    %1876 = vmatprep.subr.mxu0 0.0
    %1877 = vmatpush1.msra.mxu0 0.0
    %1878 = vmatprep.subr.mxu0 0.0
    %1879 = vmatpush1.msra.mxu0 0.0
    %1880 = vmatprep.subr.mxu0 0.0
    %1881 = vmatpush1.msra.mxu0 0.0
    %1882 = vmatprep.subr.mxu0 0.0
    %1883 = vmatpush1.msra.mxu0 %v390
    %1884 = vmatprep.subr.mxu0 0.0
    %1885 = vmatpush1.msra.mxu0 %v389
    %1886 = vmatprep.subr.mxu0 0.0
    %1887 = vmatpush1.msra.mxu0 %v388
    %1888 = vmatprep.subr.mxu0 0.0
    %1889 = vmatpush1.msra.mxu0 %v387
    %1890 = vmatprep.subr.mxu0 0.0
    %1891 = vmatpush2.msra.mxu0 0.0
    %1892 = vmatprep.subr.mxu0 0.0
    %1893 = vmatpush2.msra.mxu0 0.0
    %1894 = vmatprep.subr.mxu0 0.0
    %1895 = vmatpush2.msra.mxu0 0.0
    %1896 = vmatprep.subr.mxu0 0.0
    %1897 = vmatpush2.msra.mxu0 0.0
    %1898 = vmatprep.subr.mxu0 0.0
    %1899 = vmatpush2.msra.mxu0 0.0
    %1900 = vmatprep.subr.mxu0 0.0
    %1901 = vmatpush2.msra.mxu0 0.0
    %1902 = vmatprep.subr.mxu0 0.0
    %1903 = vmatpush2.msra.mxu0 0.0
    %1904 = vmatprep.subr.mxu0 0.0
    %1905 = vmatpush2.msra.mxu0 0.0
    %1906 = vmatprep.subr.mxu0 0.0
    %1907 = vmatpush2.msra.mxu0 0.0
    %1908 = vmatprep.subr.mxu0 0.0
    %1909 = vmatpush2.msra.mxu0 0.0
    %1910 = vmatprep.subr.mxu0 0.0
    %1911 = vmatpush2.msra.mxu0 0.0
    %1912 = vmatprep.subr.mxu0 0.0
    %1913 = vmatpush2.msra.mxu0 0.0
    %1914 = vmatprep.subr.mxu0 0.0
    %1915 = vmatpush2.msra.mxu0 0.0
    %1916 = vmatprep.subr.mxu0 0.0
    %1917 = vmatpush2.msra.mxu0 0.0
    %1918 = vmatprep.subr.mxu0 0.0
    %1919 = vmatpush2.msra.mxu0 0.0
    %1920 = vmatprep.subr.mxu0 0.0
    %1921 = vmatpush2.msra.mxu0 0.0
    %1922 = vmatprep.mubr.f32.mxu0 0.0
    %1923 = vmatmul.mubr.f32.gmra.mxu0 %v1856
    %v1924 = vpop.f32.mrf.mxu0
    %v1925 = vadd.f32 0.0, %v1924
    %v1926 = vpop.f32.mrf.mxu0
    %1927 = vdwg.mxu0
    %1928 = vmatprep.subr.mxu0 0.0
    %1929 = vmatpush1.msra.mxu0 0.0
    %1930 = vmatprep.subr.mxu0 0.0
    %1931 = vmatpush1.msra.mxu0 0.0
    %1932 = vmatprep.subr.mxu0 0.0
    %1933 = vmatpush1.msra.mxu0 0.0
    %1934 = vmatprep.subr.mxu0 0.0
    %1935 = vmatpush1.msra.mxu0 0.0
    %1936 = vmatprep.subr.mxu0 0.0
    %1937 = vmatpush1.msra.mxu0 0.0
    %1938 = vmatprep.subr.mxu0 0.0
    %1939 = vmatpush1.msra.mxu0 0.0
    %1940 = vmatprep.subr.mxu0 0.0
    %1941 = vmatpush1.msra.mxu0 0.0
    %1942 = vmatprep.subr.mxu0 0.0
    %1943 = vmatpush1.msra.mxu0 0.0
    %1944 = vmatprep.subr.mxu0 0.0
    %1945 = vmatpush1.msra.mxu0 0.0
    %1946 = vmatprep.subr.mxu0 0.0
    %1947 = vmatpush1.msra.mxu0 0.0
    %1948 = vmatprep.subr.mxu0 0.0
    %1949 = vmatpush1.msra.mxu0 0.0
    %1950 = vmatprep.subr.mxu0 0.0
    %1951 = vmatpush1.msra.mxu0 0.0
    %1952 = vmatprep.subr.mxu0 0.0
    %1953 = vmatpush1.msra.mxu0 %v395
    %1954 = vmatprep.subr.mxu0 0.0
    %1955 = vmatpush1.msra.mxu0 %v394
    %1956 = vmatprep.subr.mxu0 0.0
    %1957 = vmatpush1.msra.mxu0 %v393
    %1958 = vmatprep.subr.mxu0 0.0
    %1959 = vmatpush1.msra.mxu0 %v392
    %1960 = vmatprep.subr.mxu0 0.0
    %1961 = vmatpush2.msra.mxu0 0.0
    %1962 = vmatprep.subr.mxu0 0.0
    %1963 = vmatpush2.msra.mxu0 0.0
    %1964 = vmatprep.subr.mxu0 0.0
    %1965 = vmatpush2.msra.mxu0 0.0
    %1966 = vmatprep.subr.mxu0 0.0
    %1967 = vmatpush2.msra.mxu0 0.0
    %1968 = vmatprep.subr.mxu0 0.0
    %1969 = vmatpush2.msra.mxu0 0.0
    %1970 = vmatprep.subr.mxu0 0.0
    %1971 = vmatpush2.msra.mxu0 0.0
    %1972 = vmatprep.subr.mxu0 0.0
    %1973 = vmatpush2.msra.mxu0 0.0
    %1974 = vmatprep.subr.mxu0 0.0
    %1975 = vmatpush2.msra.mxu0 0.0
    %1976 = vmatprep.subr.mxu0 0.0
    %1977 = vmatpush2.msra.mxu0 0.0
    %1978 = vmatprep.subr.mxu0 0.0
    %1979 = vmatpush2.msra.mxu0 0.0
    %1980 = vmatprep.subr.mxu0 0.0
    %1981 = vmatpush2.msra.mxu0 0.0
    %1982 = vmatprep.subr.mxu0 0.0
    %1983 = vmatpush2.msra.mxu0 0.0
    %1984 = vmatprep.subr.mxu0 0.0
    %1985 = vmatpush2.msra.mxu0 0.0
    %1986 = vmatprep.subr.mxu0 0.0
    %1987 = vmatpush2.msra.mxu0 0.0
    %1988 = vmatprep.subr.mxu0 0.0
    %1989 = vmatpush2.msra.mxu0 0.0
    %1990 = vmatprep.subr.mxu0 0.0
    %1991 = vmatpush2.msra.mxu0 0.0
    %1992 = vmatprep.mubr.f32.mxu0 0.0
    %1993 = vmatmul.mubr.f32.gmra.mxu0 %v1856
    %v1994 = vpop.f32.mrf.mxu0
    %v1995 = vadd.f32 0.0, %v1994
    %v1996 = vpop.f32.mrf.mxu0
    %1997 = vdwg.mxu0
    %1998 = vmatprep.subr.mxu0 0.0
    %1999 = vmatpush1.msra.mxu0 0.0
    %2000 = vmatprep.subr.mxu0 0.0
    %2001 = vmatpush1.msra.mxu0 0.0
    %2002 = vmatprep.subr.mxu0 0.0
    %2003 = vmatpush1.msra.mxu0 0.0
    %2004 = vmatprep.subr.mxu0 0.0
    %2005 = vmatpush1.msra.mxu0 0.0
    %2006 = vmatprep.subr.mxu0 0.0
    %2007 = vmatpush1.msra.mxu0 0.0
    %2008 = vmatprep.subr.mxu0 0.0
    %2009 = vmatpush1.msra.mxu0 0.0
    %2010 = vmatprep.subr.mxu0 0.0
    %2011 = vmatpush1.msra.mxu0 0.0
    %2012 = vmatprep.subr.mxu0 0.0
    %2013 = vmatpush1.msra.mxu0 0.0
    %2014 = vmatprep.subr.mxu0 0.0
    %2015 = vmatpush1.msra.mxu0 0.0
    %2016 = vmatprep.subr.mxu0 0.0
    %2017 = vmatpush1.msra.mxu0 0.0
    %2018 = vmatprep.subr.mxu0 0.0
    %2019 = vmatpush1.msra.mxu0 0.0
    %2020 = vmatprep.subr.mxu0 0.0
    %2021 = vmatpush1.msra.mxu0 0.0
    %2022 = vmatprep.subr.mxu0 0.0
    %2023 = vmatpush1.msra.mxu0 %v400
    %2024 = vmatprep.subr.mxu0 0.0
    %2025 = vmatpush1.msra.mxu0 %v399
    %2026 = vmatprep.subr.mxu0 0.0
    %2027 = vmatpush1.msra.mxu0 %v398
    %2028 = vmatprep.subr.mxu0 0.0
    %2029 = vmatpush1.msra.mxu0 %v397
    %2030 = vmatprep.subr.mxu0 0.0
    %2031 = vmatpush2.msra.mxu0 0.0
    %2032 = vmatprep.subr.mxu0 0.0
    %2033 = vmatpush2.msra.mxu0 0.0
    %2034 = vmatprep.subr.mxu0 0.0
    %2035 = vmatpush2.msra.mxu0 0.0
    %2036 = vmatprep.subr.mxu0 0.0
    %2037 = vmatpush2.msra.mxu0 0.0
    %2038 = vmatprep.subr.mxu0 0.0
    %2039 = vmatpush2.msra.mxu0 0.0
    %2040 = vmatprep.subr.mxu0 0.0
    %2041 = vmatpush2.msra.mxu0 0.0
    %2042 = vmatprep.subr.mxu0 0.0
    %2043 = vmatpush2.msra.mxu0 0.0
    %2044 = vmatprep.subr.mxu0 0.0
    %2045 = vmatpush2.msra.mxu0 0.0
    %2046 = vmatprep.subr.mxu0 0.0
    %2047 = vmatpush2.msra.mxu0 0.0
    %2048 = vmatprep.subr.mxu0 0.0
    %2049 = vmatpush2.msra.mxu0 0.0
    %2050 = vmatprep.subr.mxu0 0.0
    %2051 = vmatpush2.msra.mxu0 0.0
    %2052 = vmatprep.subr.mxu0 0.0
    %2053 = vmatpush2.msra.mxu0 0.0
    %2054 = vmatprep.subr.mxu0 0.0
    %2055 = vmatpush2.msra.mxu0 0.0
    %2056 = vmatprep.subr.mxu0 0.0
    %2057 = vmatpush2.msra.mxu0 0.0
    %2058 = vmatprep.subr.mxu0 0.0
    %2059 = vmatpush2.msra.mxu0 0.0
    %2060 = vmatprep.subr.mxu0 0.0
    %2061 = vmatpush2.msra.mxu0 0.0
    %2062 = vmatprep.mubr.f32.mxu0 0.0
    %2063 = vmatmul.mubr.f32.gmra.mxu0 %v1856
    %v2064 = vpop.f32.mrf.mxu0
    %v2065 = vadd.f32 %v548, %v2064
    %v2066 = vpop.f32.mrf.mxu0
    %2067 = vdwg.mxu0
    %s2068 = scalar_lea.vmem [#allocation3], 12
    %v2069 = vld [vmem:[%s2068] sm:$0x3]
    %v2070 = vadd.f32 %v2069, %v1925
    %v2071 = vxor.u32 %v2070, 2147483648
    %v2072 = vmul.f32 %v2071, 1.442695
    %v2073 = vpow.pop %v2072
    %v2074 = vadd.f32 %v2073, 1.0
    %v2075 = vrcp.pop %v2074
    %v2076 = vmul.f32 1.0, %v2075
    %s2077 = scalar_lea.vmem [#allocation4], 12
    %v2078 = vld [vmem:[%s2077] sm:$0x3]
    %v2079 = vadd.f32 %v2078, %v1995
    %v2080 = vxor.u32 %v2079, 2147483648
    %v2081 = vmul.f32 %v2080, 1.442695
    %v2082 = vpow.pop %v2081
    %v2083 = vadd.f32 %v2082, 1.0
    %v2084 = vrcp.pop %v2083
    %v2085 = vmul.f32 1.0, %v2084
    %s2086 = scalar_lea.vmem [#allocation5], 12
    %v2087 = vld [vmem:[%s2086] sm:$0x3]
    %v2088 = vmul.f32 %v2076, %v2065
    %v2089 = vadd.f32 %v2087, %v2088
    %v2090 = vtanh.pop %v2089
    %v2091 = vsub.f32 1.0, %v2085
    %v2092 = vmul.f32 %v2091, %v2090
    %v2093 = vmul.f32 %v2085, %v1852
    %v2094 = vadd.f32 %v2092, %v2093
    %s2095 = scalar_lea.vmem [#allocation2], 12
    %2096 = vst.msk [vmem:[%s2095] sm:$0x3] %vm643, %v2094
    %v2098 = vsel %vm210, %v2094, 0
    %2100 = vmatprep.subr.mxu0 0.0
    %2101 = vmatpush1.msra.mxu0 0.0
    %2102 = vmatprep.subr.mxu0 0.0
    %2103 = vmatpush1.msra.mxu0 0.0
    %2104 = vmatprep.subr.mxu0 0.0
    %2105 = vmatpush1.msra.mxu0 0.0
    %2106 = vmatprep.subr.mxu0 0.0
    %2107 = vmatpush1.msra.mxu0 0.0
    %2108 = vmatprep.subr.mxu0 0.0
    %2109 = vmatpush1.msra.mxu0 0.0
    %2110 = vmatprep.subr.mxu0 0.0
    %2111 = vmatpush1.msra.mxu0 0.0
    %2112 = vmatprep.subr.mxu0 0.0
    %2113 = vmatpush1.msra.mxu0 0.0
    %2114 = vmatprep.subr.mxu0 0.0
    %2115 = vmatpush1.msra.mxu0 0.0
    %2116 = vmatprep.subr.mxu0 0.0
    %2117 = vmatpush1.msra.mxu0 0.0
    %2118 = vmatprep.subr.mxu0 0.0
    %2119 = vmatpush1.msra.mxu0 0.0
    %2120 = vmatprep.subr.mxu0 0.0
    %2121 = vmatpush1.msra.mxu0 0.0
    %2122 = vmatprep.subr.mxu0 0.0
    %2123 = vmatpush1.msra.mxu0 0.0
    %2124 = vmatprep.subr.mxu0 0.0
    %2125 = vmatpush1.msra.mxu0 %v390
    %2126 = vmatprep.subr.mxu0 0.0
    %2127 = vmatpush1.msra.mxu0 %v389
    %2128 = vmatprep.subr.mxu0 0.0
    %2129 = vmatpush1.msra.mxu0 %v388
    %2130 = vmatprep.subr.mxu0 0.0
    %2131 = vmatpush1.msra.mxu0 %v387
    %2132 = vmatprep.subr.mxu0 0.0
    %2133 = vmatpush2.msra.mxu0 0.0
    %2134 = vmatprep.subr.mxu0 0.0
    %2135 = vmatpush2.msra.mxu0 0.0
    %2136 = vmatprep.subr.mxu0 0.0
    %2137 = vmatpush2.msra.mxu0 0.0
    %2138 = vmatprep.subr.mxu0 0.0
    %2139 = vmatpush2.msra.mxu0 0.0
    %2140 = vmatprep.subr.mxu0 0.0
    %2141 = vmatpush2.msra.mxu0 0.0
    %2142 = vmatprep.subr.mxu0 0.0
    %2143 = vmatpush2.msra.mxu0 0.0
    %2144 = vmatprep.subr.mxu0 0.0
    %2145 = vmatpush2.msra.mxu0 0.0
    %2146 = vmatprep.subr.mxu0 0.0
    %2147 = vmatpush2.msra.mxu0 0.0
    %2148 = vmatprep.subr.mxu0 0.0
    %2149 = vmatpush2.msra.mxu0 0.0
    %2150 = vmatprep.subr.mxu0 0.0
    %2151 = vmatpush2.msra.mxu0 0.0
    %2152 = vmatprep.subr.mxu0 0.0
    %2153 = vmatpush2.msra.mxu0 0.0
    %2154 = vmatprep.subr.mxu0 0.0
    %2155 = vmatpush2.msra.mxu0 0.0
    %2156 = vmatprep.subr.mxu0 0.0
    %2157 = vmatpush2.msra.mxu0 0.0
    %2158 = vmatprep.subr.mxu0 0.0
    %2159 = vmatpush2.msra.mxu0 0.0
    %2160 = vmatprep.subr.mxu0 0.0
    %2161 = vmatpush2.msra.mxu0 0.0
    %2162 = vmatprep.subr.mxu0 0.0
    %2163 = vmatpush2.msra.mxu0 0.0
    %2164 = vmatprep.mubr.f32.mxu0 0.0
    %2165 = vmatmul.mubr.f32.gmra.mxu0 %v2098
    %v2166 = vpop.f32.mrf.mxu0
    %v2167 = vadd.f32 0.0, %v2166
    %v2168 = vpop.f32.mrf.mxu0
    %2169 = vdwg.mxu0
    %2170 = vmatprep.subr.mxu0 0.0
    %2171 = vmatpush1.msra.mxu0 0.0
    %2172 = vmatprep.subr.mxu0 0.0
    %2173 = vmatpush1.msra.mxu0 0.0
    %2174 = vmatprep.subr.mxu0 0.0
    %2175 = vmatpush1.msra.mxu0 0.0
    %2176 = vmatprep.subr.mxu0 0.0
    %2177 = vmatpush1.msra.mxu0 0.0
    %2178 = vmatprep.subr.mxu0 0.0
    %2179 = vmatpush1.msra.mxu0 0.0
    %2180 = vmatprep.subr.mxu0 0.0
    %2181 = vmatpush1.msra.mxu0 0.0
    %2182 = vmatprep.subr.mxu0 0.0
    %2183 = vmatpush1.msra.mxu0 0.0
    %2184 = vmatprep.subr.mxu0 0.0
    %2185 = vmatpush1.msra.mxu0 0.0
    %2186 = vmatprep.subr.mxu0 0.0
    %2187 = vmatpush1.msra.mxu0 0.0
    %2188 = vmatprep.subr.mxu0 0.0
    %2189 = vmatpush1.msra.mxu0 0.0
    %2190 = vmatprep.subr.mxu0 0.0
    %2191 = vmatpush1.msra.mxu0 0.0
    %2192 = vmatprep.subr.mxu0 0.0
    %2193 = vmatpush1.msra.mxu0 0.0
    %2194 = vmatprep.subr.mxu0 0.0
    %2195 = vmatpush1.msra.mxu0 %v395
    %2196 = vmatprep.subr.mxu0 0.0
    %2197 = vmatpush1.msra.mxu0 %v394
    %2198 = vmatprep.subr.mxu0 0.0
    %2199 = vmatpush1.msra.mxu0 %v393
    %2200 = vmatprep.subr.mxu0 0.0
    %2201 = vmatpush1.msra.mxu0 %v392
    %2202 = vmatprep.subr.mxu0 0.0
    %2203 = vmatpush2.msra.mxu0 0.0
    %2204 = vmatprep.subr.mxu0 0.0
    %2205 = vmatpush2.msra.mxu0 0.0
    %2206 = vmatprep.subr.mxu0 0.0
    %2207 = vmatpush2.msra.mxu0 0.0
    %2208 = vmatprep.subr.mxu0 0.0
    %2209 = vmatpush2.msra.mxu0 0.0
    %2210 = vmatprep.subr.mxu0 0.0
    %2211 = vmatpush2.msra.mxu0 0.0
    %2212 = vmatprep.subr.mxu0 0.0
    %2213 = vmatpush2.msra.mxu0 0.0
    %2214 = vmatprep.subr.mxu0 0.0
    %2215 = vmatpush2.msra.mxu0 0.0
    %2216 = vmatprep.subr.mxu0 0.0
    %2217 = vmatpush2.msra.mxu0 0.0
    %2218 = vmatprep.subr.mxu0 0.0
    %2219 = vmatpush2.msra.mxu0 0.0
    %2220 = vmatprep.subr.mxu0 0.0
    %2221 = vmatpush2.msra.mxu0 0.0
    %2222 = vmatprep.subr.mxu0 0.0
    %2223 = vmatpush2.msra.mxu0 0.0
    %2224 = vmatprep.subr.mxu0 0.0
    %2225 = vmatpush2.msra.mxu0 0.0
    %2226 = vmatprep.subr.mxu0 0.0
    %2227 = vmatpush2.msra.mxu0 0.0
    %2228 = vmatprep.subr.mxu0 0.0
    %2229 = vmatpush2.msra.mxu0 0.0
    %2230 = vmatprep.subr.mxu0 0.0
    %2231 = vmatpush2.msra.mxu0 0.0
    %2232 = vmatprep.subr.mxu0 0.0
    %2233 = vmatpush2.msra.mxu0 0.0
    %2234 = vmatprep.mubr.f32.mxu0 0.0
    %2235 = vmatmul.mubr.f32.gmra.mxu0 %v2098
    %v2236 = vpop.f32.mrf.mxu0
    %v2237 = vadd.f32 0.0, %v2236
    %v2238 = vpop.f32.mrf.mxu0
    %2239 = vdwg.mxu0
    %2240 = vmatprep.subr.mxu0 0.0
    %2241 = vmatpush1.msra.mxu0 0.0
    %2242 = vmatprep.subr.mxu0 0.0
    %2243 = vmatpush1.msra.mxu0 0.0
    %2244 = vmatprep.subr.mxu0 0.0
    %2245 = vmatpush1.msra.mxu0 0.0
    %2246 = vmatprep.subr.mxu0 0.0
    %2247 = vmatpush1.msra.mxu0 0.0
    %2248 = vmatprep.subr.mxu0 0.0
    %2249 = vmatpush1.msra.mxu0 0.0
    %2250 = vmatprep.subr.mxu0 0.0
    %2251 = vmatpush1.msra.mxu0 0.0
    %2252 = vmatprep.subr.mxu0 0.0
    %2253 = vmatpush1.msra.mxu0 0.0
    %2254 = vmatprep.subr.mxu0 0.0
    %2255 = vmatpush1.msra.mxu0 0.0
    %2256 = vmatprep.subr.mxu0 0.0
    %2257 = vmatpush1.msra.mxu0 0.0
    %2258 = vmatprep.subr.mxu0 0.0
    %2259 = vmatpush1.msra.mxu0 0.0
    %2260 = vmatprep.subr.mxu0 0.0
    %2261 = vmatpush1.msra.mxu0 0.0
    %2262 = vmatprep.subr.mxu0 0.0
    %2263 = vmatpush1.msra.mxu0 0.0
    %2264 = vmatprep.subr.mxu0 0.0
    %2265 = vmatpush1.msra.mxu0 %v400
    %2266 = vmatprep.subr.mxu0 0.0
    %2267 = vmatpush1.msra.mxu0 %v399
    %2268 = vmatprep.subr.mxu0 0.0
    %2269 = vmatpush1.msra.mxu0 %v398
    %2270 = vmatprep.subr.mxu0 0.0
    %2271 = vmatpush1.msra.mxu0 %v397
    %2272 = vmatprep.subr.mxu0 0.0
    %2273 = vmatpush2.msra.mxu0 0.0
    %2274 = vmatprep.subr.mxu0 0.0
    %2275 = vmatpush2.msra.mxu0 0.0
    %2276 = vmatprep.subr.mxu0 0.0
    %2277 = vmatpush2.msra.mxu0 0.0
    %2278 = vmatprep.subr.mxu0 0.0
    %2279 = vmatpush2.msra.mxu0 0.0
    %2280 = vmatprep.subr.mxu0 0.0
    %2281 = vmatpush2.msra.mxu0 0.0
    %2282 = vmatprep.subr.mxu0 0.0
    %2283 = vmatpush2.msra.mxu0 0.0
    %2284 = vmatprep.subr.mxu0 0.0
    %2285 = vmatpush2.msra.mxu0 0.0
    %2286 = vmatprep.subr.mxu0 0.0
    %2287 = vmatpush2.msra.mxu0 0.0
    %2288 = vmatprep.subr.mxu0 0.0
    %2289 = vmatpush2.msra.mxu0 0.0
    %2290 = vmatprep.subr.mxu0 0.0
    %2291 = vmatpush2.msra.mxu0 0.0
    %2292 = vmatprep.subr.mxu0 0.0
    %2293 = vmatpush2.msra.mxu0 0.0
    %2294 = vmatprep.subr.mxu0 0.0
    %2295 = vmatpush2.msra.mxu0 0.0
    %2296 = vmatprep.subr.mxu0 0.0
    %2297 = vmatpush2.msra.mxu0 0.0
    %2298 = vmatprep.subr.mxu0 0.0
    %2299 = vmatpush2.msra.mxu0 0.0
    %2300 = vmatprep.subr.mxu0 0.0
    %2301 = vmatpush2.msra.mxu0 0.0
    %2302 = vmatprep.subr.mxu0 0.0
    %2303 = vmatpush2.msra.mxu0 0.0
    %2304 = vmatprep.mubr.f32.mxu0 0.0
    %2305 = vmatmul.mubr.f32.gmra.mxu0 %v2098
    %v2306 = vpop.f32.mrf.mxu0
    %v2307 = vadd.f32 %v548, %v2306
    %v2308 = vpop.f32.mrf.mxu0
    %2309 = vdwg.mxu0
    %s2310 = scalar_lea.vmem [#allocation3], 14
    %v2311 = vld [vmem:[%s2310] sm:$0x3]
    %v2312 = vadd.f32 %v2311, %v2167
    %v2313 = vxor.u32 %v2312, 2147483648
    %v2314 = vmul.f32 %v2313, 1.442695
    %v2315 = vpow.pop %v2314
    %v2316 = vadd.f32 %v2315, 1.0
    %v2317 = vrcp.pop %v2316
    %v2318 = vmul.f32 1.0, %v2317
    %s2319 = scalar_lea.vmem [#allocation4], 14
    %v2320 = vld [vmem:[%s2319] sm:$0x3]
    %v2321 = vadd.f32 %v2320, %v2237
    %v2322 = vxor.u32 %v2321, 2147483648
    %v2323 = vmul.f32 %v2322, 1.442695
    %v2324 = vpow.pop %v2323
    %v2325 = vadd.f32 %v2324, 1.0
    %v2326 = vrcp.pop %v2325
    %v2327 = vmul.f32 1.0, %v2326
    %s2328 = scalar_lea.vmem [#allocation5], 14
    %v2329 = vld [vmem:[%s2328] sm:$0x3]
    %v2330 = vmul.f32 %v2318, %v2307
    %v2331 = vadd.f32 %v2329, %v2330
    %v2332 = vtanh.pop %v2331
    %v2333 = vsub.f32 1.0, %v2327
    %v2334 = vmul.f32 %v2333, %v2332
    %v2335 = vmul.f32 %v2327, %v2094
    %v2336 = vadd.f32 %v2334, %v2335
    %s2337 = scalar_lea.vmem [#allocation2], 14
    %2338 = vst.msk [vmem:[%s2337] sm:$0x3] %vm643, %v2336
    %v2339 = vld [vmem:[#allocation2] sm:$0xff]
    %v2340 = vld [vmem:[#allocation2 + $0x8] sm:$0xff]
    %v2341 = vld [vmem:[%s6] sm:$0xf]
    %v2342 = vld [vmem:[#allocation12] sm:$0xff]
    %v2343 = vld [vmem:[#allocation12 + $0x8] sm:$0xff]
    %v2344 = vld [vmem:[#allocation12 + $0x10] sm:$0xff]
    %v2345 = vld [vmem:[#allocation12 + $0x18] sm:$0xff]
    %v2346 = vlaneseq
    %v2347 = vshrl.u32 %v2346, 7
    %v2348 = vsub.s32 0, %v2347
    %v2349 = vrot.slane %v2341, %v2348
    %v2351 = vsel %vm210, %v2339, 0
    %v2354 = vsel %vm210, %v2340, 0
    %2356 = vmatprep.subr.mxu0 0.0
    %2357 = vmatpush1.msra.mxu0 0.0
    %2358 = vmatprep.subr.mxu0 0.0
    %2359 = vmatpush1.msra.mxu0 0.0
    %2360 = vmatprep.subr.mxu0 0.0
    %2361 = vmatpush1.msra.mxu0 0.0
    %2362 = vmatprep.subr.mxu0 0.0
    %2363 = vmatpush1.msra.mxu0 0.0
    %2364 = vmatprep.subr.mxu0 0.0
    %2365 = vmatpush1.msra.mxu0 0.0
    %2366 = vmatprep.subr.mxu0 0.0
    %2367 = vmatpush1.msra.mxu0 0.0
    %2368 = vmatprep.subr.mxu0 0.0
    %2369 = vmatpush1.msra.mxu0 0.0
    %2370 = vmatprep.subr.mxu0 0.0
    %2371 = vmatpush1.msra.mxu0 0.0
    %2372 = vmatprep.subr.mxu0 0.0
    %2373 = vmatpush1.msra.mxu0 0.0
    %2374 = vmatprep.subr.mxu0 0.0
    %2375 = vmatpush1.msra.mxu0 0.0
    %2376 = vmatprep.subr.mxu0 0.0
    %2377 = vmatpush1.msra.mxu0 0.0
    %2378 = vmatprep.subr.mxu0 0.0
    %2379 = vmatpush1.msra.mxu0 0.0
    %2380 = vmatprep.subr.mxu0 0.0
    %2381 = vmatpush1.msra.mxu0 %v2345
    %2382 = vmatprep.subr.mxu0 0.0
    %2383 = vmatpush1.msra.mxu0 %v2344
    %2384 = vmatprep.subr.mxu0 0.0
    %2385 = vmatpush1.msra.mxu0 %v2343
    %2386 = vmatprep.subr.mxu0 0.0
    %2387 = vmatpush1.msra.mxu0 %v2342
    %2388 = vmatprep.subr.mxu0 0.0
    %2389 = vmatpush2.msra.mxu0 0.0
    %2390 = vmatprep.subr.mxu0 0.0
    %2391 = vmatpush2.msra.mxu0 0.0
    %2392 = vmatprep.subr.mxu0 0.0
    %2393 = vmatpush2.msra.mxu0 0.0
    %2394 = vmatprep.subr.mxu0 0.0
    %2395 = vmatpush2.msra.mxu0 0.0
    %2396 = vmatprep.subr.mxu0 0.0
    %2397 = vmatpush2.msra.mxu0 0.0
    %2398 = vmatprep.subr.mxu0 0.0
    %2399 = vmatpush2.msra.mxu0 0.0
    %2400 = vmatprep.subr.mxu0 0.0
    %2401 = vmatpush2.msra.mxu0 0.0
    %2402 = vmatprep.subr.mxu0 0.0
    %2403 = vmatpush2.msra.mxu0 0.0
    %2404 = vmatprep.subr.mxu0 0.0
    %2405 = vmatpush2.msra.mxu0 0.0
    %2406 = vmatprep.subr.mxu0 0.0
    %2407 = vmatpush2.msra.mxu0 0.0
    %2408 = vmatprep.subr.mxu0 0.0
    %2409 = vmatpush2.msra.mxu0 0.0
    %2410 = vmatprep.subr.mxu0 0.0
    %2411 = vmatpush2.msra.mxu0 0.0
    %2412 = vmatprep.subr.mxu0 0.0
    %2413 = vmatpush2.msra.mxu0 0.0
    %2414 = vmatprep.subr.mxu0 0.0
    %2415 = vmatpush2.msra.mxu0 0.0
    %2416 = vmatprep.subr.mxu0 0.0
    %2417 = vmatpush2.msra.mxu0 0.0
    %2418 = vmatprep.subr.mxu0 0.0
    %2419 = vmatpush2.msra.mxu0 0.0
    %2420 = vmatprep.mubr.f32.mxu0 0.0
    %2421 = vmatmul.mubr.f32.gmra.mxu0 %v2351
    %v2422 = vpop.f32.mrf.mxu0
    %v2423 = vadd.f32 %v2349, %v2422
    %v2424 = vpop.f32.mrf.mxu0
    %2425 = vmatprep.mubr.f32.mxu0 0.0
    %2426 = vmatmul.mubr.f32.gmra.mxu0 %v2354
    %v2427 = vpop.f32.mrf.mxu0
    %v2428 = vadd.f32 %v2349, %v2427
    %v2429 = vpop.f32.mrf.mxu0
    %2430 = vdwg.mxu0
    %2431 = vst.msk [vmem:[#allocation3] sm:$0xff] %vm210, %v2423
    %2432 = vst.msk [vmem:[#allocation3 + $0x8] sm:$0xff] %vm210, %v2428
    %s2433 = scalar_lea.vmem [#allocation12], 32
    %v2434 = vld [vmem:[%s2433] sm:$0xff]
    %v2435 = vld [vmem:[%s2433 + $0x8] sm:$0xff]
    %v2436 = vld [vmem:[%s2433 + $0x10] sm:$0xff]
    %v2437 = vld [vmem:[%s2433 + $0x18] sm:$0xff]
    %v2438 = vlaneseq
    %v2439 = vshrl.u32 %v2438, 7
    %v2440 = vsub.s32 1, %v2439
    %v2441 = vrot.slane %v2341, %v2440
    %2442 = vmatprep.subr.mxu0 0.0
    %2443 = vmatpush1.msra.mxu0 0.0
    %2444 = vmatprep.subr.mxu0 0.0
    %2445 = vmatpush1.msra.mxu0 0.0
    %2446 = vmatprep.subr.mxu0 0.0
    %2447 = vmatpush1.msra.mxu0 0.0
    %2448 = vmatprep.subr.mxu0 0.0
    %2449 = vmatpush1.msra.mxu0 0.0
    %2450 = vmatprep.subr.mxu0 0.0
    %2451 = vmatpush1.msra.mxu0 0.0
    %2452 = vmatprep.subr.mxu0 0.0
    %2453 = vmatpush1.msra.mxu0 0.0
    %2454 = vmatprep.subr.mxu0 0.0
    %2455 = vmatpush1.msra.mxu0 0.0
    %2456 = vmatprep.subr.mxu0 0.0
    %2457 = vmatpush1.msra.mxu0 0.0
    %2458 = vmatprep.subr.mxu0 0.0
    %2459 = vmatpush1.msra.mxu0 0.0
    %2460 = vmatprep.subr.mxu0 0.0
    %2461 = vmatpush1.msra.mxu0 0.0
    %2462 = vmatprep.subr.mxu0 0.0
    %2463 = vmatpush1.msra.mxu0 0.0
    %2464 = vmatprep.subr.mxu0 0.0
    %2465 = vmatpush1.msra.mxu0 0.0
    %2466 = vmatprep.subr.mxu0 0.0
    %2467 = vmatpush1.msra.mxu0 %v2437
    %2468 = vmatprep.subr.mxu0 0.0
    %2469 = vmatpush1.msra.mxu0 %v2436
    %2470 = vmatprep.subr.mxu0 0.0
    %2471 = vmatpush1.msra.mxu0 %v2435
    %2472 = vmatprep.subr.mxu0 0.0
    %2473 = vmatpush1.msra.mxu0 %v2434
    %2474 = vmatprep.subr.mxu0 0.0
    %2475 = vmatpush2.msra.mxu0 0.0
    %2476 = vmatprep.subr.mxu0 0.0
    %2477 = vmatpush2.msra.mxu0 0.0
    %2478 = vmatprep.subr.mxu0 0.0
    %2479 = vmatpush2.msra.mxu0 0.0
    %2480 = vmatprep.subr.mxu0 0.0
    %2481 = vmatpush2.msra.mxu0 0.0
    %2482 = vmatprep.subr.mxu0 0.0
    %2483 = vmatpush2.msra.mxu0 0.0
    %2484 = vmatprep.subr.mxu0 0.0
    %2485 = vmatpush2.msra.mxu0 0.0
    %2486 = vmatprep.subr.mxu0 0.0
    %2487 = vmatpush2.msra.mxu0 0.0
    %2488 = vmatprep.subr.mxu0 0.0
    %2489 = vmatpush2.msra.mxu0 0.0
    %2490 = vmatprep.subr.mxu0 0.0
    %2491 = vmatpush2.msra.mxu0 0.0
    %2492 = vmatprep.subr.mxu0 0.0
    %2493 = vmatpush2.msra.mxu0 0.0
    %2494 = vmatprep.subr.mxu0 0.0
    %2495 = vmatpush2.msra.mxu0 0.0
    %2496 = vmatprep.subr.mxu0 0.0
    %2497 = vmatpush2.msra.mxu0 0.0
    %2498 = vmatprep.subr.mxu0 0.0
    %2499 = vmatpush2.msra.mxu0 0.0
    %2500 = vmatprep.subr.mxu0 0.0
    %2501 = vmatpush2.msra.mxu0 0.0
    %2502 = vmatprep.subr.mxu0 0.0
    %2503 = vmatpush2.msra.mxu0 0.0
    %2504 = vmatprep.subr.mxu0 0.0
    %2505 = vmatpush2.msra.mxu0 0.0
    %2506 = vmatprep.mubr.f32.mxu0 0.0
    %2507 = vmatmul.mubr.f32.gmra.mxu0 %v2351
    %v2508 = vpop.f32.mrf.mxu0
    %v2509 = vadd.f32 %v2441, %v2508
    %v2510 = vpop.f32.mrf.mxu0
    %2511 = vmatprep.mubr.f32.mxu0 0.0
    %2512 = vmatmul.mubr.f32.gmra.mxu0 %v2354
    %v2513 = vpop.f32.mrf.mxu0
    %v2514 = vadd.f32 %v2441, %v2513
    %v2515 = vpop.f32.mrf.mxu0
    %2516 = vdwg.mxu0
    %2517 = vst.msk [vmem:[#allocation4] sm:$0xff] %vm210, %v2509
    %2518 = vst.msk [vmem:[#allocation4 + $0x8] sm:$0xff] %vm210, %v2514
    %s2519 = scalar_lea.vmem [#allocation12], 64
    %v2520 = vld [vmem:[%s2519] sm:$0xff]
    %v2521 = vld [vmem:[%s2519 + $0x8] sm:$0xff]
    %v2522 = vld [vmem:[%s2519 + $0x10] sm:$0xff]
    %v2523 = vld [vmem:[%s2519 + $0x18] sm:$0xff]
    %v2524 = vlaneseq
    %v2525 = vshrl.u32 %v2524, 7
    %v2526 = vsub.s32 2, %v2525
    %v2527 = vrot.slane %v2341, %v2526
    %2528 = vmatprep.subr.mxu0 0.0
    %2529 = vmatpush1.msra.mxu0 0.0
    %2530 = vmatprep.subr.mxu0 0.0
    %2531 = vmatpush1.msra.mxu0 0.0
    %2532 = vmatprep.subr.mxu0 0.0
    %2533 = vmatpush1.msra.mxu0 0.0
    %2534 = vmatprep.subr.mxu0 0.0
    %2535 = vmatpush1.msra.mxu0 0.0
    %2536 = vmatprep.subr.mxu0 0.0
    %2537 = vmatpush1.msra.mxu0 0.0
    %2538 = vmatprep.subr.mxu0 0.0
    %2539 = vmatpush1.msra.mxu0 0.0
    %2540 = vmatprep.subr.mxu0 0.0
    %2541 = vmatpush1.msra.mxu0 0.0
    %2542 = vmatprep.subr.mxu0 0.0
    %2543 = vmatpush1.msra.mxu0 0.0
    %2544 = vmatprep.subr.mxu0 0.0
    %2545 = vmatpush1.msra.mxu0 0.0
    %2546 = vmatprep.subr.mxu0 0.0
    %2547 = vmatpush1.msra.mxu0 0.0
    %2548 = vmatprep.subr.mxu0 0.0
    %2549 = vmatpush1.msra.mxu0 0.0
    %2550 = vmatprep.subr.mxu0 0.0
    %2551 = vmatpush1.msra.mxu0 0.0
    %2552 = vmatprep.subr.mxu0 0.0
    %2553 = vmatpush1.msra.mxu0 %v2523
    %2554 = vmatprep.subr.mxu0 0.0
    %2555 = vmatpush1.msra.mxu0 %v2522
    %2556 = vmatprep.subr.mxu0 0.0
    %2557 = vmatpush1.msra.mxu0 %v2521
    %2558 = vmatprep.subr.mxu0 0.0
    %2559 = vmatpush1.msra.mxu0 %v2520
    %2560 = vmatprep.subr.mxu0 0.0
    %2561 = vmatpush2.msra.mxu0 0.0
    %2562 = vmatprep.subr.mxu0 0.0
    %2563 = vmatpush2.msra.mxu0 0.0
    %2564 = vmatprep.subr.mxu0 0.0
    %2565 = vmatpush2.msra.mxu0 0.0
    %2566 = vmatprep.subr.mxu0 0.0
    %2567 = vmatpush2.msra.mxu0 0.0
    %2568 = vmatprep.subr.mxu0 0.0
    %2569 = vmatpush2.msra.mxu0 0.0
    %2570 = vmatprep.subr.mxu0 0.0
    %2571 = vmatpush2.msra.mxu0 0.0
    %2572 = vmatprep.subr.mxu0 0.0
    %2573 = vmatpush2.msra.mxu0 0.0
    %2574 = vmatprep.subr.mxu0 0.0
    %2575 = vmatpush2.msra.mxu0 0.0
    %2576 = vmatprep.subr.mxu0 0.0
    %2577 = vmatpush2.msra.mxu0 0.0
    %2578 = vmatprep.subr.mxu0 0.0
    %2579 = vmatpush2.msra.mxu0 0.0
    %2580 = vmatprep.subr.mxu0 0.0
    %2581 = vmatpush2.msra.mxu0 0.0
    %2582 = vmatprep.subr.mxu0 0.0
    %2583 = vmatpush2.msra.mxu0 0.0
    %2584 = vmatprep.subr.mxu0 0.0
    %2585 = vmatpush2.msra.mxu0 0.0
    %2586 = vmatprep.subr.mxu0 0.0
    %2587 = vmatpush2.msra.mxu0 0.0
    %2588 = vmatprep.subr.mxu0 0.0
    %2589 = vmatpush2.msra.mxu0 0.0
    %2590 = vmatprep.subr.mxu0 0.0
    %2591 = vmatpush2.msra.mxu0 0.0
    %2592 = vmatprep.mubr.f32.mxu0 0.0
    %2593 = vmatmul.mubr.f32.gmra.mxu0 %v2351
    %v2594 = vpop.f32.mrf.mxu0
    %v2595 = vadd.f32 %v2527, %v2594
    %v2596 = vpop.f32.mrf.mxu0
    %2597 = vmatprep.mubr.f32.mxu0 0.0
    %2598 = vmatmul.mubr.f32.gmra.mxu0 %v2354
    %v2599 = vpop.f32.mrf.mxu0
    %v2600 = vadd.f32 %v2527, %v2599
    %v2601 = vpop.f32.mrf.mxu0
    %2602 = vdwg.mxu0
    %2603 = vst.msk [vmem:[#allocation5] sm:$0xff] %vm210, %v2595
    %2604 = vst.msk [vmem:[#allocation5 + $0x8] sm:$0xff] %vm210, %v2600
    %v2605 = vld [vmem:[#allocation14] sm:$0xff]
    %v2606 = vld [vmem:[#allocation14 + $0x8] sm:$0xff]
    %v2607 = vld [vmem:[#allocation14 + $0x10] sm:$0xff]
    %v2608 = vld [vmem:[#allocation14 + $0x18] sm:$0xff]
    %s2609 = scalar_lea.vmem [#allocation14], 32
    %v2610 = vld [vmem:[%s2609] sm:$0xff]
    %v2611 = vld [vmem:[%s2609 + $0x8] sm:$0xff]
    %v2612 = vld [vmem:[%s2609 + $0x10] sm:$0xff]
    %v2613 = vld [vmem:[%s2609 + $0x18] sm:$0xff]
    %s2614 = scalar_lea.vmem [#allocation14], 64
    %v2615 = vld [vmem:[%s2614] sm:$0xff]
    %v2616 = vld [vmem:[%s2614 + $0x8] sm:$0xff]
    %v2617 = vld [vmem:[%s2614 + $0x10] sm:$0xff]
    %v2618 = vld [vmem:[%s2614 + $0x18] sm:$0xff]
    %v2619 = vld [vmem:[%s6] sm:$0xf]
    %2620 = vmatprep.subr.mxu0 0.0
    %2621 = vmatpush1.msra.mxu0 0.0
    %2622 = vmatprep.subr.mxu0 0.0
    %2623 = vmatpush1.msra.mxu0 0.0
    %2624 = vmatprep.subr.mxu0 0.0
    %2625 = vmatpush1.msra.mxu0 0.0
    %2626 = vmatprep.subr.mxu0 0.0
    %2627 = vmatpush1.msra.mxu0 0.0
    %2628 = vmatprep.subr.mxu0 0.0
    %2629 = vmatpush1.msra.mxu0 0.0
    %2630 = vmatprep.subr.mxu0 0.0
    %2631 = vmatpush1.msra.mxu0 0.0
    %2632 = vmatprep.subr.mxu0 0.0
    %2633 = vmatpush1.msra.mxu0 0.0
    %2634 = vmatprep.subr.mxu0 0.0
    %2635 = vmatpush1.msra.mxu0 0.0
    %2636 = vmatprep.subr.mxu0 0.0
    %2637 = vmatpush1.msra.mxu0 0.0
    %2638 = vmatprep.subr.mxu0 0.0
    %2639 = vmatpush1.msra.mxu0 0.0
    %2640 = vmatprep.subr.mxu0 0.0
    %2641 = vmatpush1.msra.mxu0 0.0
    %2642 = vmatprep.subr.mxu0 0.0
    %2643 = vmatpush1.msra.mxu0 0.0
    %2644 = vmatprep.subr.mxu0 0.0
    %2645 = vmatpush1.msra.mxu0 %v2608
    %2646 = vmatprep.subr.mxu0 0.0
    %2647 = vmatpush1.msra.mxu0 %v2607
    %2648 = vmatprep.subr.mxu0 0.0
    %2649 = vmatpush1.msra.mxu0 %v2606
    %2650 = vmatprep.subr.mxu0 0.0
    %2651 = vmatpush1.msra.mxu0 %v2605
    %2652 = vmatprep.subr.mxu0 0.0
    %2653 = vmatpush2.msra.mxu0 0.0
    %2654 = vmatprep.subr.mxu0 0.0
    %2655 = vmatpush2.msra.mxu0 0.0
    %2656 = vmatprep.subr.mxu0 0.0
    %2657 = vmatpush2.msra.mxu0 0.0
    %2658 = vmatprep.subr.mxu0 0.0
    %2659 = vmatpush2.msra.mxu0 0.0
    %2660 = vmatprep.subr.mxu0 0.0
    %2661 = vmatpush2.msra.mxu0 0.0
    %2662 = vmatprep.subr.mxu0 0.0
    %2663 = vmatpush2.msra.mxu0 0.0
    %2664 = vmatprep.subr.mxu0 0.0
    %2665 = vmatpush2.msra.mxu0 0.0
    %2666 = vmatprep.subr.mxu0 0.0
    %2667 = vmatpush2.msra.mxu0 0.0
    %2668 = vmatprep.subr.mxu0 0.0
    %2669 = vmatpush2.msra.mxu0 0.0
    %2670 = vmatprep.subr.mxu0 0.0
    %2671 = vmatpush2.msra.mxu0 0.0
    %2672 = vmatprep.subr.mxu0 0.0
    %2673 = vmatpush2.msra.mxu0 0.0
    %2674 = vmatprep.subr.mxu0 0.0
    %2675 = vmatpush2.msra.mxu0 0.0
    %2676 = vmatprep.subr.mxu0 0.0
    %2677 = vmatpush2.msra.mxu0 0.0
    %2678 = vmatprep.subr.mxu0 0.0
    %2679 = vmatpush2.msra.mxu0 0.0
    %2680 = vmatprep.subr.mxu0 0.0
    %2681 = vmatpush2.msra.mxu0 0.0
    %2682 = vmatprep.subr.mxu0 0.0
    %2683 = vmatpush2.msra.mxu0 0.0
    %2684 = vmatprep.mubr.f32.mxu0 0.0
    %2685 = vmatmul.mubr.f32.gmra.mxu0 %v403
    %v2686 = vpop.f32.mrf.mxu0
    %v2687 = vadd.f32 0.0, %v2686
    %v2688 = vpop.f32.mrf.mxu0
    %2689 = vdwg.mxu0
    %2690 = vmatprep.subr.mxu0 0.0
    %2691 = vmatpush1.msra.mxu0 0.0
    %2692 = vmatprep.subr.mxu0 0.0
    %2693 = vmatpush1.msra.mxu0 0.0
    %2694 = vmatprep.subr.mxu0 0.0
    %2695 = vmatpush1.msra.mxu0 0.0
    %2696 = vmatprep.subr.mxu0 0.0
    %2697 = vmatpush1.msra.mxu0 0.0
    %2698 = vmatprep.subr.mxu0 0.0
    %2699 = vmatpush1.msra.mxu0 0.0
    %2700 = vmatprep.subr.mxu0 0.0
    %2701 = vmatpush1.msra.mxu0 0.0
    %2702 = vmatprep.subr.mxu0 0.0
    %2703 = vmatpush1.msra.mxu0 0.0
    %2704 = vmatprep.subr.mxu0 0.0
    %2705 = vmatpush1.msra.mxu0 0.0
    %2706 = vmatprep.subr.mxu0 0.0
    %2707 = vmatpush1.msra.mxu0 0.0
    %2708 = vmatprep.subr.mxu0 0.0
    %2709 = vmatpush1.msra.mxu0 0.0
    %2710 = vmatprep.subr.mxu0 0.0
    %2711 = vmatpush1.msra.mxu0 0.0
    %2712 = vmatprep.subr.mxu0 0.0
    %2713 = vmatpush1.msra.mxu0 0.0
    %2714 = vmatprep.subr.mxu0 0.0
    %2715 = vmatpush1.msra.mxu0 %v2613
    %2716 = vmatprep.subr.mxu0 0.0
    %2717 = vmatpush1.msra.mxu0 %v2612
    %2718 = vmatprep.subr.mxu0 0.0
    %2719 = vmatpush1.msra.mxu0 %v2611
    %2720 = vmatprep.subr.mxu0 0.0
    %2721 = vmatpush1.msra.mxu0 %v2610
    %2722 = vmatprep.subr.mxu0 0.0
    %2723 = vmatpush2.msra.mxu0 0.0
    %2724 = vmatprep.subr.mxu0 0.0
    %2725 = vmatpush2.msra.mxu0 0.0
    %2726 = vmatprep.subr.mxu0 0.0
    %2727 = vmatpush2.msra.mxu0 0.0
    %2728 = vmatprep.subr.mxu0 0.0
    %2729 = vmatpush2.msra.mxu0 0.0
    %2730 = vmatprep.subr.mxu0 0.0
    %2731 = vmatpush2.msra.mxu0 0.0
    %2732 = vmatprep.subr.mxu0 0.0
    %2733 = vmatpush2.msra.mxu0 0.0
    %2734 = vmatprep.subr.mxu0 0.0
    %2735 = vmatpush2.msra.mxu0 0.0
    %2736 = vmatprep.subr.mxu0 0.0
    %2737 = vmatpush2.msra.mxu0 0.0
    %2738 = vmatprep.subr.mxu0 0.0
    %2739 = vmatpush2.msra.mxu0 0.0
    %2740 = vmatprep.subr.mxu0 0.0
    %2741 = vmatpush2.msra.mxu0 0.0
    %2742 = vmatprep.subr.mxu0 0.0
    %2743 = vmatpush2.msra.mxu0 0.0
    %2744 = vmatprep.subr.mxu0 0.0
    %2745 = vmatpush2.msra.mxu0 0.0
    %2746 = vmatprep.subr.mxu0 0.0
    %2747 = vmatpush2.msra.mxu0 0.0
    %2748 = vmatprep.subr.mxu0 0.0
    %2749 = vmatpush2.msra.mxu0 0.0
    %2750 = vmatprep.subr.mxu0 0.0
    %2751 = vmatpush2.msra.mxu0 0.0
    %2752 = vmatprep.subr.mxu0 0.0
    %2753 = vmatpush2.msra.mxu0 0.0
    %2754 = vmatprep.mubr.f32.mxu0 0.0
    %2755 = vmatmul.mubr.f32.gmra.mxu0 %v403
    %v2756 = vpop.f32.mrf.mxu0
    %v2757 = vadd.f32 0.0, %v2756
    %v2758 = vpop.f32.mrf.mxu0
    %2759 = vdwg.mxu0
    %v2760 = vlaneseq
    %v2761 = vshrl.u32 %v2760, 7
    %v2762 = vsub.s32 3, %v2761
    %v2763 = vrot.slane %v2619, %v2762
    %2764 = vmatprep.subr.mxu0 0.0
    %2765 = vmatpush1.msra.mxu0 0.0
    %2766 = vmatprep.subr.mxu0 0.0
    %2767 = vmatpush1.msra.mxu0 0.0
    %2768 = vmatprep.subr.mxu0 0.0
    %2769 = vmatpush1.msra.mxu0 0.0
    %2770 = vmatprep.subr.mxu0 0.0
    %2771 = vmatpush1.msra.mxu0 0.0
    %2772 = vmatprep.subr.mxu0 0.0
    %2773 = vmatpush1.msra.mxu0 0.0
    %2774 = vmatprep.subr.mxu0 0.0
    %2775 = vmatpush1.msra.mxu0 0.0
    %2776 = vmatprep.subr.mxu0 0.0
    %2777 = vmatpush1.msra.mxu0 0.0
    %2778 = vmatprep.subr.mxu0 0.0
    %2779 = vmatpush1.msra.mxu0 0.0
    %2780 = vmatprep.subr.mxu0 0.0
    %2781 = vmatpush1.msra.mxu0 0.0
    %2782 = vmatprep.subr.mxu0 0.0
    %2783 = vmatpush1.msra.mxu0 0.0
    %2784 = vmatprep.subr.mxu0 0.0
    %2785 = vmatpush1.msra.mxu0 0.0
    %2786 = vmatprep.subr.mxu0 0.0
    %2787 = vmatpush1.msra.mxu0 0.0
    %2788 = vmatprep.subr.mxu0 0.0
    %2789 = vmatpush1.msra.mxu0 %v2618
    %2790 = vmatprep.subr.mxu0 0.0
    %2791 = vmatpush1.msra.mxu0 %v2617
    %2792 = vmatprep.subr.mxu0 0.0
    %2793 = vmatpush1.msra.mxu0 %v2616
    %2794 = vmatprep.subr.mxu0 0.0
    %2795 = vmatpush1.msra.mxu0 %v2615
    %2796 = vmatprep.subr.mxu0 0.0
    %2797 = vmatpush2.msra.mxu0 0.0
    %2798 = vmatprep.subr.mxu0 0.0
    %2799 = vmatpush2.msra.mxu0 0.0
    %2800 = vmatprep.subr.mxu0 0.0
    %2801 = vmatpush2.msra.mxu0 0.0
    %2802 = vmatprep.subr.mxu0 0.0
    %2803 = vmatpush2.msra.mxu0 0.0
    %2804 = vmatprep.subr.mxu0 0.0
    %2805 = vmatpush2.msra.mxu0 0.0
    %2806 = vmatprep.subr.mxu0 0.0
    %2807 = vmatpush2.msra.mxu0 0.0
    %2808 = vmatprep.subr.mxu0 0.0
    %2809 = vmatpush2.msra.mxu0 0.0
    %2810 = vmatprep.subr.mxu0 0.0
    %2811 = vmatpush2.msra.mxu0 0.0
    %2812 = vmatprep.subr.mxu0 0.0
    %2813 = vmatpush2.msra.mxu0 0.0
    %2814 = vmatprep.subr.mxu0 0.0
    %2815 = vmatpush2.msra.mxu0 0.0
    %2816 = vmatprep.subr.mxu0 0.0
    %2817 = vmatpush2.msra.mxu0 0.0
    %2818 = vmatprep.subr.mxu0 0.0
    %2819 = vmatpush2.msra.mxu0 0.0
    %2820 = vmatprep.subr.mxu0 0.0
    %2821 = vmatpush2.msra.mxu0 0.0
    %2822 = vmatprep.subr.mxu0 0.0
    %2823 = vmatpush2.msra.mxu0 0.0
    %2824 = vmatprep.subr.mxu0 0.0
    %2825 = vmatpush2.msra.mxu0 0.0
    %2826 = vmatprep.subr.mxu0 0.0
    %2827 = vmatpush2.msra.mxu0 0.0
    %2828 = vmatprep.mubr.f32.mxu0 0.0
    %2829 = vmatmul.mubr.f32.gmra.mxu0 %v403
    %v2830 = vpop.f32.mrf.mxu0
    %v2831 = vadd.f32 %v2763, %v2830
    %v2832 = vpop.f32.mrf.mxu0
    %2833 = vdwg.mxu0
    %v2834 = vld [vmem:[#allocation3] sm:$0x3]
    %v2835 = vadd.f32 %v2834, %v2687
    %v2836 = vxor.u32 %v2835, 2147483648
    %v2837 = vmul.f32 %v2836, 1.442695
    %v2838 = vpow.pop %v2837
    %v2839 = vadd.f32 %v2838, 1.0
    %v2840 = vrcp.pop %v2839
    %v2841 = vmul.f32 1.0, %v2840
    %v2842 = vld [vmem:[#allocation4] sm:$0x3]
    %v2843 = vadd.f32 %v2842, %v2757
    %v2844 = vxor.u32 %v2843, 2147483648
    %v2845 = vmul.f32 %v2844, 1.442695
    %v2846 = vpow.pop %v2845
    %v2847 = vadd.f32 %v2846, 1.0
    %v2848 = vrcp.pop %v2847
    %v2849 = vmul.f32 1.0, %v2848
    %v2850 = vld [vmem:[#allocation5] sm:$0x3]
    %v2851 = vmul.f32 %v2841, %v2831
    %v2852 = vadd.f32 %v2850, %v2851
    %v2853 = vtanh.pop %v2852
    %v2854 = vsub.f32 1.0, %v2849
    %v2855 = vmul.f32 %v2854, %v2853
    %v2856 = vmul.f32 %v2849, 0.0
    %v2857 = vadd.f32 %v2855, %v2856
    %2858 = vst.msk [vmem:[#allocation2] sm:$0x3] %vm643, %v2857
    %v2860 = vsel %vm210, %v2857, 0
    %2862 = vmatprep.subr.mxu0 0.0
    %2863 = vmatpush1.msra.mxu0 0.0
    %2864 = vmatprep.subr.mxu0 0.0
    %2865 = vmatpush1.msra.mxu0 0.0
    %2866 = vmatprep.subr.mxu0 0.0
    %2867 = vmatpush1.msra.mxu0 0.0
    %2868 = vmatprep.subr.mxu0 0.0
    %2869 = vmatpush1.msra.mxu0 0.0
    %2870 = vmatprep.subr.mxu0 0.0
    %2871 = vmatpush1.msra.mxu0 0.0
    %2872 = vmatprep.subr.mxu0 0.0
    %2873 = vmatpush1.msra.mxu0 0.0
    %2874 = vmatprep.subr.mxu0 0.0
    %2875 = vmatpush1.msra.mxu0 0.0
    %2876 = vmatprep.subr.mxu0 0.0
    %2877 = vmatpush1.msra.mxu0 0.0
    %2878 = vmatprep.subr.mxu0 0.0
    %2879 = vmatpush1.msra.mxu0 0.0
    %2880 = vmatprep.subr.mxu0 0.0
    %2881 = vmatpush1.msra.mxu0 0.0
    %2882 = vmatprep.subr.mxu0 0.0
    %2883 = vmatpush1.msra.mxu0 0.0
    %2884 = vmatprep.subr.mxu0 0.0
    %2885 = vmatpush1.msra.mxu0 0.0
    %2886 = vmatprep.subr.mxu0 0.0
    %2887 = vmatpush1.msra.mxu0 %v2608
    %2888 = vmatprep.subr.mxu0 0.0
    %2889 = vmatpush1.msra.mxu0 %v2607
    %2890 = vmatprep.subr.mxu0 0.0
    %2891 = vmatpush1.msra.mxu0 %v2606
    %2892 = vmatprep.subr.mxu0 0.0
    %2893 = vmatpush1.msra.mxu0 %v2605
    %2894 = vmatprep.subr.mxu0 0.0
    %2895 = vmatpush2.msra.mxu0 0.0
    %2896 = vmatprep.subr.mxu0 0.0
    %2897 = vmatpush2.msra.mxu0 0.0
    %2898 = vmatprep.subr.mxu0 0.0
    %2899 = vmatpush2.msra.mxu0 0.0
    %2900 = vmatprep.subr.mxu0 0.0
    %2901 = vmatpush2.msra.mxu0 0.0
    %2902 = vmatprep.subr.mxu0 0.0
    %2903 = vmatpush2.msra.mxu0 0.0
    %2904 = vmatprep.subr.mxu0 0.0
    %2905 = vmatpush2.msra.mxu0 0.0
    %2906 = vmatprep.subr.mxu0 0.0
    %2907 = vmatpush2.msra.mxu0 0.0
    %2908 = vmatprep.subr.mxu0 0.0
    %2909 = vmatpush2.msra.mxu0 0.0
    %2910 = vmatprep.subr.mxu0 0.0
    %2911 = vmatpush2.msra.mxu0 0.0
    %2912 = vmatprep.subr.mxu0 0.0
    %2913 = vmatpush2.msra.mxu0 0.0
    %2914 = vmatprep.subr.mxu0 0.0
    %2915 = vmatpush2.msra.mxu0 0.0
    %2916 = vmatprep.subr.mxu0 0.0
    %2917 = vmatpush2.msra.mxu0 0.0
    %2918 = vmatprep.subr.mxu0 0.0
    %2919 = vmatpush2.msra.mxu0 0.0
    %2920 = vmatprep.subr.mxu0 0.0
    %2921 = vmatpush2.msra.mxu0 0.0
    %2922 = vmatprep.subr.mxu0 0.0
    %2923 = vmatpush2.msra.mxu0 0.0
    %2924 = vmatprep.subr.mxu0 0.0
    %2925 = vmatpush2.msra.mxu0 0.0
    %2926 = vmatprep.mubr.f32.mxu0 0.0
    %2927 = vmatmul.mubr.f32.gmra.mxu0 %v2860
    %v2928 = vpop.f32.mrf.mxu0
    %v2929 = vadd.f32 0.0, %v2928
    %v2930 = vpop.f32.mrf.mxu0
    %2931 = vdwg.mxu0
    %2932 = vmatprep.subr.mxu0 0.0
    %2933 = vmatpush1.msra.mxu0 0.0
    %2934 = vmatprep.subr.mxu0 0.0
    %2935 = vmatpush1.msra.mxu0 0.0
    %2936 = vmatprep.subr.mxu0 0.0
    %2937 = vmatpush1.msra.mxu0 0.0
    %2938 = vmatprep.subr.mxu0 0.0
    %2939 = vmatpush1.msra.mxu0 0.0
    %2940 = vmatprep.subr.mxu0 0.0
    %2941 = vmatpush1.msra.mxu0 0.0
    %2942 = vmatprep.subr.mxu0 0.0
    %2943 = vmatpush1.msra.mxu0 0.0
    %2944 = vmatprep.subr.mxu0 0.0
    %2945 = vmatpush1.msra.mxu0 0.0
    %2946 = vmatprep.subr.mxu0 0.0
    %2947 = vmatpush1.msra.mxu0 0.0
    %2948 = vmatprep.subr.mxu0 0.0
    %2949 = vmatpush1.msra.mxu0 0.0
    %2950 = vmatprep.subr.mxu0 0.0
    %2951 = vmatpush1.msra.mxu0 0.0
    %2952 = vmatprep.subr.mxu0 0.0
    %2953 = vmatpush1.msra.mxu0 0.0
    %2954 = vmatprep.subr.mxu0 0.0
    %2955 = vmatpush1.msra.mxu0 0.0
    %2956 = vmatprep.subr.mxu0 0.0
    %2957 = vmatpush1.msra.mxu0 %v2613
    %2958 = vmatprep.subr.mxu0 0.0
    %2959 = vmatpush1.msra.mxu0 %v2612
    %2960 = vmatprep.subr.mxu0 0.0
    %2961 = vmatpush1.msra.mxu0 %v2611
    %2962 = vmatprep.subr.mxu0 0.0
    %2963 = vmatpush1.msra.mxu0 %v2610
    %2964 = vmatprep.subr.mxu0 0.0
    %2965 = vmatpush2.msra.mxu0 0.0
    %2966 = vmatprep.subr.mxu0 0.0
    %2967 = vmatpush2.msra.mxu0 0.0
    %2968 = vmatprep.subr.mxu0 0.0
    %2969 = vmatpush2.msra.mxu0 0.0
    %2970 = vmatprep.subr.mxu0 0.0
    %2971 = vmatpush2.msra.mxu0 0.0
    %2972 = vmatprep.subr.mxu0 0.0
    %2973 = vmatpush2.msra.mxu0 0.0
    %2974 = vmatprep.subr.mxu0 0.0
    %2975 = vmatpush2.msra.mxu0 0.0
    %2976 = vmatprep.subr.mxu0 0.0
    %2977 = vmatpush2.msra.mxu0 0.0
    %2978 = vmatprep.subr.mxu0 0.0
    %2979 = vmatpush2.msra.mxu0 0.0
    %2980 = vmatprep.subr.mxu0 0.0
    %2981 = vmatpush2.msra.mxu0 0.0
    %2982 = vmatprep.subr.mxu0 0.0
    %2983 = vmatpush2.msra.mxu0 0.0
    %2984 = vmatprep.subr.mxu0 0.0
    %2985 = vmatpush2.msra.mxu0 0.0
    %2986 = vmatprep.subr.mxu0 0.0
    %2987 = vmatpush2.msra.mxu0 0.0
    %2988 = vmatprep.subr.mxu0 0.0
    %2989 = vmatpush2.msra.mxu0 0.0
    %2990 = vmatprep.subr.mxu0 0.0
    %2991 = vmatpush2.msra.mxu0 0.0
    %2992 = vmatprep.subr.mxu0 0.0
    %2993 = vmatpush2.msra.mxu0 0.0
    %2994 = vmatprep.subr.mxu0 0.0
    %2995 = vmatpush2.msra.mxu0 0.0
    %2996 = vmatprep.mubr.f32.mxu0 0.0
    %2997 = vmatmul.mubr.f32.gmra.mxu0 %v2860
    %v2998 = vpop.f32.mrf.mxu0
    %v2999 = vadd.f32 0.0, %v2998
    %v3000 = vpop.f32.mrf.mxu0
    %3001 = vdwg.mxu0
    %3002 = vmatprep.subr.mxu0 0.0
    %3003 = vmatpush1.msra.mxu0 0.0
    %3004 = vmatprep.subr.mxu0 0.0
    %3005 = vmatpush1.msra.mxu0 0.0
    %3006 = vmatprep.subr.mxu0 0.0
    %3007 = vmatpush1.msra.mxu0 0.0
    %3008 = vmatprep.subr.mxu0 0.0
    %3009 = vmatpush1.msra.mxu0 0.0
    %3010 = vmatprep.subr.mxu0 0.0
    %3011 = vmatpush1.msra.mxu0 0.0
    %3012 = vmatprep.subr.mxu0 0.0
    %3013 = vmatpush1.msra.mxu0 0.0
    %3014 = vmatprep.subr.mxu0 0.0
    %3015 = vmatpush1.msra.mxu0 0.0
    %3016 = vmatprep.subr.mxu0 0.0
    %3017 = vmatpush1.msra.mxu0 0.0
    %3018 = vmatprep.subr.mxu0 0.0
    %3019 = vmatpush1.msra.mxu0 0.0
    %3020 = vmatprep.subr.mxu0 0.0
    %3021 = vmatpush1.msra.mxu0 0.0
    %3022 = vmatprep.subr.mxu0 0.0
    %3023 = vmatpush1.msra.mxu0 0.0
    %3024 = vmatprep.subr.mxu0 0.0
    %3025 = vmatpush1.msra.mxu0 0.0
    %3026 = vmatprep.subr.mxu0 0.0
    %3027 = vmatpush1.msra.mxu0 %v2618
    %3028 = vmatprep.subr.mxu0 0.0
    %3029 = vmatpush1.msra.mxu0 %v2617
    %3030 = vmatprep.subr.mxu0 0.0
    %3031 = vmatpush1.msra.mxu0 %v2616
    %3032 = vmatprep.subr.mxu0 0.0
    %3033 = vmatpush1.msra.mxu0 %v2615
    %3034 = vmatprep.subr.mxu0 0.0
    %3035 = vmatpush2.msra.mxu0 0.0
    %3036 = vmatprep.subr.mxu0 0.0
    %3037 = vmatpush2.msra.mxu0 0.0
    %3038 = vmatprep.subr.mxu0 0.0
    %3039 = vmatpush2.msra.mxu0 0.0
    %3040 = vmatprep.subr.mxu0 0.0
    %3041 = vmatpush2.msra.mxu0 0.0
    %3042 = vmatprep.subr.mxu0 0.0
    %3043 = vmatpush2.msra.mxu0 0.0
    %3044 = vmatprep.subr.mxu0 0.0
    %3045 = vmatpush2.msra.mxu0 0.0
    %3046 = vmatprep.subr.mxu0 0.0
    %3047 = vmatpush2.msra.mxu0 0.0
    %3048 = vmatprep.subr.mxu0 0.0
    %3049 = vmatpush2.msra.mxu0 0.0
    %3050 = vmatprep.subr.mxu0 0.0
    %3051 = vmatpush2.msra.mxu0 0.0
    %3052 = vmatprep.subr.mxu0 0.0
    %3053 = vmatpush2.msra.mxu0 0.0
    %3054 = vmatprep.subr.mxu0 0.0
    %3055 = vmatpush2.msra.mxu0 0.0
    %3056 = vmatprep.subr.mxu0 0.0
    %3057 = vmatpush2.msra.mxu0 0.0
    %3058 = vmatprep.subr.mxu0 0.0
    %3059 = vmatpush2.msra.mxu0 0.0
    %3060 = vmatprep.subr.mxu0 0.0
    %3061 = vmatpush2.msra.mxu0 0.0
    %3062 = vmatprep.subr.mxu0 0.0
    %3063 = vmatpush2.msra.mxu0 0.0
    %3064 = vmatprep.subr.mxu0 0.0
    %3065 = vmatpush2.msra.mxu0 0.0
    %3066 = vmatprep.mubr.f32.mxu0 0.0
    %3067 = vmatmul.mubr.f32.gmra.mxu0 %v2860
    %v3068 = vpop.f32.mrf.mxu0
    %v3069 = vadd.f32 %v2763, %v3068
    %v3070 = vpop.f32.mrf.mxu0
    %3071 = vdwg.mxu0
    %v3072 = vld [vmem:[%s858] sm:$0x3]
    %v3073 = vadd.f32 %v3072, %v2929
    %v3074 = vxor.u32 %v3073, 2147483648
    %v3075 = vmul.f32 %v3074, 1.442695
    %v3076 = vpow.pop %v3075
    %v3077 = vadd.f32 %v3076, 1.0
    %v3078 = vrcp.pop %v3077
    %v3079 = vmul.f32 1.0, %v3078
    %v3080 = vld [vmem:[%s867] sm:$0x3]
    %v3081 = vadd.f32 %v3080, %v2999
    %v3082 = vxor.u32 %v3081, 2147483648
    %v3083 = vmul.f32 %v3082, 1.442695
    %v3084 = vpow.pop %v3083
    %v3085 = vadd.f32 %v3084, 1.0
    %v3086 = vrcp.pop %v3085
    %v3087 = vmul.f32 1.0, %v3086
    %v3088 = vld [vmem:[%s876] sm:$0x3]
    %v3089 = vmul.f32 %v3079, %v3069
    %v3090 = vadd.f32 %v3088, %v3089
    %v3091 = vtanh.pop %v3090
    %v3092 = vsub.f32 1.0, %v3087
    %v3093 = vmul.f32 %v3092, %v3091
    %v3094 = vmul.f32 %v3087, %v2857
    %v3095 = vadd.f32 %v3093, %v3094
    %3096 = vst.msk [vmem:[%s885] sm:$0x3] %vm643, %v3095
    %v3098 = vsel %vm210, %v3095, 0
    %3100 = vmatprep.subr.mxu0 0.0
    %3101 = vmatpush1.msra.mxu0 0.0
    %3102 = vmatprep.subr.mxu0 0.0
    %3103 = vmatpush1.msra.mxu0 0.0
    %3104 = vmatprep.subr.mxu0 0.0
    %3105 = vmatpush1.msra.mxu0 0.0
    %3106 = vmatprep.subr.mxu0 0.0
    %3107 = vmatpush1.msra.mxu0 0.0
    %3108 = vmatprep.subr.mxu0 0.0
    %3109 = vmatpush1.msra.mxu0 0.0
    %3110 = vmatprep.subr.mxu0 0.0
    %3111 = vmatpush1.msra.mxu0 0.0
    %3112 = vmatprep.subr.mxu0 0.0
    %3113 = vmatpush1.msra.mxu0 0.0
    %3114 = vmatprep.subr.mxu0 0.0
    %3115 = vmatpush1.msra.mxu0 0.0
    %3116 = vmatprep.subr.mxu0 0.0
    %3117 = vmatpush1.msra.mxu0 0.0
    %3118 = vmatprep.subr.mxu0 0.0
    %3119 = vmatpush1.msra.mxu0 0.0
    %3120 = vmatprep.subr.mxu0 0.0
    %3121 = vmatpush1.msra.mxu0 0.0
    %3122 = vmatprep.subr.mxu0 0.0
    %3123 = vmatpush1.msra.mxu0 0.0
    %3124 = vmatprep.subr.mxu0 0.0
    %3125 = vmatpush1.msra.mxu0 %v2608
    %3126 = vmatprep.subr.mxu0 0.0
    %3127 = vmatpush1.msra.mxu0 %v2607
    %3128 = vmatprep.subr.mxu0 0.0
    %3129 = vmatpush1.msra.mxu0 %v2606
    %3130 = vmatprep.subr.mxu0 0.0
    %3131 = vmatpush1.msra.mxu0 %v2605
    %3132 = vmatprep.subr.mxu0 0.0
    %3133 = vmatpush2.msra.mxu0 0.0
    %3134 = vmatprep.subr.mxu0 0.0
    %3135 = vmatpush2.msra.mxu0 0.0
    %3136 = vmatprep.subr.mxu0 0.0
    %3137 = vmatpush2.msra.mxu0 0.0
    %3138 = vmatprep.subr.mxu0 0.0
    %3139 = vmatpush2.msra.mxu0 0.0
    %3140 = vmatprep.subr.mxu0 0.0
    %3141 = vmatpush2.msra.mxu0 0.0
    %3142 = vmatprep.subr.mxu0 0.0
    %3143 = vmatpush2.msra.mxu0 0.0
    %3144 = vmatprep.subr.mxu0 0.0
    %3145 = vmatpush2.msra.mxu0 0.0
    %3146 = vmatprep.subr.mxu0 0.0
    %3147 = vmatpush2.msra.mxu0 0.0
    %3148 = vmatprep.subr.mxu0 0.0
    %3149 = vmatpush2.msra.mxu0 0.0
    %3150 = vmatprep.subr.mxu0 0.0
    %3151 = vmatpush2.msra.mxu0 0.0
    %3152 = vmatprep.subr.mxu0 0.0
    %3153 = vmatpush2.msra.mxu0 0.0
    %3154 = vmatprep.subr.mxu0 0.0
    %3155 = vmatpush2.msra.mxu0 0.0
    %3156 = vmatprep.subr.mxu0 0.0
    %3157 = vmatpush2.msra.mxu0 0.0
    %3158 = vmatprep.subr.mxu0 0.0
    %3159 = vmatpush2.msra.mxu0 0.0
    %3160 = vmatprep.subr.mxu0 0.0
    %3161 = vmatpush2.msra.mxu0 0.0
    %3162 = vmatprep.subr.mxu0 0.0
    %3163 = vmatpush2.msra.mxu0 0.0
    %3164 = vmatprep.mubr.f32.mxu0 0.0
    %3165 = vmatmul.mubr.f32.gmra.mxu0 %v3098
    %v3166 = vpop.f32.mrf.mxu0
    %v3167 = vadd.f32 0.0, %v3166
    %v3168 = vpop.f32.mrf.mxu0
    %3169 = vdwg.mxu0
    %3170 = vmatprep.subr.mxu0 0.0
    %3171 = vmatpush1.msra.mxu0 0.0
    %3172 = vmatprep.subr.mxu0 0.0
    %3173 = vmatpush1.msra.mxu0 0.0
    %3174 = vmatprep.subr.mxu0 0.0
    %3175 = vmatpush1.msra.mxu0 0.0
    %3176 = vmatprep.subr.mxu0 0.0
    %3177 = vmatpush1.msra.mxu0 0.0
    %3178 = vmatprep.subr.mxu0 0.0
    %3179 = vmatpush1.msra.mxu0 0.0
    %3180 = vmatprep.subr.mxu0 0.0
    %3181 = vmatpush1.msra.mxu0 0.0
    %3182 = vmatprep.subr.mxu0 0.0
    %3183 = vmatpush1.msra.mxu0 0.0
    %3184 = vmatprep.subr.mxu0 0.0
    %3185 = vmatpush1.msra.mxu0 0.0
    %3186 = vmatprep.subr.mxu0 0.0
    %3187 = vmatpush1.msra.mxu0 0.0
    %3188 = vmatprep.subr.mxu0 0.0
    %3189 = vmatpush1.msra.mxu0 0.0
    %3190 = vmatprep.subr.mxu0 0.0
    %3191 = vmatpush1.msra.mxu0 0.0
    %3192 = vmatprep.subr.mxu0 0.0
    %3193 = vmatpush1.msra.mxu0 0.0
    %3194 = vmatprep.subr.mxu0 0.0
    %3195 = vmatpush1.msra.mxu0 %v2613
    %3196 = vmatprep.subr.mxu0 0.0
    %3197 = vmatpush1.msra.mxu0 %v2612
    %3198 = vmatprep.subr.mxu0 0.0
    %3199 = vmatpush1.msra.mxu0 %v2611
    %3200 = vmatprep.subr.mxu0 0.0
    %3201 = vmatpush1.msra.mxu0 %v2610
    %3202 = vmatprep.subr.mxu0 0.0
    %3203 = vmatpush2.msra.mxu0 0.0
    %3204 = vmatprep.subr.mxu0 0.0
    %3205 = vmatpush2.msra.mxu0 0.0
    %3206 = vmatprep.subr.mxu0 0.0
    %3207 = vmatpush2.msra.mxu0 0.0
    %3208 = vmatprep.subr.mxu0 0.0
    %3209 = vmatpush2.msra.mxu0 0.0
    %3210 = vmatprep.subr.mxu0 0.0
    %3211 = vmatpush2.msra.mxu0 0.0
    %3212 = vmatprep.subr.mxu0 0.0
    %3213 = vmatpush2.msra.mxu0 0.0
    %3214 = vmatprep.subr.mxu0 0.0
    %3215 = vmatpush2.msra.mxu0 0.0
    %3216 = vmatprep.subr.mxu0 0.0
    %3217 = vmatpush2.msra.mxu0 0.0
    %3218 = vmatprep.subr.mxu0 0.0
    %3219 = vmatpush2.msra.mxu0 0.0
    %3220 = vmatprep.subr.mxu0 0.0
    %3221 = vmatpush2.msra.mxu0 0.0
    %3222 = vmatprep.subr.mxu0 0.0
    %3223 = vmatpush2.msra.mxu0 0.0
    %3224 = vmatprep.subr.mxu0 0.0
    %3225 = vmatpush2.msra.mxu0 0.0
    %3226 = vmatprep.subr.mxu0 0.0
    %3227 = vmatpush2.msra.mxu0 0.0
    %3228 = vmatprep.subr.mxu0 0.0
    %3229 = vmatpush2.msra.mxu0 0.0
    %3230 = vmatprep.subr.mxu0 0.0
    %3231 = vmatpush2.msra.mxu0 0.0
    %3232 = vmatprep.subr.mxu0 0.0
    %3233 = vmatpush2.msra.mxu0 0.0
    %3234 = vmatprep.mubr.f32.mxu0 0.0
    %3235 = vmatmul.mubr.f32.gmra.mxu0 %v3098
    %v3236 = vpop.f32.mrf.mxu0
    %v3237 = vadd.f32 0.0, %v3236
    %v3238 = vpop.f32.mrf.mxu0
    %3239 = vdwg.mxu0
    %3240 = vmatprep.subr.mxu0 0.0
    %3241 = vmatpush1.msra.mxu0 0.0
    %3242 = vmatprep.subr.mxu0 0.0
    %3243 = vmatpush1.msra.mxu0 0.0
    %3244 = vmatprep.subr.mxu0 0.0
    %3245 = vmatpush1.msra.mxu0 0.0
    %3246 = vmatprep.subr.mxu0 0.0
    %3247 = vmatpush1.msra.mxu0 0.0
    %3248 = vmatprep.subr.mxu0 0.0
    %3249 = vmatpush1.msra.mxu0 0.0
    %3250 = vmatprep.subr.mxu0 0.0
    %3251 = vmatpush1.msra.mxu0 0.0
    %3252 = vmatprep.subr.mxu0 0.0
    %3253 = vmatpush1.msra.mxu0 0.0
    %3254 = vmatprep.subr.mxu0 0.0
    %3255 = vmatpush1.msra.mxu0 0.0
    %3256 = vmatprep.subr.mxu0 0.0
    %3257 = vmatpush1.msra.mxu0 0.0
    %3258 = vmatprep.subr.mxu0 0.0
    %3259 = vmatpush1.msra.mxu0 0.0
    %3260 = vmatprep.subr.mxu0 0.0
    %3261 = vmatpush1.msra.mxu0 0.0
    %3262 = vmatprep.subr.mxu0 0.0
    %3263 = vmatpush1.msra.mxu0 0.0
    %3264 = vmatprep.subr.mxu0 0.0
    %3265 = vmatpush1.msra.mxu0 %v2618
    %3266 = vmatprep.subr.mxu0 0.0
    %3267 = vmatpush1.msra.mxu0 %v2617
    %3268 = vmatprep.subr.mxu0 0.0
    %3269 = vmatpush1.msra.mxu0 %v2616
    %3270 = vmatprep.subr.mxu0 0.0
    %3271 = vmatpush1.msra.mxu0 %v2615
    %3272 = vmatprep.subr.mxu0 0.0
    %3273 = vmatpush2.msra.mxu0 0.0
    %3274 = vmatprep.subr.mxu0 0.0
    %3275 = vmatpush2.msra.mxu0 0.0
    %3276 = vmatprep.subr.mxu0 0.0
    %3277 = vmatpush2.msra.mxu0 0.0
    %3278 = vmatprep.subr.mxu0 0.0
    %3279 = vmatpush2.msra.mxu0 0.0
    %3280 = vmatprep.subr.mxu0 0.0
    %3281 = vmatpush2.msra.mxu0 0.0
    %3282 = vmatprep.subr.mxu0 0.0
    %3283 = vmatpush2.msra.mxu0 0.0
    %3284 = vmatprep.subr.mxu0 0.0
    %3285 = vmatpush2.msra.mxu0 0.0
    %3286 = vmatprep.subr.mxu0 0.0
    %3287 = vmatpush2.msra.mxu0 0.0
    %3288 = vmatprep.subr.mxu0 0.0
    %3289 = vmatpush2.msra.mxu0 0.0
    %3290 = vmatprep.subr.mxu0 0.0
    %3291 = vmatpush2.msra.mxu0 0.0
    %3292 = vmatprep.subr.mxu0 0.0
    %3293 = vmatpush2.msra.mxu0 0.0
    %3294 = vmatprep.subr.mxu0 0.0
    %3295 = vmatpush2.msra.mxu0 0.0
    %3296 = vmatprep.subr.mxu0 0.0
    %3297 = vmatpush2.msra.mxu0 0.0
    %3298 = vmatprep.subr.mxu0 0.0
    %3299 = vmatpush2.msra.mxu0 0.0
    %3300 = vmatprep.subr.mxu0 0.0
    %3301 = vmatpush2.msra.mxu0 0.0
    %3302 = vmatprep.subr.mxu0 0.0
    %3303 = vmatpush2.msra.mxu0 0.0
    %3304 = vmatprep.mubr.f32.mxu0 0.0
    %3305 = vmatmul.mubr.f32.gmra.mxu0 %v3098
    %v3306 = vpop.f32.mrf.mxu0
    %v3307 = vadd.f32 %v2763, %v3306
    %v3308 = vpop.f32.mrf.mxu0
    %3309 = vdwg.mxu0
    %v3310 = vld [vmem:[%s1100] sm:$0x3]
    %v3311 = vadd.f32 %v3310, %v3167
    %v3312 = vxor.u32 %v3311, 2147483648
    %v3313 = vmul.f32 %v3312, 1.442695
    %v3314 = vpow.pop %v3313
    %v3315 = vadd.f32 %v3314, 1.0
    %v3316 = vrcp.pop %v3315
    %v3317 = vmul.f32 1.0, %v3316
    %v3318 = vld [vmem:[%s1109] sm:$0x3]
    %v3319 = vadd.f32 %v3318, %v3237
    %v3320 = vxor.u32 %v3319, 2147483648
    %v3321 = vmul.f32 %v3320, 1.442695
    %v3322 = vpow.pop %v3321
    %v3323 = vadd.f32 %v3322, 1.0
    %v3324 = vrcp.pop %v3323
    %v3325 = vmul.f32 1.0, %v3324
    %v3326 = vld [vmem:[%s1118] sm:$0x3]
    %v3327 = vmul.f32 %v3317, %v3307
    %v3328 = vadd.f32 %v3326, %v3327
    %v3329 = vtanh.pop %v3328
    %v3330 = vsub.f32 1.0, %v3325
    %v3331 = vmul.f32 %v3330, %v3329
    %v3332 = vmul.f32 %v3325, %v3095
    %v3333 = vadd.f32 %v3331, %v3332
    %3334 = vst.msk [vmem:[%s1127] sm:$0x3] %vm643, %v3333
    %v3336 = vsel %vm210, %v3333, 0
    %3338 = vmatprep.subr.mxu0 0.0
    %3339 = vmatpush1.msra.mxu0 0.0
    %3340 = vmatprep.subr.mxu0 0.0
    %3341 = vmatpush1.msra.mxu0 0.0
    %3342 = vmatprep.subr.mxu0 0.0
    %3343 = vmatpush1.msra.mxu0 0.0
    %3344 = vmatprep.subr.mxu0 0.0
    %3345 = vmatpush1.msra.mxu0 0.0
    %3346 = vmatprep.subr.mxu0 0.0
    %3347 = vmatpush1.msra.mxu0 0.0
    %3348 = vmatprep.subr.mxu0 0.0
    %3349 = vmatpush1.msra.mxu0 0.0
    %3350 = vmatprep.subr.mxu0 0.0
    %3351 = vmatpush1.msra.mxu0 0.0
    %3352 = vmatprep.subr.mxu0 0.0
    %3353 = vmatpush1.msra.mxu0 0.0
    %3354 = vmatprep.subr.mxu0 0.0
    %3355 = vmatpush1.msra.mxu0 0.0
    %3356 = vmatprep.subr.mxu0 0.0
    %3357 = vmatpush1.msra.mxu0 0.0
    %3358 = vmatprep.subr.mxu0 0.0
    %3359 = vmatpush1.msra.mxu0 0.0
    %3360 = vmatprep.subr.mxu0 0.0
    %3361 = vmatpush1.msra.mxu0 0.0
    %3362 = vmatprep.subr.mxu0 0.0
    %3363 = vmatpush1.msra.mxu0 %v2608
    %3364 = vmatprep.subr.mxu0 0.0
    %3365 = vmatpush1.msra.mxu0 %v2607
    %3366 = vmatprep.subr.mxu0 0.0
    %3367 = vmatpush1.msra.mxu0 %v2606
    %3368 = vmatprep.subr.mxu0 0.0
    %3369 = vmatpush1.msra.mxu0 %v2605
    %3370 = vmatprep.subr.mxu0 0.0
    %3371 = vmatpush2.msra.mxu0 0.0
    %3372 = vmatprep.subr.mxu0 0.0
    %3373 = vmatpush2.msra.mxu0 0.0
    %3374 = vmatprep.subr.mxu0 0.0
    %3375 = vmatpush2.msra.mxu0 0.0
    %3376 = vmatprep.subr.mxu0 0.0
    %3377 = vmatpush2.msra.mxu0 0.0
    %3378 = vmatprep.subr.mxu0 0.0
    %3379 = vmatpush2.msra.mxu0 0.0
    %3380 = vmatprep.subr.mxu0 0.0
    %3381 = vmatpush2.msra.mxu0 0.0
    %3382 = vmatprep.subr.mxu0 0.0
    %3383 = vmatpush2.msra.mxu0 0.0
    %3384 = vmatprep.subr.mxu0 0.0
    %3385 = vmatpush2.msra.mxu0 0.0
    %3386 = vmatprep.subr.mxu0 0.0
    %3387 = vmatpush2.msra.mxu0 0.0
    %3388 = vmatprep.subr.mxu0 0.0
    %3389 = vmatpush2.msra.mxu0 0.0
    %3390 = vmatprep.subr.mxu0 0.0
    %3391 = vmatpush2.msra.mxu0 0.0
    %3392 = vmatprep.subr.mxu0 0.0
    %3393 = vmatpush2.msra.mxu0 0.0
    %3394 = vmatprep.subr.mxu0 0.0
    %3395 = vmatpush2.msra.mxu0 0.0
    %3396 = vmatprep.subr.mxu0 0.0
    %3397 = vmatpush2.msra.mxu0 0.0
    %3398 = vmatprep.subr.mxu0 0.0
    %3399 = vmatpush2.msra.mxu0 0.0
    %3400 = vmatprep.subr.mxu0 0.0
    %3401 = vmatpush2.msra.mxu0 0.0
    %3402 = vmatprep.mubr.f32.mxu0 0.0
    %3403 = vmatmul.mubr.f32.gmra.mxu0 %v3336
    %v3404 = vpop.f32.mrf.mxu0
    %v3405 = vadd.f32 0.0, %v3404
    %v3406 = vpop.f32.mrf.mxu0
    %3407 = vdwg.mxu0
    %3408 = vmatprep.subr.mxu0 0.0
    %3409 = vmatpush1.msra.mxu0 0.0
    %3410 = vmatprep.subr.mxu0 0.0
    %3411 = vmatpush1.msra.mxu0 0.0
    %3412 = vmatprep.subr.mxu0 0.0
    %3413 = vmatpush1.msra.mxu0 0.0
    %3414 = vmatprep.subr.mxu0 0.0
    %3415 = vmatpush1.msra.mxu0 0.0
    %3416 = vmatprep.subr.mxu0 0.0
    %3417 = vmatpush1.msra.mxu0 0.0
    %3418 = vmatprep.subr.mxu0 0.0
    %3419 = vmatpush1.msra.mxu0 0.0
    %3420 = vmatprep.subr.mxu0 0.0
    %3421 = vmatpush1.msra.mxu0 0.0
    %3422 = vmatprep.subr.mxu0 0.0
    %3423 = vmatpush1.msra.mxu0 0.0
    %3424 = vmatprep.subr.mxu0 0.0
    %3425 = vmatpush1.msra.mxu0 0.0
    %3426 = vmatprep.subr.mxu0 0.0
    %3427 = vmatpush1.msra.mxu0 0.0
    %3428 = vmatprep.subr.mxu0 0.0
    %3429 = vmatpush1.msra.mxu0 0.0
    %3430 = vmatprep.subr.mxu0 0.0
    %3431 = vmatpush1.msra.mxu0 0.0
    %3432 = vmatprep.subr.mxu0 0.0
    %3433 = vmatpush1.msra.mxu0 %v2613
    %3434 = vmatprep.subr.mxu0 0.0
    %3435 = vmatpush1.msra.mxu0 %v2612
    %3436 = vmatprep.subr.mxu0 0.0
    %3437 = vmatpush1.msra.mxu0 %v2611
    %3438 = vmatprep.subr.mxu0 0.0
    %3439 = vmatpush1.msra.mxu0 %v2610
    %3440 = vmatprep.subr.mxu0 0.0
    %3441 = vmatpush2.msra.mxu0 0.0
    %3442 = vmatprep.subr.mxu0 0.0
    %3443 = vmatpush2.msra.mxu0 0.0
    %3444 = vmatprep.subr.mxu0 0.0
    %3445 = vmatpush2.msra.mxu0 0.0
    %3446 = vmatprep.subr.mxu0 0.0
    %3447 = vmatpush2.msra.mxu0 0.0
    %3448 = vmatprep.subr.mxu0 0.0
    %3449 = vmatpush2.msra.mxu0 0.0
    %3450 = vmatprep.subr.mxu0 0.0
    %3451 = vmatpush2.msra.mxu0 0.0
    %3452 = vmatprep.subr.mxu0 0.0
    %3453 = vmatpush2.msra.mxu0 0.0
    %3454 = vmatprep.subr.mxu0 0.0
    %3455 = vmatpush2.msra.mxu0 0.0
    %3456 = vmatprep.subr.mxu0 0.0
    %3457 = vmatpush2.msra.mxu0 0.0
    %3458 = vmatprep.subr.mxu0 0.0
    %3459 = vmatpush2.msra.mxu0 0.0
    %3460 = vmatprep.subr.mxu0 0.0
    %3461 = vmatpush2.msra.mxu0 0.0
    %3462 = vmatprep.subr.mxu0 0.0
    %3463 = vmatpush2.msra.mxu0 0.0
    %3464 = vmatprep.subr.mxu0 0.0
    %3465 = vmatpush2.msra.mxu0 0.0
    %3466 = vmatprep.subr.mxu0 0.0
    %3467 = vmatpush2.msra.mxu0 0.0
    %3468 = vmatprep.subr.mxu0 0.0
    %3469 = vmatpush2.msra.mxu0 0.0
    %3470 = vmatprep.subr.mxu0 0.0
    %3471 = vmatpush2.msra.mxu0 0.0
    %3472 = vmatprep.mubr.f32.mxu0 0.0
    %3473 = vmatmul.mubr.f32.gmra.mxu0 %v3336
    %v3474 = vpop.f32.mrf.mxu0
    %v3475 = vadd.f32 0.0, %v3474
    %v3476 = vpop.f32.mrf.mxu0
    %3477 = vdwg.mxu0
    %3478 = vmatprep.subr.mxu0 0.0
    %3479 = vmatpush1.msra.mxu0 0.0
    %3480 = vmatprep.subr.mxu0 0.0
    %3481 = vmatpush1.msra.mxu0 0.0
    %3482 = vmatprep.subr.mxu0 0.0
    %3483 = vmatpush1.msra.mxu0 0.0
    %3484 = vmatprep.subr.mxu0 0.0
    %3485 = vmatpush1.msra.mxu0 0.0
    %3486 = vmatprep.subr.mxu0 0.0
    %3487 = vmatpush1.msra.mxu0 0.0
    %3488 = vmatprep.subr.mxu0 0.0
    %3489 = vmatpush1.msra.mxu0 0.0
    %3490 = vmatprep.subr.mxu0 0.0
    %3491 = vmatpush1.msra.mxu0 0.0
    %3492 = vmatprep.subr.mxu0 0.0
    %3493 = vmatpush1.msra.mxu0 0.0
    %3494 = vmatprep.subr.mxu0 0.0
    %3495 = vmatpush1.msra.mxu0 0.0
    %3496 = vmatprep.subr.mxu0 0.0
    %3497 = vmatpush1.msra.mxu0 0.0
    %3498 = vmatprep.subr.mxu0 0.0
    %3499 = vmatpush1.msra.mxu0 0.0
    %3500 = vmatprep.subr.mxu0 0.0
    %3501 = vmatpush1.msra.mxu0 0.0
    %3502 = vmatprep.subr.mxu0 0.0
    %3503 = vmatpush1.msra.mxu0 %v2618
    %3504 = vmatprep.subr.mxu0 0.0
    %3505 = vmatpush1.msra.mxu0 %v2617
    %3506 = vmatprep.subr.mxu0 0.0
    %3507 = vmatpush1.msra.mxu0 %v2616
    %3508 = vmatprep.subr.mxu0 0.0
    %3509 = vmatpush1.msra.mxu0 %v2615
    %3510 = vmatprep.subr.mxu0 0.0
    %3511 = vmatpush2.msra.mxu0 0.0
    %3512 = vmatprep.subr.mxu0 0.0
    %3513 = vmatpush2.msra.mxu0 0.0
    %3514 = vmatprep.subr.mxu0 0.0
    %3515 = vmatpush2.msra.mxu0 0.0
    %3516 = vmatprep.subr.mxu0 0.0
    %3517 = vmatpush2.msra.mxu0 0.0
    %3518 = vmatprep.subr.mxu0 0.0
    %3519 = vmatpush2.msra.mxu0 0.0
    %3520 = vmatprep.subr.mxu0 0.0
    %3521 = vmatpush2.msra.mxu0 0.0
    %3522 = vmatprep.subr.mxu0 0.0
    %3523 = vmatpush2.msra.mxu0 0.0
    %3524 = vmatprep.subr.mxu0 0.0
    %3525 = vmatpush2.msra.mxu0 0.0
    %3526 = vmatprep.subr.mxu0 0.0
    %3527 = vmatpush2.msra.mxu0 0.0
    %3528 = vmatprep.subr.mxu0 0.0
    %3529 = vmatpush2.msra.mxu0 0.0
    %3530 = vmatprep.subr.mxu0 0.0
    %3531 = vmatpush2.msra.mxu0 0.0
    %3532 = vmatprep.subr.mxu0 0.0
    %3533 = vmatpush2.msra.mxu0 0.0
    %3534 = vmatprep.subr.mxu0 0.0
    %3535 = vmatpush2.msra.mxu0 0.0
    %3536 = vmatprep.subr.mxu0 0.0
    %3537 = vmatpush2.msra.mxu0 0.0
    %3538 = vmatprep.subr.mxu0 0.0
    %3539 = vmatpush2.msra.mxu0 0.0
    %3540 = vmatprep.subr.mxu0 0.0
    %3541 = vmatpush2.msra.mxu0 0.0
    %3542 = vmatprep.mubr.f32.mxu0 0.0
    %3543 = vmatmul.mubr.f32.gmra.mxu0 %v3336
    %v3544 = vpop.f32.mrf.mxu0
    %v3545 = vadd.f32 %v2763, %v3544
    %v3546 = vpop.f32.mrf.mxu0
    %3547 = vdwg.mxu0
    %v3548 = vld [vmem:[%s1342] sm:$0x3]
    %v3549 = vadd.f32 %v3548, %v3405
    %v3550 = vxor.u32 %v3549, 2147483648
    %v3551 = vmul.f32 %v3550, 1.442695
    %v3552 = vpow.pop %v3551
    %v3553 = vadd.f32 %v3552, 1.0
    %v3554 = vrcp.pop %v3553
    %v3555 = vmul.f32 1.0, %v3554
    %v3556 = vld [vmem:[%s1351] sm:$0x3]
    %v3557 = vadd.f32 %v3556, %v3475
    %v3558 = vxor.u32 %v3557, 2147483648
    %v3559 = vmul.f32 %v3558, 1.442695
    %v3560 = vpow.pop %v3559
    %v3561 = vadd.f32 %v3560, 1.0
    %v3562 = vrcp.pop %v3561
    %v3563 = vmul.f32 1.0, %v3562
    %v3564 = vld [vmem:[%s1360] sm:$0x3]
    %v3565 = vmul.f32 %v3555, %v3545
    %v3566 = vadd.f32 %v3564, %v3565
    %v3567 = vtanh.pop %v3566
    %v3568 = vsub.f32 1.0, %v3563
    %v3569 = vmul.f32 %v3568, %v3567
    %v3570 = vmul.f32 %v3563, %v3333
    %v3571 = vadd.f32 %v3569, %v3570
    %3572 = vst.msk [vmem:[%s1369] sm:$0x3] %vm643, %v3571
    %v3574 = vsel %vm210, %v3571, 0
    %3576 = vmatprep.subr.mxu0 0.0
    %3577 = vmatpush1.msra.mxu0 0.0
    %3578 = vmatprep.subr.mxu0 0.0
    %3579 = vmatpush1.msra.mxu0 0.0
    %3580 = vmatprep.subr.mxu0 0.0
    %3581 = vmatpush1.msra.mxu0 0.0
    %3582 = vmatprep.subr.mxu0 0.0
    %3583 = vmatpush1.msra.mxu0 0.0
    %3584 = vmatprep.subr.mxu0 0.0
    %3585 = vmatpush1.msra.mxu0 0.0
    %3586 = vmatprep.subr.mxu0 0.0
    %3587 = vmatpush1.msra.mxu0 0.0
    %3588 = vmatprep.subr.mxu0 0.0
    %3589 = vmatpush1.msra.mxu0 0.0
    %3590 = vmatprep.subr.mxu0 0.0
    %3591 = vmatpush1.msra.mxu0 0.0
    %3592 = vmatprep.subr.mxu0 0.0
    %3593 = vmatpush1.msra.mxu0 0.0
    %3594 = vmatprep.subr.mxu0 0.0
    %3595 = vmatpush1.msra.mxu0 0.0
    %3596 = vmatprep.subr.mxu0 0.0
    %3597 = vmatpush1.msra.mxu0 0.0
    %3598 = vmatprep.subr.mxu0 0.0
    %3599 = vmatpush1.msra.mxu0 0.0
    %3600 = vmatprep.subr.mxu0 0.0
    %3601 = vmatpush1.msra.mxu0 %v2608
    %3602 = vmatprep.subr.mxu0 0.0
    %3603 = vmatpush1.msra.mxu0 %v2607
    %3604 = vmatprep.subr.mxu0 0.0
    %3605 = vmatpush1.msra.mxu0 %v2606
    %3606 = vmatprep.subr.mxu0 0.0
    %3607 = vmatpush1.msra.mxu0 %v2605
    %3608 = vmatprep.subr.mxu0 0.0
    %3609 = vmatpush2.msra.mxu0 0.0
    %3610 = vmatprep.subr.mxu0 0.0
    %3611 = vmatpush2.msra.mxu0 0.0
    %3612 = vmatprep.subr.mxu0 0.0
    %3613 = vmatpush2.msra.mxu0 0.0
    %3614 = vmatprep.subr.mxu0 0.0
    %3615 = vmatpush2.msra.mxu0 0.0
    %3616 = vmatprep.subr.mxu0 0.0
    %3617 = vmatpush2.msra.mxu0 0.0
    %3618 = vmatprep.subr.mxu0 0.0
    %3619 = vmatpush2.msra.mxu0 0.0
    %3620 = vmatprep.subr.mxu0 0.0
    %3621 = vmatpush2.msra.mxu0 0.0
    %3622 = vmatprep.subr.mxu0 0.0
    %3623 = vmatpush2.msra.mxu0 0.0
    %3624 = vmatprep.subr.mxu0 0.0
    %3625 = vmatpush2.msra.mxu0 0.0
    %3626 = vmatprep.subr.mxu0 0.0
    %3627 = vmatpush2.msra.mxu0 0.0
    %3628 = vmatprep.subr.mxu0 0.0
    %3629 = vmatpush2.msra.mxu0 0.0
    %3630 = vmatprep.subr.mxu0 0.0
    %3631 = vmatpush2.msra.mxu0 0.0
    %3632 = vmatprep.subr.mxu0 0.0
    %3633 = vmatpush2.msra.mxu0 0.0
    %3634 = vmatprep.subr.mxu0 0.0
    %3635 = vmatpush2.msra.mxu0 0.0
    %3636 = vmatprep.subr.mxu0 0.0
    %3637 = vmatpush2.msra.mxu0 0.0
    %3638 = vmatprep.subr.mxu0 0.0
    %3639 = vmatpush2.msra.mxu0 0.0
    %3640 = vmatprep.mubr.f32.mxu0 0.0
    %3641 = vmatmul.mubr.f32.gmra.mxu0 %v3574
    %v3642 = vpop.f32.mrf.mxu0
    %v3643 = vadd.f32 0.0, %v3642
    %v3644 = vpop.f32.mrf.mxu0
    %3645 = vdwg.mxu0
    %3646 = vmatprep.subr.mxu0 0.0
    %3647 = vmatpush1.msra.mxu0 0.0
    %3648 = vmatprep.subr.mxu0 0.0
    %3649 = vmatpush1.msra.mxu0 0.0
    %3650 = vmatprep.subr.mxu0 0.0
    %3651 = vmatpush1.msra.mxu0 0.0
    %3652 = vmatprep.subr.mxu0 0.0
    %3653 = vmatpush1.msra.mxu0 0.0
    %3654 = vmatprep.subr.mxu0 0.0
    %3655 = vmatpush1.msra.mxu0 0.0
    %3656 = vmatprep.subr.mxu0 0.0
    %3657 = vmatpush1.msra.mxu0 0.0
    %3658 = vmatprep.subr.mxu0 0.0
    %3659 = vmatpush1.msra.mxu0 0.0
    %3660 = vmatprep.subr.mxu0 0.0
    %3661 = vmatpush1.msra.mxu0 0.0
    %3662 = vmatprep.subr.mxu0 0.0
    %3663 = vmatpush1.msra.mxu0 0.0
    %3664 = vmatprep.subr.mxu0 0.0
    %3665 = vmatpush1.msra.mxu0 0.0
    %3666 = vmatprep.subr.mxu0 0.0
    %3667 = vmatpush1.msra.mxu0 0.0
    %3668 = vmatprep.subr.mxu0 0.0
    %3669 = vmatpush1.msra.mxu0 0.0
    %3670 = vmatprep.subr.mxu0 0.0
    %3671 = vmatpush1.msra.mxu0 %v2613
    %3672 = vmatprep.subr.mxu0 0.0
    %3673 = vmatpush1.msra.mxu0 %v2612
    %3674 = vmatprep.subr.mxu0 0.0
    %3675 = vmatpush1.msra.mxu0 %v2611
    %3676 = vmatprep.subr.mxu0 0.0
    %3677 = vmatpush1.msra.mxu0 %v2610
    %3678 = vmatprep.subr.mxu0 0.0
    %3679 = vmatpush2.msra.mxu0 0.0
    %3680 = vmatprep.subr.mxu0 0.0
    %3681 = vmatpush2.msra.mxu0 0.0
    %3682 = vmatprep.subr.mxu0 0.0
    %3683 = vmatpush2.msra.mxu0 0.0
    %3684 = vmatprep.subr.mxu0 0.0
    %3685 = vmatpush2.msra.mxu0 0.0
    %3686 = vmatprep.subr.mxu0 0.0
    %3687 = vmatpush2.msra.mxu0 0.0
    %3688 = vmatprep.subr.mxu0 0.0
    %3689 = vmatpush2.msra.mxu0 0.0
    %3690 = vmatprep.subr.mxu0 0.0
    %3691 = vmatpush2.msra.mxu0 0.0
    %3692 = vmatprep.subr.mxu0 0.0
    %3693 = vmatpush2.msra.mxu0 0.0
    %3694 = vmatprep.subr.mxu0 0.0
    %3695 = vmatpush2.msra.mxu0 0.0
    %3696 = vmatprep.subr.mxu0 0.0
    %3697 = vmatpush2.msra.mxu0 0.0
    %3698 = vmatprep.subr.mxu0 0.0
    %3699 = vmatpush2.msra.mxu0 0.0
    %3700 = vmatprep.subr.mxu0 0.0
    %3701 = vmatpush2.msra.mxu0 0.0
    %3702 = vmatprep.subr.mxu0 0.0
    %3703 = vmatpush2.msra.mxu0 0.0
    %3704 = vmatprep.subr.mxu0 0.0
    %3705 = vmatpush2.msra.mxu0 0.0
    %3706 = vmatprep.subr.mxu0 0.0
    %3707 = vmatpush2.msra.mxu0 0.0
    %3708 = vmatprep.subr.mxu0 0.0
    %3709 = vmatpush2.msra.mxu0 0.0
    %3710 = vmatprep.mubr.f32.mxu0 0.0
    %3711 = vmatmul.mubr.f32.gmra.mxu0 %v3574
    %v3712 = vpop.f32.mrf.mxu0
    %v3713 = vadd.f32 0.0, %v3712
    %v3714 = vpop.f32.mrf.mxu0
    %3715 = vdwg.mxu0
    %3716 = vmatprep.subr.mxu0 0.0
    %3717 = vmatpush1.msra.mxu0 0.0
    %3718 = vmatprep.subr.mxu0 0.0
    %3719 = vmatpush1.msra.mxu0 0.0
    %3720 = vmatprep.subr.mxu0 0.0
    %3721 = vmatpush1.msra.mxu0 0.0
    %3722 = vmatprep.subr.mxu0 0.0
    %3723 = vmatpush1.msra.mxu0 0.0
    %3724 = vmatprep.subr.mxu0 0.0
    %3725 = vmatpush1.msra.mxu0 0.0
    %3726 = vmatprep.subr.mxu0 0.0
    %3727 = vmatpush1.msra.mxu0 0.0
    %3728 = vmatprep.subr.mxu0 0.0
    %3729 = vmatpush1.msra.mxu0 0.0
    %3730 = vmatprep.subr.mxu0 0.0
    %3731 = vmatpush1.msra.mxu0 0.0
    %3732 = vmatprep.subr.mxu0 0.0
    %3733 = vmatpush1.msra.mxu0 0.0
    %3734 = vmatprep.subr.mxu0 0.0
    %3735 = vmatpush1.msra.mxu0 0.0
    %3736 = vmatprep.subr.mxu0 0.0
    %3737 = vmatpush1.msra.mxu0 0.0
    %3738 = vmatprep.subr.mxu0 0.0
    %3739 = vmatpush1.msra.mxu0 0.0
    %3740 = vmatprep.subr.mxu0 0.0
    %3741 = vmatpush1.msra.mxu0 %v2618
    %3742 = vmatprep.subr.mxu0 0.0
    %3743 = vmatpush1.msra.mxu0 %v2617
    %3744 = vmatprep.subr.mxu0 0.0
    %3745 = vmatpush1.msra.mxu0 %v2616
    %3746 = vmatprep.subr.mxu0 0.0
    %3747 = vmatpush1.msra.mxu0 %v2615
    %3748 = vmatprep.subr.mxu0 0.0
    %3749 = vmatpush2.msra.mxu0 0.0
    %3750 = vmatprep.subr.mxu0 0.0
    %3751 = vmatpush2.msra.mxu0 0.0
    %3752 = vmatprep.subr.mxu0 0.0
    %3753 = vmatpush2.msra.mxu0 0.0
    %3754 = vmatprep.subr.mxu0 0.0
    %3755 = vmatpush2.msra.mxu0 0.0
    %3756 = vmatprep.subr.mxu0 0.0
    %3757 = vmatpush2.msra.mxu0 0.0
    %3758 = vmatprep.subr.mxu0 0.0
    %3759 = vmatpush2.msra.mxu0 0.0
    %3760 = vmatprep.subr.mxu0 0.0
    %3761 = vmatpush2.msra.mxu0 0.0
    %3762 = vmatprep.subr.mxu0 0.0
    %3763 = vmatpush2.msra.mxu0 0.0
    %3764 = vmatprep.subr.mxu0 0.0
    %3765 = vmatpush2.msra.mxu0 0.0
    %3766 = vmatprep.subr.mxu0 0.0
    %3767 = vmatpush2.msra.mxu0 0.0
    %3768 = vmatprep.subr.mxu0 0.0
    %3769 = vmatpush2.msra.mxu0 0.0
    %3770 = vmatprep.subr.mxu0 0.0
    %3771 = vmatpush2.msra.mxu0 0.0
    %3772 = vmatprep.subr.mxu0 0.0
    %3773 = vmatpush2.msra.mxu0 0.0
    %3774 = vmatprep.subr.mxu0 0.0
    %3775 = vmatpush2.msra.mxu0 0.0
    %3776 = vmatprep.subr.mxu0 0.0
    %3777 = vmatpush2.msra.mxu0 0.0
    %3778 = vmatprep.subr.mxu0 0.0
    %3779 = vmatpush2.msra.mxu0 0.0
    %3780 = vmatprep.mubr.f32.mxu0 0.0
    %3781 = vmatmul.mubr.f32.gmra.mxu0 %v3574
    %v3782 = vpop.f32.mrf.mxu0
    %v3783 = vadd.f32 %v2763, %v3782
    %v3784 = vpop.f32.mrf.mxu0
    %3785 = vdwg.mxu0
    %v3786 = vld [vmem:[%s1584] sm:$0x3]
    %v3787 = vadd.f32 %v3786, %v3643
    %v3788 = vxor.u32 %v3787, 2147483648
    %v3789 = vmul.f32 %v3788, 1.442695
    %v3790 = vpow.pop %v3789
    %v3791 = vadd.f32 %v3790, 1.0
    %v3792 = vrcp.pop %v3791
    %v3793 = vmul.f32 1.0, %v3792
    %v3794 = vld [vmem:[%s1593] sm:$0x3]
    %v3795 = vadd.f32 %v3794, %v3713
    %v3796 = vxor.u32 %v3795, 2147483648
    %v3797 = vmul.f32 %v3796, 1.442695
    %v3798 = vpow.pop %v3797
    %v3799 = vadd.f32 %v3798, 1.0
    %v3800 = vrcp.pop %v3799
    %v3801 = vmul.f32 1.0, %v3800
    %v3802 = vld [vmem:[%s1602] sm:$0x3]
    %v3803 = vmul.f32 %v3793, %v3783
    %v3804 = vadd.f32 %v3802, %v3803
    %v3805 = vtanh.pop %v3804
    %v3806 = vsub.f32 1.0, %v3801
    %v3807 = vmul.f32 %v3806, %v3805
    %v3808 = vmul.f32 %v3801, %v3571
    %v3809 = vadd.f32 %v3807, %v3808
    %3810 = vst.msk [vmem:[%s1611] sm:$0x3] %vm643, %v3809
    %v3812 = vsel %vm210, %v3809, 0
    %3814 = vmatprep.subr.mxu0 0.0
    %3815 = vmatpush1.msra.mxu0 0.0
    %3816 = vmatprep.subr.mxu0 0.0
    %3817 = vmatpush1.msra.mxu0 0.0
    %3818 = vmatprep.subr.mxu0 0.0
    %3819 = vmatpush1.msra.mxu0 0.0
    %3820 = vmatprep.subr.mxu0 0.0
    %3821 = vmatpush1.msra.mxu0 0.0
    %3822 = vmatprep.subr.mxu0 0.0
    %3823 = vmatpush1.msra.mxu0 0.0
    %3824 = vmatprep.subr.mxu0 0.0
    %3825 = vmatpush1.msra.mxu0 0.0
    %3826 = vmatprep.subr.mxu0 0.0
    %3827 = vmatpush1.msra.mxu0 0.0
    %3828 = vmatprep.subr.mxu0 0.0
    %3829 = vmatpush1.msra.mxu0 0.0
    %3830 = vmatprep.subr.mxu0 0.0
    %3831 = vmatpush1.msra.mxu0 0.0
    %3832 = vmatprep.subr.mxu0 0.0
    %3833 = vmatpush1.msra.mxu0 0.0
    %3834 = vmatprep.subr.mxu0 0.0
    %3835 = vmatpush1.msra.mxu0 0.0
    %3836 = vmatprep.subr.mxu0 0.0
    %3837 = vmatpush1.msra.mxu0 0.0
    %3838 = vmatprep.subr.mxu0 0.0
    %3839 = vmatpush1.msra.mxu0 %v2608
    %3840 = vmatprep.subr.mxu0 0.0
    %3841 = vmatpush1.msra.mxu0 %v2607
    %3842 = vmatprep.subr.mxu0 0.0
    %3843 = vmatpush1.msra.mxu0 %v2606
    %3844 = vmatprep.subr.mxu0 0.0
    %3845 = vmatpush1.msra.mxu0 %v2605
    %3846 = vmatprep.subr.mxu0 0.0
    %3847 = vmatpush2.msra.mxu0 0.0
    %3848 = vmatprep.subr.mxu0 0.0
    %3849 = vmatpush2.msra.mxu0 0.0
    %3850 = vmatprep.subr.mxu0 0.0
    %3851 = vmatpush2.msra.mxu0 0.0
    %3852 = vmatprep.subr.mxu0 0.0
    %3853 = vmatpush2.msra.mxu0 0.0
    %3854 = vmatprep.subr.mxu0 0.0
    %3855 = vmatpush2.msra.mxu0 0.0
    %3856 = vmatprep.subr.mxu0 0.0
    %3857 = vmatpush2.msra.mxu0 0.0
    %3858 = vmatprep.subr.mxu0 0.0
    %3859 = vmatpush2.msra.mxu0 0.0
    %3860 = vmatprep.subr.mxu0 0.0
    %3861 = vmatpush2.msra.mxu0 0.0
    %3862 = vmatprep.subr.mxu0 0.0
    %3863 = vmatpush2.msra.mxu0 0.0
    %3864 = vmatprep.subr.mxu0 0.0
    %3865 = vmatpush2.msra.mxu0 0.0
    %3866 = vmatprep.subr.mxu0 0.0
    %3867 = vmatpush2.msra.mxu0 0.0
    %3868 = vmatprep.subr.mxu0 0.0
    %3869 = vmatpush2.msra.mxu0 0.0
    %3870 = vmatprep.subr.mxu0 0.0
    %3871 = vmatpush2.msra.mxu0 0.0
    %3872 = vmatprep.subr.mxu0 0.0
    %3873 = vmatpush2.msra.mxu0 0.0
    %3874 = vmatprep.subr.mxu0 0.0
    %3875 = vmatpush2.msra.mxu0 0.0
    %3876 = vmatprep.subr.mxu0 0.0
    %3877 = vmatpush2.msra.mxu0 0.0
    %3878 = vmatprep.mubr.f32.mxu0 0.0
    %3879 = vmatmul.mubr.f32.gmra.mxu0 %v3812
    %v3880 = vpop.f32.mrf.mxu0
    %v3881 = vadd.f32 0.0, %v3880
    %v3882 = vpop.f32.mrf.mxu0
    %3883 = vdwg.mxu0
    %3884 = vmatprep.subr.mxu0 0.0
    %3885 = vmatpush1.msra.mxu0 0.0
    %3886 = vmatprep.subr.mxu0 0.0
    %3887 = vmatpush1.msra.mxu0 0.0
    %3888 = vmatprep.subr.mxu0 0.0
    %3889 = vmatpush1.msra.mxu0 0.0
    %3890 = vmatprep.subr.mxu0 0.0
    %3891 = vmatpush1.msra.mxu0 0.0
    %3892 = vmatprep.subr.mxu0 0.0
    %3893 = vmatpush1.msra.mxu0 0.0
    %3894 = vmatprep.subr.mxu0 0.0
    %3895 = vmatpush1.msra.mxu0 0.0
    %3896 = vmatprep.subr.mxu0 0.0
    %3897 = vmatpush1.msra.mxu0 0.0
    %3898 = vmatprep.subr.mxu0 0.0
    %3899 = vmatpush1.msra.mxu0 0.0
    %3900 = vmatprep.subr.mxu0 0.0
    %3901 = vmatpush1.msra.mxu0 0.0
    %3902 = vmatprep.subr.mxu0 0.0
    %3903 = vmatpush1.msra.mxu0 0.0
    %3904 = vmatprep.subr.mxu0 0.0
    %3905 = vmatpush1.msra.mxu0 0.0
    %3906 = vmatprep.subr.mxu0 0.0
    %3907 = vmatpush1.msra.mxu0 0.0
    %3908 = vmatprep.subr.mxu0 0.0
    %3909 = vmatpush1.msra.mxu0 %v2613
    %3910 = vmatprep.subr.mxu0 0.0
    %3911 = vmatpush1.msra.mxu0 %v2612
    %3912 = vmatprep.subr.mxu0 0.0
    %3913 = vmatpush1.msra.mxu0 %v2611
    %3914 = vmatprep.subr.mxu0 0.0
    %3915 = vmatpush1.msra.mxu0 %v2610
    %3916 = vmatprep.subr.mxu0 0.0
    %3917 = vmatpush2.msra.mxu0 0.0
    %3918 = vmatprep.subr.mxu0 0.0
    %3919 = vmatpush2.msra.mxu0 0.0
    %3920 = vmatprep.subr.mxu0 0.0
    %3921 = vmatpush2.msra.mxu0 0.0
    %3922 = vmatprep.subr.mxu0 0.0
    %3923 = vmatpush2.msra.mxu0 0.0
    %3924 = vmatprep.subr.mxu0 0.0
    %3925 = vmatpush2.msra.mxu0 0.0
    %3926 = vmatprep.subr.mxu0 0.0
    %3927 = vmatpush2.msra.mxu0 0.0
    %3928 = vmatprep.subr.mxu0 0.0
    %3929 = vmatpush2.msra.mxu0 0.0
    %3930 = vmatprep.subr.mxu0 0.0
    %3931 = vmatpush2.msra.mxu0 0.0
    %3932 = vmatprep.subr.mxu0 0.0
    %3933 = vmatpush2.msra.mxu0 0.0
    %3934 = vmatprep.subr.mxu0 0.0
    %3935 = vmatpush2.msra.mxu0 0.0
    %3936 = vmatprep.subr.mxu0 0.0
    %3937 = vmatpush2.msra.mxu0 0.0
    %3938 = vmatprep.subr.mxu0 0.0
    %3939 = vmatpush2.msra.mxu0 0.0
    %3940 = vmatprep.subr.mxu0 0.0
    %3941 = vmatpush2.msra.mxu0 0.0
    %3942 = vmatprep.subr.mxu0 0.0
    %3943 = vmatpush2.msra.mxu0 0.0
    %3944 = vmatprep.subr.mxu0 0.0
    %3945 = vmatpush2.msra.mxu0 0.0
    %3946 = vmatprep.subr.mxu0 0.0
    %3947 = vmatpush2.msra.mxu0 0.0
    %3948 = vmatprep.mubr.f32.mxu0 0.0
    %3949 = vmatmul.mubr.f32.gmra.mxu0 %v3812
    %v3950 = vpop.f32.mrf.mxu0
    %v3951 = vadd.f32 0.0, %v3950
    %v3952 = vpop.f32.mrf.mxu0
    %3953 = vdwg.mxu0
    %3954 = vmatprep.subr.mxu0 0.0
    %3955 = vmatpush1.msra.mxu0 0.0
    %3956 = vmatprep.subr.mxu0 0.0
    %3957 = vmatpush1.msra.mxu0 0.0
    %3958 = vmatprep.subr.mxu0 0.0
    %3959 = vmatpush1.msra.mxu0 0.0
    %3960 = vmatprep.subr.mxu0 0.0
    %3961 = vmatpush1.msra.mxu0 0.0
    %3962 = vmatprep.subr.mxu0 0.0
    %3963 = vmatpush1.msra.mxu0 0.0
    %3964 = vmatprep.subr.mxu0 0.0
    %3965 = vmatpush1.msra.mxu0 0.0
    %3966 = vmatprep.subr.mxu0 0.0
    %3967 = vmatpush1.msra.mxu0 0.0
    %3968 = vmatprep.subr.mxu0 0.0
    %3969 = vmatpush1.msra.mxu0 0.0
    %3970 = vmatprep.subr.mxu0 0.0
    %3971 = vmatpush1.msra.mxu0 0.0
    %3972 = vmatprep.subr.mxu0 0.0
    %3973 = vmatpush1.msra.mxu0 0.0
    %3974 = vmatprep.subr.mxu0 0.0
    %3975 = vmatpush1.msra.mxu0 0.0
    %3976 = vmatprep.subr.mxu0 0.0
    %3977 = vmatpush1.msra.mxu0 0.0
    %3978 = vmatprep.subr.mxu0 0.0
    %3979 = vmatpush1.msra.mxu0 %v2618
    %3980 = vmatprep.subr.mxu0 0.0
    %3981 = vmatpush1.msra.mxu0 %v2617
    %3982 = vmatprep.subr.mxu0 0.0
    %3983 = vmatpush1.msra.mxu0 %v2616
    %3984 = vmatprep.subr.mxu0 0.0
    %3985 = vmatpush1.msra.mxu0 %v2615
    %3986 = vmatprep.subr.mxu0 0.0
    %3987 = vmatpush2.msra.mxu0 0.0
    %3988 = vmatprep.subr.mxu0 0.0
    %3989 = vmatpush2.msra.mxu0 0.0
    %3990 = vmatprep.subr.mxu0 0.0
    %3991 = vmatpush2.msra.mxu0 0.0
    %3992 = vmatprep.subr.mxu0 0.0
    %3993 = vmatpush2.msra.mxu0 0.0
    %3994 = vmatprep.subr.mxu0 0.0
    %3995 = vmatpush2.msra.mxu0 0.0
    %3996 = vmatprep.subr.mxu0 0.0
    %3997 = vmatpush2.msra.mxu0 0.0
    %3998 = vmatprep.subr.mxu0 0.0
    %3999 = vmatpush2.msra.mxu0 0.0
    %4000 = vmatprep.subr.mxu0 0.0
    %4001 = vmatpush2.msra.mxu0 0.0
    %4002 = vmatprep.subr.mxu0 0.0
    %4003 = vmatpush2.msra.mxu0 0.0
    %4004 = vmatprep.subr.mxu0 0.0
    %4005 = vmatpush2.msra.mxu0 0.0
    %4006 = vmatprep.subr.mxu0 0.0
    %4007 = vmatpush2.msra.mxu0 0.0
    %4008 = vmatprep.subr.mxu0 0.0
    %4009 = vmatpush2.msra.mxu0 0.0
    %4010 = vmatprep.subr.mxu0 0.0
    %4011 = vmatpush2.msra.mxu0 0.0
    %4012 = vmatprep.subr.mxu0 0.0
    %4013 = vmatpush2.msra.mxu0 0.0
    %4014 = vmatprep.subr.mxu0 0.0
    %4015 = vmatpush2.msra.mxu0 0.0
    %4016 = vmatprep.subr.mxu0 0.0
    %4017 = vmatpush2.msra.mxu0 0.0
    %4018 = vmatprep.mubr.f32.mxu0 0.0
    %4019 = vmatmul.mubr.f32.gmra.mxu0 %v3812
    %v4020 = vpop.f32.mrf.mxu0
    %v4021 = vadd.f32 %v2763, %v4020
    %v4022 = vpop.f32.mrf.mxu0
    %4023 = vdwg.mxu0
    %v4024 = vld [vmem:[%s1826] sm:$0x3]
    %v4025 = vadd.f32 %v4024, %v3881
    %v4026 = vxor.u32 %v4025, 2147483648
    %v4027 = vmul.f32 %v4026, 1.442695
    %v4028 = vpow.pop %v4027
    %v4029 = vadd.f32 %v4028, 1.0
    %v4030 = vrcp.pop %v4029
    %v4031 = vmul.f32 1.0, %v4030
    %v4032 = vld [vmem:[%s1835] sm:$0x3]
    %v4033 = vadd.f32 %v4032, %v3951
    %v4034 = vxor.u32 %v4033, 2147483648
    %v4035 = vmul.f32 %v4034, 1.442695
    %v4036 = vpow.pop %v4035
    %v4037 = vadd.f32 %v4036, 1.0
    %v4038 = vrcp.pop %v4037
    %v4039 = vmul.f32 1.0, %v4038
    %v4040 = vld [vmem:[%s1844] sm:$0x3]
    %v4041 = vmul.f32 %v4031, %v4021
    %v4042 = vadd.f32 %v4040, %v4041
    %v4043 = vtanh.pop %v4042
    %v4044 = vsub.f32 1.0, %v4039
    %v4045 = vmul.f32 %v4044, %v4043
    %v4046 = vmul.f32 %v4039, %v3809
    %v4047 = vadd.f32 %v4045, %v4046
    %4048 = vst.msk [vmem:[%s1853] sm:$0x3] %vm643, %v4047
    %v4050 = vsel %vm210, %v4047, 0
    %4052 = vmatprep.subr.mxu0 0.0
    %4053 = vmatpush1.msra.mxu0 0.0
    %4054 = vmatprep.subr.mxu0 0.0
    %4055 = vmatpush1.msra.mxu0 0.0
    %4056 = vmatprep.subr.mxu0 0.0
    %4057 = vmatpush1.msra.mxu0 0.0
    %4058 = vmatprep.subr.mxu0 0.0
    %4059 = vmatpush1.msra.mxu0 0.0
    %4060 = vmatprep.subr.mxu0 0.0
    %4061 = vmatpush1.msra.mxu0 0.0
    %4062 = vmatprep.subr.mxu0 0.0
    %4063 = vmatpush1.msra.mxu0 0.0
    %4064 = vmatprep.subr.mxu0 0.0
    %4065 = vmatpush1.msra.mxu0 0.0
    %4066 = vmatprep.subr.mxu0 0.0
    %4067 = vmatpush1.msra.mxu0 0.0
    %4068 = vmatprep.subr.mxu0 0.0
    %4069 = vmatpush1.msra.mxu0 0.0
    %4070 = vmatprep.subr.mxu0 0.0
    %4071 = vmatpush1.msra.mxu0 0.0
    %4072 = vmatprep.subr.mxu0 0.0
    %4073 = vmatpush1.msra.mxu0 0.0
    %4074 = vmatprep.subr.mxu0 0.0
    %4075 = vmatpush1.msra.mxu0 0.0
    %4076 = vmatprep.subr.mxu0 0.0
    %4077 = vmatpush1.msra.mxu0 %v2608
    %4078 = vmatprep.subr.mxu0 0.0
    %4079 = vmatpush1.msra.mxu0 %v2607
    %4080 = vmatprep.subr.mxu0 0.0
    %4081 = vmatpush1.msra.mxu0 %v2606
    %4082 = vmatprep.subr.mxu0 0.0
    %4083 = vmatpush1.msra.mxu0 %v2605
    %4084 = vmatprep.subr.mxu0 0.0
    %4085 = vmatpush2.msra.mxu0 0.0
    %4086 = vmatprep.subr.mxu0 0.0
    %4087 = vmatpush2.msra.mxu0 0.0
    %4088 = vmatprep.subr.mxu0 0.0
    %4089 = vmatpush2.msra.mxu0 0.0
    %4090 = vmatprep.subr.mxu0 0.0
    %4091 = vmatpush2.msra.mxu0 0.0
    %4092 = vmatprep.subr.mxu0 0.0
    %4093 = vmatpush2.msra.mxu0 0.0
    %4094 = vmatprep.subr.mxu0 0.0
    %4095 = vmatpush2.msra.mxu0 0.0
    %4096 = vmatprep.subr.mxu0 0.0
    %4097 = vmatpush2.msra.mxu0 0.0
    %4098 = vmatprep.subr.mxu0 0.0
    %4099 = vmatpush2.msra.mxu0 0.0
    %4100 = vmatprep.subr.mxu0 0.0
    %4101 = vmatpush2.msra.mxu0 0.0
    %4102 = vmatprep.subr.mxu0 0.0
    %4103 = vmatpush2.msra.mxu0 0.0
    %4104 = vmatprep.subr.mxu0 0.0
    %4105 = vmatpush2.msra.mxu0 0.0
    %4106 = vmatprep.subr.mxu0 0.0
    %4107 = vmatpush2.msra.mxu0 0.0
    %4108 = vmatprep.subr.mxu0 0.0
    %4109 = vmatpush2.msra.mxu0 0.0
    %4110 = vmatprep.subr.mxu0 0.0
    %4111 = vmatpush2.msra.mxu0 0.0
    %4112 = vmatprep.subr.mxu0 0.0
    %4113 = vmatpush2.msra.mxu0 0.0
    %4114 = vmatprep.subr.mxu0 0.0
    %4115 = vmatpush2.msra.mxu0 0.0
    %4116 = vmatprep.mubr.f32.mxu0 0.0
    %4117 = vmatmul.mubr.f32.gmra.mxu0 %v4050
    %v4118 = vpop.f32.mrf.mxu0
    %v4119 = vadd.f32 0.0, %v4118
    %v4120 = vpop.f32.mrf.mxu0
    %4121 = vdwg.mxu0
    %4122 = vmatprep.subr.mxu0 0.0
    %4123 = vmatpush1.msra.mxu0 0.0
    %4124 = vmatprep.subr.mxu0 0.0
    %4125 = vmatpush1.msra.mxu0 0.0
    %4126 = vmatprep.subr.mxu0 0.0
    %4127 = vmatpush1.msra.mxu0 0.0
    %4128 = vmatprep.subr.mxu0 0.0
    %4129 = vmatpush1.msra.mxu0 0.0
    %4130 = vmatprep.subr.mxu0 0.0
    %4131 = vmatpush1.msra.mxu0 0.0
    %4132 = vmatprep.subr.mxu0 0.0
    %4133 = vmatpush1.msra.mxu0 0.0
    %4134 = vmatprep.subr.mxu0 0.0
    %4135 = vmatpush1.msra.mxu0 0.0
    %4136 = vmatprep.subr.mxu0 0.0
    %4137 = vmatpush1.msra.mxu0 0.0
    %4138 = vmatprep.subr.mxu0 0.0
    %4139 = vmatpush1.msra.mxu0 0.0
    %4140 = vmatprep.subr.mxu0 0.0
    %4141 = vmatpush1.msra.mxu0 0.0
    %4142 = vmatprep.subr.mxu0 0.0
    %4143 = vmatpush1.msra.mxu0 0.0
    %4144 = vmatprep.subr.mxu0 0.0
    %4145 = vmatpush1.msra.mxu0 0.0
    %4146 = vmatprep.subr.mxu0 0.0
    %4147 = vmatpush1.msra.mxu0 %v2613
    %4148 = vmatprep.subr.mxu0 0.0
    %4149 = vmatpush1.msra.mxu0 %v2612
    %4150 = vmatprep.subr.mxu0 0.0
    %4151 = vmatpush1.msra.mxu0 %v2611
    %4152 = vmatprep.subr.mxu0 0.0
    %4153 = vmatpush1.msra.mxu0 %v2610
    %4154 = vmatprep.subr.mxu0 0.0
    %4155 = vmatpush2.msra.mxu0 0.0
    %4156 = vmatprep.subr.mxu0 0.0
    %4157 = vmatpush2.msra.mxu0 0.0
    %4158 = vmatprep.subr.mxu0 0.0
    %4159 = vmatpush2.msra.mxu0 0.0
    %4160 = vmatprep.subr.mxu0 0.0
    %4161 = vmatpush2.msra.mxu0 0.0
    %4162 = vmatprep.subr.mxu0 0.0
    %4163 = vmatpush2.msra.mxu0 0.0
    %4164 = vmatprep.subr.mxu0 0.0
    %4165 = vmatpush2.msra.mxu0 0.0
    %4166 = vmatprep.subr.mxu0 0.0
    %4167 = vmatpush2.msra.mxu0 0.0
    %4168 = vmatprep.subr.mxu0 0.0
    %4169 = vmatpush2.msra.mxu0 0.0
    %4170 = vmatprep.subr.mxu0 0.0
    %4171 = vmatpush2.msra.mxu0 0.0
    %4172 = vmatprep.subr.mxu0 0.0
    %4173 = vmatpush2.msra.mxu0 0.0
    %4174 = vmatprep.subr.mxu0 0.0
    %4175 = vmatpush2.msra.mxu0 0.0
    %4176 = vmatprep.subr.mxu0 0.0
    %4177 = vmatpush2.msra.mxu0 0.0
    %4178 = vmatprep.subr.mxu0 0.0
    %4179 = vmatpush2.msra.mxu0 0.0
    %4180 = vmatprep.subr.mxu0 0.0
    %4181 = vmatpush2.msra.mxu0 0.0
    %4182 = vmatprep.subr.mxu0 0.0
    %4183 = vmatpush2.msra.mxu0 0.0
    %4184 = vmatprep.subr.mxu0 0.0
    %4185 = vmatpush2.msra.mxu0 0.0
    %4186 = vmatprep.mubr.f32.mxu0 0.0
    %4187 = vmatmul.mubr.f32.gmra.mxu0 %v4050
    %v4188 = vpop.f32.mrf.mxu0
    %v4189 = vadd.f32 0.0, %v4188
    %v4190 = vpop.f32.mrf.mxu0
    %4191 = vdwg.mxu0
    %4192 = vmatprep.subr.mxu0 0.0
    %4193 = vmatpush1.msra.mxu0 0.0
    %4194 = vmatprep.subr.mxu0 0.0
    %4195 = vmatpush1.msra.mxu0 0.0
    %4196 = vmatprep.subr.mxu0 0.0
    %4197 = vmatpush1.msra.mxu0 0.0
    %4198 = vmatprep.subr.mxu0 0.0
    %4199 = vmatpush1.msra.mxu0 0.0
    %4200 = vmatprep.subr.mxu0 0.0
    %4201 = vmatpush1.msra.mxu0 0.0
    %4202 = vmatprep.subr.mxu0 0.0
    %4203 = vmatpush1.msra.mxu0 0.0
    %4204 = vmatprep.subr.mxu0 0.0
    %4205 = vmatpush1.msra.mxu0 0.0
    %4206 = vmatprep.subr.mxu0 0.0
    %4207 = vmatpush1.msra.mxu0 0.0
    %4208 = vmatprep.subr.mxu0 0.0
    %4209 = vmatpush1.msra.mxu0 0.0
    %4210 = vmatprep.subr.mxu0 0.0
    %4211 = vmatpush1.msra.mxu0 0.0
    %4212 = vmatprep.subr.mxu0 0.0
    %4213 = vmatpush1.msra.mxu0 0.0
    %4214 = vmatprep.subr.mxu0 0.0
    %4215 = vmatpush1.msra.mxu0 0.0
    %4216 = vmatprep.subr.mxu0 0.0
    %4217 = vmatpush1.msra.mxu0 %v2618
    %4218 = vmatprep.subr.mxu0 0.0
    %4219 = vmatpush1.msra.mxu0 %v2617
    %4220 = vmatprep.subr.mxu0 0.0
    %4221 = vmatpush1.msra.mxu0 %v2616
    %4222 = vmatprep.subr.mxu0 0.0
    %4223 = vmatpush1.msra.mxu0 %v2615
    %4224 = vmatprep.subr.mxu0 0.0
    %4225 = vmatpush2.msra.mxu0 0.0
    %4226 = vmatprep.subr.mxu0 0.0
    %4227 = vmatpush2.msra.mxu0 0.0
    %4228 = vmatprep.subr.mxu0 0.0
    %4229 = vmatpush2.msra.mxu0 0.0
    %4230 = vmatprep.subr.mxu0 0.0
    %4231 = vmatpush2.msra.mxu0 0.0
    %4232 = vmatprep.subr.mxu0 0.0
    %4233 = vmatpush2.msra.mxu0 0.0
    %4234 = vmatprep.subr.mxu0 0.0
    %4235 = vmatpush2.msra.mxu0 0.0
    %4236 = vmatprep.subr.mxu0 0.0
    %4237 = vmatpush2.msra.mxu0 0.0
    %4238 = vmatprep.subr.mxu0 0.0
    %4239 = vmatpush2.msra.mxu0 0.0
    %4240 = vmatprep.subr.mxu0 0.0
    %4241 = vmatpush2.msra.mxu0 0.0
    %4242 = vmatprep.subr.mxu0 0.0
    %4243 = vmatpush2.msra.mxu0 0.0
    %4244 = vmatprep.subr.mxu0 0.0
    %4245 = vmatpush2.msra.mxu0 0.0
    %4246 = vmatprep.subr.mxu0 0.0
    %4247 = vmatpush2.msra.mxu0 0.0
    %4248 = vmatprep.subr.mxu0 0.0
    %4249 = vmatpush2.msra.mxu0 0.0
    %4250 = vmatprep.subr.mxu0 0.0
    %4251 = vmatpush2.msra.mxu0 0.0
    %4252 = vmatprep.subr.mxu0 0.0
    %4253 = vmatpush2.msra.mxu0 0.0
    %4254 = vmatprep.subr.mxu0 0.0
    %4255 = vmatpush2.msra.mxu0 0.0
    %4256 = vmatprep.mubr.f32.mxu0 0.0
    %4257 = vmatmul.mubr.f32.gmra.mxu0 %v4050
    %v4258 = vpop.f32.mrf.mxu0
    %v4259 = vadd.f32 %v2763, %v4258
    %v4260 = vpop.f32.mrf.mxu0
    %4261 = vdwg.mxu0
    %v4262 = vld [vmem:[%s2068] sm:$0x3]
    %v4263 = vadd.f32 %v4262, %v4119
    %v4264 = vxor.u32 %v4263, 2147483648
    %v4265 = vmul.f32 %v4264, 1.442695
    %v4266 = vpow.pop %v4265
    %v4267 = vadd.f32 %v4266, 1.0
    %v4268 = vrcp.pop %v4267
    %v4269 = vmul.f32 1.0, %v4268
    %v4270 = vld [vmem:[%s2077] sm:$0x3]
    %v4271 = vadd.f32 %v4270, %v4189
    %v4272 = vxor.u32 %v4271, 2147483648
    %v4273 = vmul.f32 %v4272, 1.442695
    %v4274 = vpow.pop %v4273
    %v4275 = vadd.f32 %v4274, 1.0
    %v4276 = vrcp.pop %v4275
    %v4277 = vmul.f32 1.0, %v4276
    %v4278 = vld [vmem:[%s2086] sm:$0x3]
    %v4279 = vmul.f32 %v4269, %v4259
    %v4280 = vadd.f32 %v4278, %v4279
    %v4281 = vtanh.pop %v4280
    %v4282 = vsub.f32 1.0, %v4277
    %v4283 = vmul.f32 %v4282, %v4281
    %v4284 = vmul.f32 %v4277, %v4047
    %v4285 = vadd.f32 %v4283, %v4284
    %4286 = vst.msk [vmem:[%s2095] sm:$0x3] %vm643, %v4285
    %v4288 = vsel %vm210, %v4285, 0
    %4290 = vmatprep.subr.mxu0 0.0
    %4291 = vmatpush1.msra.mxu0 0.0
    %4292 = vmatprep.subr.mxu0 0.0
    %4293 = vmatpush1.msra.mxu0 0.0
    %4294 = vmatprep.subr.mxu0 0.0
    %4295 = vmatpush1.msra.mxu0 0.0
    %4296 = vmatprep.subr.mxu0 0.0
    %4297 = vmatpush1.msra.mxu0 0.0
    %4298 = vmatprep.subr.mxu0 0.0
    %4299 = vmatpush1.msra.mxu0 0.0
    %4300 = vmatprep.subr.mxu0 0.0
    %4301 = vmatpush1.msra.mxu0 0.0
    %4302 = vmatprep.subr.mxu0 0.0
    %4303 = vmatpush1.msra.mxu0 0.0
    %4304 = vmatprep.subr.mxu0 0.0
    %4305 = vmatpush1.msra.mxu0 0.0
    %4306 = vmatprep.subr.mxu0 0.0
    %4307 = vmatpush1.msra.mxu0 0.0
    %4308 = vmatprep.subr.mxu0 0.0
    %4309 = vmatpush1.msra.mxu0 0.0
    %4310 = vmatprep.subr.mxu0 0.0
    %4311 = vmatpush1.msra.mxu0 0.0
    %4312 = vmatprep.subr.mxu0 0.0
    %4313 = vmatpush1.msra.mxu0 0.0
    %4314 = vmatprep.subr.mxu0 0.0
    %4315 = vmatpush1.msra.mxu0 %v2608
    %4316 = vmatprep.subr.mxu0 0.0
    %4317 = vmatpush1.msra.mxu0 %v2607
    %4318 = vmatprep.subr.mxu0 0.0
    %4319 = vmatpush1.msra.mxu0 %v2606
    %4320 = vmatprep.subr.mxu0 0.0
    %4321 = vmatpush1.msra.mxu0 %v2605
    %4322 = vmatprep.subr.mxu0 0.0
    %4323 = vmatpush2.msra.mxu0 0.0
    %4324 = vmatprep.subr.mxu0 0.0
    %4325 = vmatpush2.msra.mxu0 0.0
    %4326 = vmatprep.subr.mxu0 0.0
    %4327 = vmatpush2.msra.mxu0 0.0
    %4328 = vmatprep.subr.mxu0 0.0
    %4329 = vmatpush2.msra.mxu0 0.0
    %4330 = vmatprep.subr.mxu0 0.0
    %4331 = vmatpush2.msra.mxu0 0.0
    %4332 = vmatprep.subr.mxu0 0.0
    %4333 = vmatpush2.msra.mxu0 0.0
    %4334 = vmatprep.subr.mxu0 0.0
    %4335 = vmatpush2.msra.mxu0 0.0
    %4336 = vmatprep.subr.mxu0 0.0
    %4337 = vmatpush2.msra.mxu0 0.0
    %4338 = vmatprep.subr.mxu0 0.0
    %4339 = vmatpush2.msra.mxu0 0.0
    %4340 = vmatprep.subr.mxu0 0.0
    %4341 = vmatpush2.msra.mxu0 0.0
    %4342 = vmatprep.subr.mxu0 0.0
    %4343 = vmatpush2.msra.mxu0 0.0
    %4344 = vmatprep.subr.mxu0 0.0
    %4345 = vmatpush2.msra.mxu0 0.0
    %4346 = vmatprep.subr.mxu0 0.0
    %4347 = vmatpush2.msra.mxu0 0.0
    %4348 = vmatprep.subr.mxu0 0.0
    %4349 = vmatpush2.msra.mxu0 0.0
    %4350 = vmatprep.subr.mxu0 0.0
    %4351 = vmatpush2.msra.mxu0 0.0
    %4352 = vmatprep.subr.mxu0 0.0
    %4353 = vmatpush2.msra.mxu0 0.0
    %4354 = vmatprep.mubr.f32.mxu0 0.0
    %4355 = vmatmul.mubr.f32.gmra.mxu0 %v4288
    %v4356 = vpop.f32.mrf.mxu0
    %v4357 = vadd.f32 0.0, %v4356
    %v4358 = vpop.f32.mrf.mxu0
    %4359 = vdwg.mxu0
    %4360 = vmatprep.subr.mxu0 0.0
    %4361 = vmatpush1.msra.mxu0 0.0
    %4362 = vmatprep.subr.mxu0 0.0
    %4363 = vmatpush1.msra.mxu0 0.0
    %4364 = vmatprep.subr.mxu0 0.0
    %4365 = vmatpush1.msra.mxu0 0.0
    %4366 = vmatprep.subr.mxu0 0.0
    %4367 = vmatpush1.msra.mxu0 0.0
    %4368 = vmatprep.subr.mxu0 0.0
    %4369 = vmatpush1.msra.mxu0 0.0
    %4370 = vmatprep.subr.mxu0 0.0
    %4371 = vmatpush1.msra.mxu0 0.0
    %4372 = vmatprep.subr.mxu0 0.0
    %4373 = vmatpush1.msra.mxu0 0.0
    %4374 = vmatprep.subr.mxu0 0.0
    %4375 = vmatpush1.msra.mxu0 0.0
    %4376 = vmatprep.subr.mxu0 0.0
    %4377 = vmatpush1.msra.mxu0 0.0
    %4378 = vmatprep.subr.mxu0 0.0
    %4379 = vmatpush1.msra.mxu0 0.0
    %4380 = vmatprep.subr.mxu0 0.0
    %4381 = vmatpush1.msra.mxu0 0.0
    %4382 = vmatprep.subr.mxu0 0.0
    %4383 = vmatpush1.msra.mxu0 0.0
    %4384 = vmatprep.subr.mxu0 0.0
    %4385 = vmatpush1.msra.mxu0 %v2613
    %4386 = vmatprep.subr.mxu0 0.0
    %4387 = vmatpush1.msra.mxu0 %v2612
    %4388 = vmatprep.subr.mxu0 0.0
    %4389 = vmatpush1.msra.mxu0 %v2611
    %4390 = vmatprep.subr.mxu0 0.0
    %4391 = vmatpush1.msra.mxu0 %v2610
    %4392 = vmatprep.subr.mxu0 0.0
    %4393 = vmatpush2.msra.mxu0 0.0
    %4394 = vmatprep.subr.mxu0 0.0
    %4395 = vmatpush2.msra.mxu0 0.0
    %4396 = vmatprep.subr.mxu0 0.0
    %4397 = vmatpush2.msra.mxu0 0.0
    %4398 = vmatprep.subr.mxu0 0.0
    %4399 = vmatpush2.msra.mxu0 0.0
    %4400 = vmatprep.subr.mxu0 0.0
    %4401 = vmatpush2.msra.mxu0 0.0
    %4402 = vmatprep.subr.mxu0 0.0
    %4403 = vmatpush2.msra.mxu0 0.0
    %4404 = vmatprep.subr.mxu0 0.0
    %4405 = vmatpush2.msra.mxu0 0.0
    %4406 = vmatprep.subr.mxu0 0.0
    %4407 = vmatpush2.msra.mxu0 0.0
    %4408 = vmatprep.subr.mxu0 0.0
    %4409 = vmatpush2.msra.mxu0 0.0
    %4410 = vmatprep.subr.mxu0 0.0
    %4411 = vmatpush2.msra.mxu0 0.0
    %4412 = vmatprep.subr.mxu0 0.0
    %4413 = vmatpush2.msra.mxu0 0.0
    %4414 = vmatprep.subr.mxu0 0.0
    %4415 = vmatpush2.msra.mxu0 0.0
    %4416 = vmatprep.subr.mxu0 0.0
    %4417 = vmatpush2.msra.mxu0 0.0
    %4418 = vmatprep.subr.mxu0 0.0
    %4419 = vmatpush2.msra.mxu0 0.0
    %4420 = vmatprep.subr.mxu0 0.0
    %4421 = vmatpush2.msra.mxu0 0.0
    %4422 = vmatprep.subr.mxu0 0.0
    %4423 = vmatpush2.msra.mxu0 0.0
    %4424 = vmatprep.mubr.f32.mxu0 0.0
    %4425 = vmatmul.mubr.f32.gmra.mxu0 %v4288
    %v4426 = vpop.f32.mrf.mxu0
    %v4427 = vadd.f32 0.0, %v4426
    %v4428 = vpop.f32.mrf.mxu0
    %4429 = vdwg.mxu0
    %4430 = vmatprep.subr.mxu0 0.0
    %4431 = vmatpush1.msra.mxu0 0.0
    %4432 = vmatprep.subr.mxu0 0.0
    %4433 = vmatpush1.msra.mxu0 0.0
    %4434 = vmatprep.subr.mxu0 0.0
    %4435 = vmatpush1.msra.mxu0 0.0
    %4436 = vmatprep.subr.mxu0 0.0
    %4437 = vmatpush1.msra.mxu0 0.0
    %4438 = vmatprep.subr.mxu0 0.0
    %4439 = vmatpush1.msra.mxu0 0.0
    %4440 = vmatprep.subr.mxu0 0.0
    %4441 = vmatpush1.msra.mxu0 0.0
    %4442 = vmatprep.subr.mxu0 0.0
    %4443 = vmatpush1.msra.mxu0 0.0
    %4444 = vmatprep.subr.mxu0 0.0
    %4445 = vmatpush1.msra.mxu0 0.0
    %4446 = vmatprep.subr.mxu0 0.0
    %4447 = vmatpush1.msra.mxu0 0.0
    %4448 = vmatprep.subr.mxu0 0.0
    %4449 = vmatpush1.msra.mxu0 0.0
    %4450 = vmatprep.subr.mxu0 0.0
    %4451 = vmatpush1.msra.mxu0 0.0
    %4452 = vmatprep.subr.mxu0 0.0
    %4453 = vmatpush1.msra.mxu0 0.0
    %4454 = vmatprep.subr.mxu0 0.0
    %4455 = vmatpush1.msra.mxu0 %v2618
    %4456 = vmatprep.subr.mxu0 0.0
    %4457 = vmatpush1.msra.mxu0 %v2617
    %4458 = vmatprep.subr.mxu0 0.0
    %4459 = vmatpush1.msra.mxu0 %v2616
    %4460 = vmatprep.subr.mxu0 0.0
    %4461 = vmatpush1.msra.mxu0 %v2615
    %4462 = vmatprep.subr.mxu0 0.0
    %4463 = vmatpush2.msra.mxu0 0.0
    %4464 = vmatprep.subr.mxu0 0.0
    %4465 = vmatpush2.msra.mxu0 0.0
    %4466 = vmatprep.subr.mxu0 0.0
    %4467 = vmatpush2.msra.mxu0 0.0
    %4468 = vmatprep.subr.mxu0 0.0
    %4469 = vmatpush2.msra.mxu0 0.0
    %4470 = vmatprep.subr.mxu0 0.0
    %4471 = vmatpush2.msra.mxu0 0.0
    %4472 = vmatprep.subr.mxu0 0.0
    %4473 = vmatpush2.msra.mxu0 0.0
    %4474 = vmatprep.subr.mxu0 0.0
    %4475 = vmatpush2.msra.mxu0 0.0
    %4476 = vmatprep.subr.mxu0 0.0
    %4477 = vmatpush2.msra.mxu0 0.0
    %4478 = vmatprep.subr.mxu0 0.0
    %4479 = vmatpush2.msra.mxu0 0.0
    %4480 = vmatprep.subr.mxu0 0.0
    %4481 = vmatpush2.msra.mxu0 0.0
    %4482 = vmatprep.subr.mxu0 0.0
    %4483 = vmatpush2.msra.mxu0 0.0
    %4484 = vmatprep.subr.mxu0 0.0
    %4485 = vmatpush2.msra.mxu0 0.0
    %4486 = vmatprep.subr.mxu0 0.0
    %4487 = vmatpush2.msra.mxu0 0.0
    %4488 = vmatprep.subr.mxu0 0.0
    %4489 = vmatpush2.msra.mxu0 0.0
    %4490 = vmatprep.subr.mxu0 0.0
    %4491 = vmatpush2.msra.mxu0 0.0
    %4492 = vmatprep.subr.mxu0 0.0
    %4493 = vmatpush2.msra.mxu0 0.0
    %4494 = vmatprep.mubr.f32.mxu0 0.0
    %4495 = vmatmul.mubr.f32.gmra.mxu0 %v4288
    %v4496 = vpop.f32.mrf.mxu0
    %v4497 = vadd.f32 %v2763, %v4496
    %v4498 = vpop.f32.mrf.mxu0
    %4499 = vdwg.mxu0
    %v4500 = vld [vmem:[%s2310] sm:$0x3]
    %v4501 = vadd.f32 %v4500, %v4357
    %v4502 = vxor.u32 %v4501, 2147483648
    %v4503 = vmul.f32 %v4502, 1.442695
    %v4504 = vpow.pop %v4503
    %v4505 = vadd.f32 %v4504, 1.0
    %v4506 = vrcp.pop %v4505
    %v4507 = vmul.f32 1.0, %v4506
    %v4508 = vld [vmem:[%s2319] sm:$0x3]
    %v4509 = vadd.f32 %v4508, %v4427
    %v4510 = vxor.u32 %v4509, 2147483648
    %v4511 = vmul.f32 %v4510, 1.442695
    %v4512 = vpow.pop %v4511
    %v4513 = vadd.f32 %v4512, 1.0
    %v4514 = vrcp.pop %v4513
    %v4515 = vmul.f32 1.0, %v4514
    %v4516 = vld [vmem:[%s2328] sm:$0x3]
    %v4517 = vmul.f32 %v4507, %v4497
    %v4518 = vadd.f32 %v4516, %v4517
    %v4519 = vtanh.pop %v4518
    %v4520 = vsub.f32 1.0, %v4515
    %v4521 = vmul.f32 %v4520, %v4519
    %v4522 = vmul.f32 %v4515, %v4285
    %v4523 = vadd.f32 %v4521, %v4522
    %4524 = vst.msk [vmem:[%s2337] sm:$0x3] %vm643, %v4523
    %v4525 = vld [vmem:[#allocation2] sm:$0xff]
    %v4526 = vld [vmem:[#allocation2 + $0x8] sm:$0xff]
    %v4527 = vld [vmem:[#allocation15] sm:$0xff]
    %v4528 = vld [vmem:[#allocation15 + $0x8] sm:$0xff]
    %v4529 = vld [vmem:[#allocation15 + $0x10] sm:$0xff]
    %v4530 = vld [vmem:[#allocation15 + $0x18] sm:$0xff]
    %v4531 = vld [vmem:[%s8] sm:$0x1]
    %v4533 = vlaneseq
    %v4534 = vshrl.u32 %v4533, 7
    %v4535 = vsub.s32 0, %v4534
    %v4536 = vrot.slane %v4531, %v4535
    %v4539 = vsel %vm210, %v4525, 0
    %v4542 = vsel %vm210, %v4526, 0
    %4544 = vmatprep.subr.mxu0 0.0
    %4545 = vmatpush1.msra.mxu0 0.0
    %4546 = vmatprep.subr.mxu0 0.0
    %4547 = vmatpush1.msra.mxu0 0.0
    %4548 = vmatprep.subr.mxu0 0.0
    %4549 = vmatpush1.msra.mxu0 0.0
    %4550 = vmatprep.subr.mxu0 0.0
    %4551 = vmatpush1.msra.mxu0 0.0
    %4552 = vmatprep.subr.mxu0 0.0
    %4553 = vmatpush1.msra.mxu0 0.0
    %4554 = vmatprep.subr.mxu0 0.0
    %4555 = vmatpush1.msra.mxu0 0.0
    %4556 = vmatprep.subr.mxu0 0.0
    %4557 = vmatpush1.msra.mxu0 0.0
    %4558 = vmatprep.subr.mxu0 0.0
    %4559 = vmatpush1.msra.mxu0 0.0
    %4560 = vmatprep.subr.mxu0 0.0
    %4561 = vmatpush1.msra.mxu0 0.0
    %4562 = vmatprep.subr.mxu0 0.0
    %4563 = vmatpush1.msra.mxu0 0.0
    %4564 = vmatprep.subr.mxu0 0.0
    %4565 = vmatpush1.msra.mxu0 0.0
    %4566 = vmatprep.subr.mxu0 0.0
    %4567 = vmatpush1.msra.mxu0 0.0
    %4568 = vmatprep.subr.mxu0 0.0
    %4569 = vmatpush1.msra.mxu0 %v4530
    %4570 = vmatprep.subr.mxu0 0.0
    %4571 = vmatpush1.msra.mxu0 %v4529
    %4572 = vmatprep.subr.mxu0 0.0
    %4573 = vmatpush1.msra.mxu0 %v4528
    %4574 = vmatprep.subr.mxu0 0.0
    %4575 = vmatpush1.msra.mxu0 %v4527
    %4576 = vmatprep.subr.mxu0 0.0
    %4577 = vmatpush2.msra.mxu0 0.0
    %4578 = vmatprep.subr.mxu0 0.0
    %4579 = vmatpush2.msra.mxu0 0.0
    %4580 = vmatprep.subr.mxu0 0.0
    %4581 = vmatpush2.msra.mxu0 0.0
    %4582 = vmatprep.subr.mxu0 0.0
    %4583 = vmatpush2.msra.mxu0 0.0
    %4584 = vmatprep.subr.mxu0 0.0
    %4585 = vmatpush2.msra.mxu0 0.0
    %4586 = vmatprep.subr.mxu0 0.0
    %4587 = vmatpush2.msra.mxu0 0.0
    %4588 = vmatprep.subr.mxu0 0.0
    %4589 = vmatpush2.msra.mxu0 0.0
    %4590 = vmatprep.subr.mxu0 0.0
    %4591 = vmatpush2.msra.mxu0 0.0
    %4592 = vmatprep.subr.mxu0 0.0
    %4593 = vmatpush2.msra.mxu0 0.0
    %4594 = vmatprep.subr.mxu0 0.0
    %4595 = vmatpush2.msra.mxu0 0.0
    %4596 = vmatprep.subr.mxu0 0.0
    %4597 = vmatpush2.msra.mxu0 0.0
    %4598 = vmatprep.subr.mxu0 0.0
    %4599 = vmatpush2.msra.mxu0 0.0
    %4600 = vmatprep.subr.mxu0 0.0
    %4601 = vmatpush2.msra.mxu0 0.0
    %4602 = vmatprep.subr.mxu0 0.0
    %4603 = vmatpush2.msra.mxu0 0.0
    %4604 = vmatprep.subr.mxu0 0.0
    %4605 = vmatpush2.msra.mxu0 0.0
    %4606 = vmatprep.subr.mxu0 0.0
    %4607 = vmatpush2.msra.mxu0 0.0
    %4608 = vmatprep.mubr.f32.mxu0 0.0
    %4609 = vmatmul.mubr.f32.gmra.mxu0 %v4539
    %v4610 = vpop.f32.mrf.mxu0
    %v4611 = vadd.f32 %v4536, %v4610
    %v4612 = vpop.f32.mrf.mxu0
    %4613 = vmatprep.mubr.f32.mxu0 0.0
    %4614 = vmatmul.mubr.f32.gmra.mxu0 %v4542
    %v4615 = vpop.f32.mrf.mxu0
    %v4616 = vadd.f32 %v4536, %v4615
    %v4617 = vpop.f32.mrf.mxu0
    %4618 = vdwg.mxu0
    %4619 = vst [vmem:[#allocation17] sm:$0xff] %v4611
    %4620 = vst [vmem:[#allocation17 + $0x8] sm:$0xff] %v4616
    // Predicated region
    $region62: #{tpu_custom_call.1} parent=1 // pred_check
      _
    $region63: #{tpu_custom_call.1} parent=1 // pred_check_branch
      %4622 = sbr.rel (0) target = $region65
    $region64: #{tpu_custom_call.1} parent=1 // pred_region
      %s4624 = ssub.s32 256, 256
      %4625 = vsyncadd [#allocation8], %s4624
      %s4626 = sshll.u32 [#allocation17], 4
      %s4627 = int_to_ptr.vmem [resolvable:$true] %s4626
      %4632 = dma.vmem_to_hbm [thread:$0]  %s4627, 256, %s9, [#allocation8], 128, 128, 8
    $region65: #{tpu_custom_call.1} parent=1 // pred_fallthru
      _
    // Predicated region
    $region66: #{tpu_custom_call.1} parent=1 // pred_check
      _
    $region67: #{tpu_custom_call.1} parent=1 // pred_check_branch
      %4634 = sbr.rel (0) target = $region69
    $region68: #{tpu_custom_call.1} parent=1 // pred_region
      %4635 = dma.done [#allocation8], 256
    $region69: #{tpu_custom_call.1} parent=1 // pred_fallthru
      _
    %4636 = vsyncpa [#allocation7], 1
    %4637 = vsyncpa [#allocation10], 1
    %4638 = vsyncpa [#allocation13], 1
    %4639 = vsyncpa [#allocation16], 1
    %4640 = vsyncpa [#allocation8], 1

</llo_original>
